<compile_context>
chip_gen: v5e
topology: v5e:2x2
jax: 0.10.0
libtpu: 0.0.40
codegen_flags: <defaults>
</compile_context>

<pallas_src>
import functools

import jax
import jax.numpy as jnp
from jax import lax
from jax.experimental import pallas as pl
from jax.experimental.pallas import tpu as pltpu


def _round_up(x, m):
    return (x + m - 1) // m * m


def gru_recurrence_kernel(blkmax_ref, gx_ref, len_ref, w_h_ref, b_hn_ref,
                          w_out_ref, b_out_ref, out_ref, h_ref,
                          *, t_blk, b_blk, hp, n_out, n_il, unroll):
    """Grid = (batch_blocks, time_blocks); one grid step runs t_blk GRU steps.

    blkmax_ref : (n_b,) int32 SMEM (scalar prefetch) max length per batch blk.
    gx_ref     : (t_blk, b_blk, 3*Hp) bf16 precomputed x-side gate inputs
                 [r|z|n] with input biases folded in.
    len_ref    : (b_blk, 1) int32 per-row lengths (packed-sequence mask).
    h_ref      : (b_blk, Hp) f32 scratch hidden state; persists across the
                 time blocks of one batch block (time is the innermost axis).
    The Linear head + masked log_softmax is written on the last time block.
    """
    bb = pl.program_id(0)
    tb = pl.program_id(1)
    sub = b_blk // n_il

    @pl.when(tb == 0)
    def _():
        h_ref[...] = jnp.zeros_like(h_ref)   # torch.zeros init_hidden

    # Skip (batch, time) blocks that lie entirely past the longest sequence in
    # this batch block: no row would update, h_ref already holds final states.
    @pl.when(tb * t_blk < blkmax_ref[bb])
    def _run_block():
        # Loop-invariant operands: load/broadcast ONCE, stay in vregs across
        # all t_blk timesteps (JAX does not CSE broadcast_in_dim).
        w_h = w_h_ref[...]                                    # (Hp, 3Hp) bf16
        b_hn = jnp.broadcast_to(b_hn_ref[...], (sub, hp))     # (sub, Hp) f32
        # Remaining valid steps per row within this time block.
        rem = len_ref[...] - tb * t_blk                       # (b_blk, 1) i32
        rems = tuple(rem[k * sub:(k + 1) * sub] for k in range(n_il))

        def step(i, hs):
            gx = gx_ref[i].astype(jnp.float32)                # (b_blk, 3Hp)
            new_hs = []
            # n_il independent sub-block chains: one chain's gate math hides
            # the other's MXU drain / EUP latency (tiny-M latency bound).
            for k in range(n_il):
                h_k = hs[k]
                gx_k = gx[k * sub:(k + 1) * sub, :]
                # Single fused hidden-gate matmul (bf16 MXU, f32 accumulate).
                gh = jnp.dot(h_k.astype(jnp.bfloat16), w_h,
                             preferred_element_type=jnp.float32)
                r = jax.nn.sigmoid(gx_k[:, 0:hp] + gh[:, 0:hp])
                z = jax.nn.sigmoid(gx_k[:, hp:2 * hp] + gh[:, hp:2 * hp])
                n = jnp.tanh(gx_k[:, 2 * hp:] + r * (gh[:, 2 * hp:] + b_hn))
                h_new = (1.0 - z) * n + z * h_k
                # pack_padded_sequence semantics: freeze rows past their len.
                new_hs.append(jnp.where(i < rems[k], h_new, h_k))
            return tuple(new_hs)

        hs0 = tuple(h_ref[k * sub:(k + 1) * sub, :] for k in range(n_il))
        # Full unroll for short time blocks (LLO visibility); partial unroll
        # for long ones to stay inside the 64-vreg budget.
        loop_unroll = True if unroll >= t_blk else unroll
        hs = lax.fori_loop(0, t_blk, step, hs0, unroll=loop_unroll)
        for k in range(n_il):
            h_ref[k * sub:(k + 1) * sub, :] = hs[k]

    @pl.when(tb == pl.num_programs(1) - 1)
    def _():
        h = h_ref[...]
        logits = (jnp.dot(h.astype(jnp.bfloat16), w_out_ref[...],
                          preferred_element_type=jnp.float32)
                  + b_out_ref[...])                       # (b_blk, NOUTP)
        col = lax.broadcasted_iota(jnp.int32, logits.shape, 1)
        # Padded logit lanes -> -1e30 so log_softmax ignores them; the padded
        # output columns end up ~-1e30 and are sliced off in the wrapper.
        logits = jnp.where(col < n_out, logits, -1e30)
        out_ref[...] = jax.nn.log_softmax(logits, axis=-1)


def simple_gru_forward(seq, lengths, params, *, t_blk=8, unroll=8):
    """seq: (T, B) int32 time-major, lengths: (B,) int32. Returns (B, n_out)
    log-probs, matching PyTorch SimpleGRU.forward."""
    T, B = seq.shape
    E = params["emb"].shape[1]
    H = params["w_hh"].shape[1]
    n_out = params["w_out"].shape[0]

    # Lane/sublane-dense padded sizes. Batch padded to a multiple of 16 so
    # bf16 matmul operands fill whole (16,128) packed vregs.
    Hp = _round_up(H, 128)
    NOUTP = _round_up(n_out, 128)
    Bp = _round_up(max(B, 16), 16)
    # Batch blocking: split into >=2 blocks whenever possible so the
    # "parallel" batch axis can shard across v7x's 2 TensorCores; cap rows at
    # 256 to match the v6e/v7x MXU M dimension.
    if Bp >= 32:
        b_blk = min(_round_up(pl.cdiv(Bp, 2), 16), 256)
    else:
        b_blk = Bp
    Bp = _round_up(Bp, b_blk)
    n_b = Bp // b_blk
    # For tiny batch blocks, interleave 2 independent sub-blocks (2 h carries,
    # 2 dots) per timestep; large blocks already fill the MXU M dimension.
    n_il = 2 if b_blk <= 64 else 1

    t_blk = max(1, t_blk)
    unroll = max(1, min(unroll, t_blk))
    Tp = _round_up(T, t_blk)
    n_t = Tp // t_blk

    w_ih, w_hh = params["w_ih"], params["w_hh"]   # (3H,E), (3H,H), gates [r,z,n]
    b_ih, b_hh = params["b_ih"], params["b_hh"]   # (3H,), (3H,)

    # ---- Hoisted, time-parallel input projection (all timesteps at once) ----
    # Padded column layout [ r(Hp) | z(Hp) | n(Hp) ]; input biases folded in
    # (b_hh folded for r/z too, since they sit inside the sigmoid argument).
    w_i_pad = jnp.zeros((E, 3 * Hp), jnp.float32)
    for g in range(3):
        w_i_pad = w_i_pad.at[:, g * Hp:g * Hp + H].set(w_ih[g * H:(g + 1) * H, :].T)
    b_x_pad = jnp.zeros((3 * Hp,), jnp.float32)
    b_x_pad = b_x_pad.at[0:H].set(b_ih[0:H] + b_hh[0:H])
    b_x_pad = b_x_pad.at[Hp:Hp + H].set(b_ih[H:2 * H] + b_hh[H:2 * H])
    b_x_pad = b_x_pad.at[2 * Hp:2 * Hp + H].set(b_ih[2 * H:3 * H])

    # Embedding gather + one big (T*B, E) x (E, 3Hp) matmul kept as XLA glue.
    embs = jnp.take(params["emb"], seq, axis=0).astype(jnp.float32)   # (T,B,E)
    gx = jnp.einsum("tbe,eg->tbg", embs, w_i_pad) + b_x_pad           # (T,B,3Hp)
    gx = jnp.pad(gx, ((0, Tp - T), (0, Bp - B), (0, 0))).astype(jnp.bfloat16)

    # ---- Fused, padded hidden-side weights ----
    # Padded-lane invariant: gx/gh/b_hn are zero on padded hidden columns and
    # h starts at 0, so padded h lanes stay 0 (h_pad_new = 0.5*h_pad). Do NOT
    # initialize h nonzero or fold b_hn into padded rows, or padded lanes
    # drift (they're also blocked from logits by zero w_out padding).
    w_h_pad = jnp.zeros((Hp, 3 * Hp), jnp.float32)
    for g in range(3):
        w_h_pad = w_h_pad.at[0:H, g * Hp:g * Hp + H].set(w_hh[g * H:(g + 1) * H, :].T)
    w_h_pad = w_h_pad.astype(jnp.bfloat16)
    b_hn_pad = jnp.zeros((1, Hp), jnp.float32).at[0, 0:H].set(b_hh[2 * H:3 * H])

    w_out_pad = (jnp.zeros((Hp, NOUTP), jnp.float32)
                 .at[0:H, 0:n_out].set(params["w_out"].T).astype(jnp.bfloat16))
    b_out_pad = jnp.zeros((1, NOUTP), jnp.float32).at[0, 0:n_out].set(params["b_out"])

    # Padded batch rows get length 0 -> their hidden state never updates.
    len_1d = jnp.zeros((Bp,), jnp.int32).at[0:B].set(lengths.astype(jnp.int32))
    len_col = len_1d.reshape(Bp, 1)
    # Per-batch-block max length (SMEM scalar prefetch) for dead-block skip.
    blk_max = jnp.max(len_1d.reshape(n_b, b_blk), axis=1).astype(jnp.int32)

    kernel = functools.partial(gru_recurrence_kernel, t_blk=t_blk, b_blk=b_blk,
                               hp=Hp, n_out=n_out, n_il=n_il, unroll=unroll)

    # VMEM budget: gx is pipelined at t_blk*b_blk*3Hp*2 bytes per buffer; keep
    # 2x gx + weights under the limit, capped v7x-safe (64 MiB physical/TC).
    gx_buf = t_blk * b_blk * 3 * Hp * 2
    w_bytes = (Hp * 3 * Hp + Hp * NOUTP) * 2 + (Hp + NOUTP) * 4
    vmem_limit = min(max(32 * 1024 * 1024, 4 * gx_buf + 2 * w_bytes),
                     48 * 1024 * 1024)

    def _call(single_buffer_invariants):
        def _inv(shape):   # loop-invariant weights: constant block index
            nd = len(shape)
            kw = {}
            if single_buffer_invariants:
                # Fetched once (constant index map) -> no need to hold a
                # second double-buffer copy in VMEM.
                kw["pipeline_mode"] = pl.Buffered(buffer_count=1)
            return pl.BlockSpec(shape, lambda b, t, L, _nd=nd: (0,) * _nd, **kw)

        return pl.pallas_call(
            kernel,
            out_shape=jax.ShapeDtypeStruct((Bp, NOUTP), jnp.float32),
            grid_spec=pltpu.PrefetchScalarGridSpec(
                num_scalar_prefetch=1,          # blk_max -> SMEM
                grid=(n_b, n_t),
                in_specs=[
                    pl.BlockSpec((t_blk, b_blk, 3 * Hp), lambda b, t, L: (t, b, 0)),
                    pl.BlockSpec((b_blk, 1), lambda b, t, L: (b, 0)),
                    _inv((Hp, 3 * Hp)),
                    _inv((1, Hp)),
                    _inv((Hp, NOUTP)),
                    _inv((1, NOUTP)),
                ],
                out_specs=pl.BlockSpec((b_blk, NOUTP), lambda b, t, L: (b, 0)),
                scratch_shapes=[pltpu.VMEM((b_blk, Hp), jnp.float32)],
            ),
            compiler_params=pltpu.CompilerParams(
                # batch blocks independent (v7x megacore); time is sequential.
                dimension_semantics=("parallel", "arbitrary"),
                vmem_limit_bytes=vmem_limit),
        )(blk_max, gx, len_col, w_h_pad, b_hn_pad, w_out_pad, b_out_pad)

    try:
        out_pad = jax.block_until_ready(_call(True))
    except Exception:
        # pl.Buffered(1) not accepted by this jax/Mosaic version: fall back to
        # default double-buffering for the loop-invariant weights.
        out_pad = jax.block_until_ready(_call(False))

    return out_pad[:B, :n_out]


def reference_forward(seq, lengths, params):
    """Pure-JAX f32 reference matching PyTorch SimpleGRU.forward."""
    T, B = seq.shape
    H = params["w_hh"].shape[1]
    embs = jnp.take(params["emb"], seq, axis=0).astype(jnp.float32)
    w_ih, w_hh = params["w_ih"], params["w_hh"]
    b_ih, b_hh = params["b_ih"], params["b_hh"]
    h = jnp.zeros((B, H), jnp.float32)
    for t in range(T):
        x = embs[t]
        gi = x @ w_ih.T + b_ih
        gh = h @ w_hh.T + b_hh
        r = jax.nn.sigmoid(gi[:, 0:H] + gh[:, 0:H])
        z = jax.nn.sigmoid(gi[:, H:2 * H] + gh[:, H:2 * H])
        n = jnp.tanh(gi[:, 2 * H:] + r * gh[:, 2 * H:])
        h_new = (1.0 - z) * n + z * h
        h = jnp.where((t < lengths)[:, None], h_new, h)
    logits = h @ params["w_out"].T + params["b_out"]
    return jax.nn.log_softmax(logits, axis=-1)


def init_params(key, vocab_size, embedding_dim, n_hidden, n_out):
    ks = jax.random.split(key, 7)
    s = 0.1
    return {
        "emb":   s * jax.random.normal(ks[0], (vocab_size, embedding_dim), jnp.float32),
        "w_ih":  s * jax.random.normal(ks[1], (3 * n_hidden, embedding_dim), jnp.float32),
        "w_hh":  s * jax.random.normal(ks[2], (3 * n_hidden, n_hidden), jnp.float32),
        "b_ih":  s * jax.random.normal(ks[3], (3 * n_hidden,), jnp.float32),
        "b_hh":  s * jax.random.normal(ks[4], (3 * n_hidden,), jnp.float32),
        "w_out": s * jax.random.normal(ks[5], (n_out, n_hidden), jnp.float32),
        "b_out": s * jax.random.normal(ks[6], (n_out,), jnp.float32),
    }


if __name__ == "__main__":
    vocab_size, embedding_dim, n_hidden, n_out = 50, 32, 32, 8
    T, B = 8, 4

    key = jax.random.PRNGKey(0)
    pkey, skey = jax.random.split(key)
    params = init_params(pkey, vocab_size, embedding_dim, n_hidden, n_out)

    seq = jax.random.randint(skey, (T, B), 0, vocab_size, dtype=jnp.int32)
    lengths = jnp.array([8, 6, 5, 3], dtype=jnp.int32)  # sorted desc (packed)

    out = simple_gru_forward(seq, lengths, params)
    out = jax.block_until_ready(out)
    assert out.shape == (B, n_out)
    assert bool(jnp.all(jnp.isfinite(out)))

    ref = reference_forward(seq, lengths, params)
    assert bool(jnp.allclose(out, ref, atol=5e-2)), (
        f"max diff {float(jnp.max(jnp.abs(out - ref)))}")
    print("KERNEL_OK")
</pallas_src>

<mosaic_0001>
module attributes {stable_mosaic.version = 11 : i64} {
  func.func @gru_recurrence_kernel(%arg0: i32, %arg1: i32, %arg2: memref<1xi32, #tpu.memory_space<smem>>, %arg3: memref<8x16x384xbf16, #tpu.memory_space<vmem>>, %arg4: memref<16x1xi32, #tpu.memory_space<vmem>>, %arg5: memref<128x384xbf16, #tpu.memory_space<vmem>>, %arg6: memref<1x128xf32, #tpu.memory_space<vmem>>, %arg7: memref<128x128xbf16, #tpu.memory_space<vmem>>, %arg8: memref<1x128xf32, #tpu.memory_space<vmem>>, %arg9: memref<16x128xf32, #tpu.memory_space<vmem>>, %arg10: memref<16x128xf32, #tpu.memory_space<vmem>>) attributes {dimension_semantics = [#tpu.dimension_semantics<parallel>, #tpu.dimension_semantics<arbitrary>], iteration_bounds = array<i64: 1, 1>, scalar_prefetch = 1 : i64, scratch_operands = 1 : i64, tpu.core_type = #tpu.core_type<tc>, window_params = [{transform_indices = @transform_0, window_bounds = array<i64: 8, 16, 384>}, {transform_indices = @transform_1, window_bounds = array<i64: 16, 1>}, {pipeline_mode = #tpu.pipeline_mode<synchronous>, transform_indices = @transform_2, window_bounds = array<i64: 128, 384>}, {pipeline_mode = #tpu.pipeline_mode<synchronous>, transform_indices = @transform_3, window_bounds = array<i64: 1, 128>}, {pipeline_mode = #tpu.pipeline_mode<synchronous>, transform_indices = @transform_4, window_bounds = array<i64: 128, 128>}, {pipeline_mode = #tpu.pipeline_mode<synchronous>, transform_indices = @transform_5, window_bounds = array<i64: 1, 128>}, {transform_indices = @transform_6, window_bounds = array<i64: 16, 128>}]} {
    %c0_i32 = arith.constant 0 : i32
    %0 = arith.cmpi eq, %arg1, %c0_i32 : i32
    %1 = arith.extui %0 : i1 to i32
    %c0_i32_0 = arith.constant 0 : i32
    %2 = arith.cmpi ne, %1, %c0_i32_0 : i32
    scf.if %2 {
      %cst = arith.constant 0.000000e+00 : f32
      %12 = vector.broadcast %cst : f32 to vector<16x128xf32>
      %c0 = arith.constant 0 : index
      %c0_4 = arith.constant 0 : index
      %13 = vector.load %arg10[%c0, %c0_4] : memref<16x128xf32, #tpu.memory_space<vmem>>, vector<16x128xf32>
      tpu.vector_store %arg10[%c0, %c0_4], %12 {strides = array<i32>} : memref<16x128xf32, #tpu.memory_space<vmem>>, vector<16x128xf32>,
    } else {
    }
    %c8_i32 = arith.constant 8 : i32
    %3 = arith.muli %arg1, %c8_i32 : i32
    %4 = arith.index_cast %arg0 : i32 to index
    %5 = memref.load %arg2[%4] : memref<1xi32, #tpu.memory_space<smem>>
    %6 = arith.cmpi slt, %3, %5 : i32
    %7 = arith.extui %6 : i1 to i32
    %c0_i32_1 = arith.constant 0 : i32
    %8 = arith.cmpi ne, %7, %c0_i32_1 : i32
    scf.if %8 {
      %c0 = arith.constant 0 : index
      %c0_4 = arith.constant 0 : index
      %12 = vector.load %arg5[%c0, %c0_4] : memref<128x384xbf16, #tpu.memory_space<vmem>>, vector<128x384xbf16>
      %c0_5 = arith.constant 0 : index
      %c0_6 = arith.constant 0 : index
      %13 = vector.load %arg6[%c0_5, %c0_6] : memref<1x128xf32, #tpu.memory_space<vmem>>, vector<1x128xf32>
      %14 = vector.shape_cast %13 : vector<1x128xf32> to vector<1x128xf32>
      %15 = vector.broadcast %14 : vector<1x128xf32> to vector<8x128xf32>
      %c0_7 = arith.constant 0 : index
      %c0_8 = arith.constant 0 : index
      %16 = vector.load %arg4[%c0_7, %c0_8] : memref<16x1xi32, #tpu.memory_space<vmem>>, vector<16x1xi32>
      %c8_i32_9 = arith.constant 8 : i32
      %17 = arith.muli %arg1, %c8_i32_9 : i32
      %18 = vector.broadcast %17 : i32 to vector<16x1xi32>
      %19 = arith.subi %16, %18 : vector<16x1xi32>
      %20 = vector.extract_strided_slice %19 {offsets = [0, 0], sizes = [8, 1], strides = [1, 1]} : vector<16x1xi32> to vector<8x1xi32>
      %21 = vector.extract_strided_slice %19 {offsets = [8, 0], sizes = [8, 1], strides = [1, 1]} : vector<16x1xi32> to vector<8x1xi32>
      %c0_10 = arith.constant 0 : index
      %c0_11 = arith.constant 0 : index
      %22 = vector.load %arg10[%c0_10, %c0_11] : memref<16x128xf32, #tpu.memory_space<vmem>>, vector<8x128xf32>
      %c8 = arith.constant 8 : index
      %c0_12 = arith.constant 0 : index
      %23 = vector.load %arg10[%c8, %c0_12] : memref<16x128xf32, #tpu.memory_space<vmem>>, vector<8x128xf32>
      %c0_i32_13 = arith.constant 0 : i32
      %24 = arith.index_cast %c0_i32_13 : i32 to index
      %c0_14 = arith.constant 0 : index
      %c0_15 = arith.constant 0 : index
      %25 = vector.load %arg3[%24, %c0_14, %c0_15] : memref<8x16x384xbf16, #tpu.memory_space<vmem>>, vector<1x16x384xbf16>
      %26 = vector.shape_cast %25 : vector<1x16x384xbf16> to vector<16x384xbf16>
      %27 = arith.extf %26 : vector<16x384xbf16> to vector<16x384xf32>
      %28 = vector.extract_strided_slice %27 {offsets = [0, 0], sizes = [8, 384], strides = [1, 1]} : vector<16x384xf32> to vector<8x384xf32>
      %29 = arith.truncf %22 : vector<8x128xf32> to vector<8x128xbf16>
      %cst = arith.constant dense<0.000000e+00> : vector<8x384xf32>
      %30 = tpu.matmul %29, %12, %cst {dimension_numbers = #tpu.dot_dimension_numbers<[1], [0], [0], [1], [0, 0, 1, 1], [], []>} : vector<8x128xbf16>, vector<128x384xbf16>, vector<8x384xf32> -> vector<8x384xf32>
      %31 = vector.extract_strided_slice %28 {offsets = [0, 0], sizes = [8, 128], strides = [1, 1]} : vector<8x384xf32> to vector<8x128xf32>
      %32 = vector.extract_strided_slice %30 {offsets = [0, 0], sizes = [8, 128], strides = [1, 1]} : vector<8x384xf32> to vector<8x128xf32>
      %33 = arith.addf %31, %32 : vector<8x128xf32>
      %34 = arith.negf %33 : vector<8x128xf32>
      %35 = math.exp %34 : vector<8x128xf32>
      %cst_16 = arith.constant 1.000000e+00 : f32
      %36 = vector.broadcast %cst_16 : f32 to vector<8x128xf32>
      %37 = arith.addf %36, %35 : vector<8x128xf32>
      %38 = arith.divf %36, %37 : vector<8x128xf32>
      %39 = vector.extract_strided_slice %28 {offsets = [0, 128], sizes = [8, 128], strides = [1, 1]} : vector<8x384xf32> to vector<8x128xf32>
      %40 = vector.extract_strided_slice %30 {offsets = [0, 128], sizes = [8, 128], strides = [1, 1]} : vector<8x384xf32> to vector<8x128xf32>
      %41 = arith.addf %39, %40 : vector<8x128xf32>
      %42 = arith.negf %41 : vector<8x128xf32>
      %43 = math.exp %42 : vector<8x128xf32>
      %cst_17 = arith.constant 1.000000e+00 : f32
      %44 = vector.broadcast %cst_17 : f32 to vector<8x128xf32>
      %45 = arith.addf %44, %43 : vector<8x128xf32>
      %46 = arith.divf %44, %45 : vector<8x128xf32>
      %47 = vector.extract_strided_slice %28 {offsets = [0, 256], sizes = [8, 128], strides = [1, 1]} : vector<8x384xf32> to vector<8x128xf32>
      %48 = vector.extract_strided_slice %30 {offsets = [0, 256], sizes = [8, 128], strides = [1, 1]} : vector<8x384xf32> to vector<8x128xf32>
      %49 = arith.addf %48, %15 : vector<8x128xf32>
      %50 = arith.mulf %38, %49 : vector<8x128xf32>
      %51 = arith.addf %47, %50 : vector<8x128xf32>
      %52 = math.tanh %51 : vector<8x128xf32>
      %cst_18 = arith.constant 1.000000e+00 : f32
      %53 = vector.broadcast %cst_18 : f32 to vector<8x128xf32>
      %54 = arith.subf %53, %46 : vector<8x128xf32>
      %55 = arith.mulf %54, %52 : vector<8x128xf32>
      %56 = arith.mulf %46, %22 : vector<8x128xf32>
      %57 = arith.addf %55, %56 : vector<8x128xf32>
      %58 = vector.broadcast %c0_i32_13 : i32 to vector<8x1xi32>
      %59 = arith.cmpi slt, %58, %20 : vector<8x1xi32>
      %60 = vector.shape_cast %59 : vector<8x1xi1> to vector<8x1xi1>
      %61 = vector.broadcast %60 : vector<8x1xi1> to vector<8x128xi1>
      %62 = arith.select %61, %57, %22 : vector<8x128xi1>, vector<8x128xf32>
      %63 = vector.extract_strided_slice %27 {offsets = [8, 0], sizes = [8, 384], strides = [1, 1]} : vector<16x384xf32> to vector<8x384xf32>
      %64 = arith.truncf %23 : vector<8x128xf32> to vector<8x128xbf16>
      %cst_19 = arith.constant dense<0.000000e+00> : vector<8x384xf32>
      %65 = tpu.matmul %64, %12, %cst_19 {dimension_numbers = #tpu.dot_dimension_numbers<[1], [0], [0], [1], [0, 0, 1, 1], [], []>} : vector<8x128xbf16>, vector<128x384xbf16>, vector<8x384xf32> -> vector<8x384xf32>
      %66 = vector.extract_strided_slice %63 {offsets = [0, 0], sizes = [8, 128], strides = [1, 1]} : vector<8x384xf32> to vector<8x128xf32>
      %67 = vector.extract_strided_slice %65 {offsets = [0, 0], sizes = [8, 128], strides = [1, 1]} : vector<8x384xf32> to vector<8x128xf32>
      %68 = arith.addf %66, %67 : vector<8x128xf32>
      %69 = arith.negf %68 : vector<8x128xf32>
      %70 = math.exp %69 : vector<8x128xf32>
      %cst_20 = arith.constant 1.000000e+00 : f32
      %71 = vector.broadcast %cst_20 : f32 to vector<8x128xf32>
      %72 = arith.addf %71, %70 : vector<8x128xf32>
      %73 = arith.divf %71, %72 : vector<8x128xf32>
      %74 = vector.extract_strided_slice %63 {offsets = [0, 128], sizes = [8, 128], strides = [1, 1]} : vector<8x384xf32> to vector<8x128xf32>
      %75 = vector.extract_strided_slice %65 {offsets = [0, 128], sizes = [8, 128], strides = [1, 1]} : vector<8x384xf32> to vector<8x128xf32>
      %76 = arith.addf %74, %75 : vector<8x128xf32>
      %77 = arith.negf %76 : vector<8x128xf32>
      %78 = math.exp %77 : vector<8x128xf32>
      %cst_21 = arith.constant 1.000000e+00 : f32
      %79 = vector.broadcast %cst_21 : f32 to vector<8x128xf32>
      %80 = arith.addf %79, %78 : vector<8x128xf32>
      %81 = arith.divf %79, %80 : vector<8x128xf32>
      %82 = vector.extract_strided_slice %63 {offsets = [0, 256], sizes = [8, 128], strides = [1, 1]} : vector<8x384xf32> to vector<8x128xf32>
      %83 = vector.extract_strided_slice %65 {offsets = [0, 256], sizes = [8, 128], strides = [1, 1]} : vector<8x384xf32> to vector<8x128xf32>
      %84 = arith.addf %83, %15 : vector<8x128xf32>
      %85 = arith.mulf %73, %84 : vector<8x128xf32>
      %86 = arith.addf %82, %85 : vector<8x128xf32>
      %87 = math.tanh %86 : vector<8x128xf32>
      %cst_22 = arith.constant 1.000000e+00 : f32
      %88 = vector.broadcast %cst_22 : f32 to vector<8x128xf32>
      %89 = arith.subf %88, %81 : vector<8x128xf32>
      %90 = arith.mulf %89, %87 : vector<8x128xf32>
      %91 = arith.mulf %81, %23 : vector<8x128xf32>
      %92 = arith.addf %90, %91 : vector<8x128xf32>
      %93 = vector.broadcast %c0_i32_13 : i32 to vector<8x1xi32>
      %94 = arith.cmpi slt, %93, %21 : vector<8x1xi32>
      %95 = vector.shape_cast %94 : vector<8x1xi1> to vector<8x1xi1>
      %96 = vector.broadcast %95 : vector<8x1xi1> to vector<8x128xi1>
      %97 = arith.select %96, %92, %23 : vector<8x128xi1>, vector<8x128xf32>
      %c1_i32 = arith.constant 1 : i32
      %98 = arith.index_cast %c1_i32 : i32 to index
      %c0_23 = arith.constant 0 : index
      %c0_24 = arith.constant 0 : index
      %99 = vector.load %arg3[%98, %c0_23, %c0_24] : memref<8x16x384xbf16, #tpu.memory_space<vmem>>, vector<1x16x384xbf16>
      %100 = vector.shape_cast %99 : vector<1x16x384xbf16> to vector<16x384xbf16>
      %101 = arith.extf %100 : vector<16x384xbf16> to vector<16x384xf32>
      %102 = vector.extract_strided_slice %101 {offsets = [0, 0], sizes = [8, 384], strides = [1, 1]} : vector<16x384xf32> to vector<8x384xf32>
      %103 = arith.truncf %62 : vector<8x128xf32> to vector<8x128xbf16>
      %cst_25 = arith.constant dense<0.000000e+00> : vector<8x384xf32>
      %104 = tpu.matmul %103, %12, %cst_25 {dimension_numbers = #tpu.dot_dimension_numbers<[1], [0], [0], [1], [0, 0, 1, 1], [], []>} : vector<8x128xbf16>, vector<128x384xbf16>, vector<8x384xf32> -> vector<8x384xf32>
      %105 = vector.extract_strided_slice %102 {offsets = [0, 0], sizes = [8, 128], strides = [1, 1]} : vector<8x384xf32> to vector<8x128xf32>
      %106 = vector.extract_strided_slice %104 {offsets = [0, 0], sizes = [8, 128], strides = [1, 1]} : vector<8x384xf32> to vector<8x128xf32>
      %107 = arith.addf %105, %106 : vector<8x128xf32>
      %108 = arith.negf %107 : vector<8x128xf32>
      %109 = math.exp %108 : vector<8x128xf32>
      %cst_26 = arith.constant 1.000000e+00 : f32
      %110 = vector.broadcast %cst_26 : f32 to vector<8x128xf32>
      %111 = arith.addf %110, %109 : vector<8x128xf32>
      %112 = arith.divf %110, %111 : vector<8x128xf32>
      %113 = vector.extract_strided_slice %102 {offsets = [0, 128], sizes = [8, 128], strides = [1, 1]} : vector<8x384xf32> to vector<8x128xf32>
      %114 = vector.extract_strided_slice %104 {offsets = [0, 128], sizes = [8, 128], strides = [1, 1]} : vector<8x384xf32> to vector<8x128xf32>
      %115 = arith.addf %113, %114 : vector<8x128xf32>
      %116 = arith.negf %115 : vector<8x128xf32>
      %117 = math.exp %116 : vector<8x128xf32>
      %cst_27 = arith.constant 1.000000e+00 : f32
      %118 = vector.broadcast %cst_27 : f32 to vector<8x128xf32>
      %119 = arith.addf %118, %117 : vector<8x128xf32>
      %120 = arith.divf %118, %119 : vector<8x128xf32>
      %121 = vector.extract_strided_slice %102 {offsets = [0, 256], sizes = [8, 128], strides = [1, 1]} : vector<8x384xf32> to vector<8x128xf32>
      %122 = vector.extract_strided_slice %104 {offsets = [0, 256], sizes = [8, 128], strides = [1, 1]} : vector<8x384xf32> to vector<8x128xf32>
      %123 = arith.addf %122, %15 : vector<8x128xf32>
      %124 = arith.mulf %112, %123 : vector<8x128xf32>
      %125 = arith.addf %121, %124 : vector<8x128xf32>
      %126 = math.tanh %125 : vector<8x128xf32>
      %cst_28 = arith.constant 1.000000e+00 : f32
      %127 = vector.broadcast %cst_28 : f32 to vector<8x128xf32>
      %128 = arith.subf %127, %120 : vector<8x128xf32>
      %129 = arith.mulf %128, %126 : vector<8x128xf32>
      %130 = arith.mulf %120, %62 : vector<8x128xf32>
      %131 = arith.addf %129, %130 : vector<8x128xf32>
      %132 = vector.broadcast %c1_i32 : i32 to vector<8x1xi32>
      %133 = arith.cmpi slt, %132, %20 : vector<8x1xi32>
      %134 = vector.shape_cast %133 : vector<8x1xi1> to vector<8x1xi1>
      %135 = vector.broadcast %134 : vector<8x1xi1> to vector<8x128xi1>
      %136 = arith.select %135, %131, %62 : vector<8x128xi1>, vector<8x128xf32>
      %137 = vector.extract_strided_slice %101 {offsets = [8, 0], sizes = [8, 384], strides = [1, 1]} : vector<16x384xf32> to vector<8x384xf32>
      %138 = arith.truncf %97 : vector<8x128xf32> to vector<8x128xbf16>
      %cst_29 = arith.constant dense<0.000000e+00> : vector<8x384xf32>
      %139 = tpu.matmul %138, %12, %cst_29 {dimension_numbers = #tpu.dot_dimension_numbers<[1], [0], [0], [1], [0, 0, 1, 1], [], []>} : vector<8x128xbf16>, vector<128x384xbf16>, vector<8x384xf32> -> vector<8x384xf32>
      %140 = vector.extract_strided_slice %137 {offsets = [0, 0], sizes = [8, 128], strides = [1, 1]} : vector<8x384xf32> to vector<8x128xf32>
      %141 = vector.extract_strided_slice %139 {offsets = [0, 0], sizes = [8, 128], strides = [1, 1]} : vector<8x384xf32> to vector<8x128xf32>
      %142 = arith.addf %140, %141 : vector<8x128xf32>
      %143 = arith.negf %142 : vector<8x128xf32>
      %144 = math.exp %143 : vector<8x128xf32>
      %cst_30 = arith.constant 1.000000e+00 : f32
      %145 = vector.broadcast %cst_30 : f32 to vector<8x128xf32>
      %146 = arith.addf %145, %144 : vector<8x128xf32>
      %147 = arith.divf %145, %146 : vector<8x128xf32>
      %148 = vector.extract_strided_slice %137 {offsets = [0, 128], sizes = [8, 128], strides = [1, 1]} : vector<8x384xf32> to vector<8x128xf32>
      %149 = vector.extract_strided_slice %139 {offsets = [0, 128], sizes = [8, 128], strides = [1, 1]} : vector<8x384xf32> to vector<8x128xf32>
      %150 = arith.addf %148, %149 : vector<8x128xf32>
      %151 = arith.negf %150 : vector<8x128xf32>
      %152 = math.exp %151 : vector<8x128xf32>
      %cst_31 = arith.constant 1.000000e+00 : f32
      %153 = vector.broadcast %cst_31 : f32 to vector<8x128xf32>
      %154 = arith.addf %153, %152 : vector<8x128xf32>
      %155 = arith.divf %153, %154 : vector<8x128xf32>
      %156 = vector.extract_strided_slice %137 {offsets = [0, 256], sizes = [8, 128], strides = [1, 1]} : vector<8x384xf32> to vector<8x128xf32>
      %157 = vector.extract_strided_slice %139 {offsets = [0, 256], sizes = [8, 128], strides = [1, 1]} : vector<8x384xf32> to vector<8x128xf32>
      %158 = arith.addf %157, %15 : vector<8x128xf32>
      %159 = arith.mulf %147, %158 : vector<8x128xf32>
      %160 = arith.addf %156, %159 : vector<8x128xf32>
      %161 = math.tanh %160 : vector<8x128xf32>
      %cst_32 = arith.constant 1.000000e+00 : f32
      %162 = vector.broadcast %cst_32 : f32 to vector<8x128xf32>
      %163 = arith.subf %162, %155 : vector<8x128xf32>
      %164 = arith.mulf %163, %161 : vector<8x128xf32>
      %165 = arith.mulf %155, %97 : vector<8x128xf32>
      %166 = arith.addf %164, %165 : vector<8x128xf32>
      %167 = vector.broadcast %c1_i32 : i32 to vector<8x1xi32>
      %168 = arith.cmpi slt, %167, %21 : vector<8x1xi32>
      %169 = vector.shape_cast %168 : vector<8x1xi1> to vector<8x1xi1>
      %170 = vector.broadcast %169 : vector<8x1xi1> to vector<8x128xi1>
      %171 = arith.select %170, %166, %97 : vector<8x128xi1>, vector<8x128xf32>
      %c2_i32 = arith.constant 2 : i32
      %172 = arith.index_cast %c2_i32 : i32 to index
      %c0_33 = arith.constant 0 : index
      %c0_34 = arith.constant 0 : index
      %173 = vector.load %arg3[%172, %c0_33, %c0_34] : memref<8x16x384xbf16, #tpu.memory_space<vmem>>, vector<1x16x384xbf16>
      %174 = vector.shape_cast %173 : vector<1x16x384xbf16> to vector<16x384xbf16>
      %175 = arith.extf %174 : vector<16x384xbf16> to vector<16x384xf32>
      %176 = vector.extract_strided_slice %175 {offsets = [0, 0], sizes = [8, 384], strides = [1, 1]} : vector<16x384xf32> to vector<8x384xf32>
      %177 = arith.truncf %136 : vector<8x128xf32> to vector<8x128xbf16>
      %cst_35 = arith.constant dense<0.000000e+00> : vector<8x384xf32>
      %178 = tpu.matmul %177, %12, %cst_35 {dimension_numbers = #tpu.dot_dimension_numbers<[1], [0], [0], [1], [0, 0, 1, 1], [], []>} : vector<8x128xbf16>, vector<128x384xbf16>, vector<8x384xf32> -> vector<8x384xf32>
      %179 = vector.extract_strided_slice %176 {offsets = [0, 0], sizes = [8, 128], strides = [1, 1]} : vector<8x384xf32> to vector<8x128xf32>
      %180 = vector.extract_strided_slice %178 {offsets = [0, 0], sizes = [8, 128], strides = [1, 1]} : vector<8x384xf32> to vector<8x128xf32>
      %181 = arith.addf %179, %180 : vector<8x128xf32>
      %182 = arith.negf %181 : vector<8x128xf32>
      %183 = math.exp %182 : vector<8x128xf32>
      %cst_36 = arith.constant 1.000000e+00 : f32
      %184 = vector.broadcast %cst_36 : f32 to vector<8x128xf32>
      %185 = arith.addf %184, %183 : vector<8x128xf32>
      %186 = arith.divf %184, %185 : vector<8x128xf32>
      %187 = vector.extract_strided_slice %176 {offsets = [0, 128], sizes = [8, 128], strides = [1, 1]} : vector<8x384xf32> to vector<8x128xf32>
      %188 = vector.extract_strided_slice %178 {offsets = [0, 128], sizes = [8, 128], strides = [1, 1]} : vector<8x384xf32> to vector<8x128xf32>
      %189 = arith.addf %187, %188 : vector<8x128xf32>
      %190 = arith.negf %189 : vector<8x128xf32>
      %191 = math.exp %190 : vector<8x128xf32>
      %cst_37 = arith.constant 1.000000e+00 : f32
      %192 = vector.broadcast %cst_37 : f32 to vector<8x128xf32>
      %193 = arith.addf %192, %191 : vector<8x128xf32>
      %194 = arith.divf %192, %193 : vector<8x128xf32>
      %195 = vector.extract_strided_slice %176 {offsets = [0, 256], sizes = [8, 128], strides = [1, 1]} : vector<8x384xf32> to vector<8x128xf32>
      %196 = vector.extract_strided_slice %178 {offsets = [0, 256], sizes = [8, 128], strides = [1, 1]} : vector<8x384xf32> to vector<8x128xf32>
      %197 = arith.addf %196, %15 : vector<8x128xf32>
      %198 = arith.mulf %186, %197 : vector<8x128xf32>
      %199 = arith.addf %195, %198 : vector<8x128xf32>
      %200 = math.tanh %199 : vector<8x128xf32>
      %cst_38 = arith.constant 1.000000e+00 : f32
      %201 = vector.broadcast %cst_38 : f32 to vector<8x128xf32>
      %202 = arith.subf %201, %194 : vector<8x128xf32>
      %203 = arith.mulf %202, %200 : vector<8x128xf32>
      %204 = arith.mulf %194, %136 : vector<8x128xf32>
      %205 = arith.addf %203, %204 : vector<8x128xf32>
      %206 = vector.broadcast %c2_i32 : i32 to vector<8x1xi32>
      %207 = arith.cmpi slt, %206, %20 : vector<8x1xi32>
      %208 = vector.shape_cast %207 : vector<8x1xi1> to vector<8x1xi1>
      %209 = vector.broadcast %208 : vector<8x1xi1> to vector<8x128xi1>
      %210 = arith.select %209, %205, %136 : vector<8x128xi1>, vector<8x128xf32>
      %211 = vector.extract_strided_slice %175 {offsets = [8, 0], sizes = [8, 384], strides = [1, 1]} : vector<16x384xf32> to vector<8x384xf32>
      %212 = arith.truncf %171 : vector<8x128xf32> to vector<8x128xbf16>
      %cst_39 = arith.constant dense<0.000000e+00> : vector<8x384xf32>
      %213 = tpu.matmul %212, %12, %cst_39 {dimension_numbers = #tpu.dot_dimension_numbers<[1], [0], [0], [1], [0, 0, 1, 1], [], []>} : vector<8x128xbf16>, vector<128x384xbf16>, vector<8x384xf32> -> vector<8x384xf32>
      %214 = vector.extract_strided_slice %211 {offsets = [0, 0], sizes = [8, 128], strides = [1, 1]} : vector<8x384xf32> to vector<8x128xf32>
      %215 = vector.extract_strided_slice %213 {offsets = [0, 0], sizes = [8, 128], strides = [1, 1]} : vector<8x384xf32> to vector<8x128xf32>
      %216 = arith.addf %214, %215 : vector<8x128xf32>
      %217 = arith.negf %216 : vector<8x128xf32>
      %218 = math.exp %217 : vector<8x128xf32>
      %cst_40 = arith.constant 1.000000e+00 : f32
      %219 = vector.broadcast %cst_40 : f32 to vector<8x128xf32>
      %220 = arith.addf %219, %218 : vector<8x128xf32>
      %221 = arith.divf %219, %220 : vector<8x128xf32>
      %222 = vector.extract_strided_slice %211 {offsets = [0, 128], sizes = [8, 128], strides = [1, 1]} : vector<8x384xf32> to vector<8x128xf32>
      %223 = vector.extract_strided_slice %213 {offsets = [0, 128], sizes = [8, 128], strides = [1, 1]} : vector<8x384xf32> to vector<8x128xf32>
      %224 = arith.addf %222, %223 : vector<8x128xf32>
      %225 = arith.negf %224 : vector<8x128xf32>
      %226 = math.exp %225 : vector<8x128xf32>
      %cst_41 = arith.constant 1.000000e+00 : f32
      %227 = vector.broadcast %cst_41 : f32 to vector<8x128xf32>
      %228 = arith.addf %227, %226 : vector<8x128xf32>
      %229 = arith.divf %227, %228 : vector<8x128xf32>
      %230 = vector.extract_strided_slice %211 {offsets = [0, 256], sizes = [8, 128], strides = [1, 1]} : vector<8x384xf32> to vector<8x128xf32>
      %231 = vector.extract_strided_slice %213 {offsets = [0, 256], sizes = [8, 128], strides = [1, 1]} : vector<8x384xf32> to vector<8x128xf32>
      %232 = arith.addf %231, %15 : vector<8x128xf32>
      %233 = arith.mulf %221, %232 : vector<8x128xf32>
      %234 = arith.addf %230, %233 : vector<8x128xf32>
      %235 = math.tanh %234 : vector<8x128xf32>
      %cst_42 = arith.constant 1.000000e+00 : f32
      %236 = vector.broadcast %cst_42 : f32 to vector<8x128xf32>
      %237 = arith.subf %236, %229 : vector<8x128xf32>
      %238 = arith.mulf %237, %235 : vector<8x128xf32>
      %239 = arith.mulf %229, %171 : vector<8x128xf32>
      %240 = arith.addf %238, %239 : vector<8x128xf32>
      %241 = vector.broadcast %c2_i32 : i32 to vector<8x1xi32>
      %242 = arith.cmpi slt, %241, %21 : vector<8x1xi32>
      %243 = vector.shape_cast %242 : vector<8x1xi1> to vector<8x1xi1>
      %244 = vector.broadcast %243 : vector<8x1xi1> to vector<8x128xi1>
      %245 = arith.select %244, %240, %171 : vector<8x128xi1>, vector<8x128xf32>
      %c3_i32 = arith.constant 3 : i32
      %246 = arith.index_cast %c3_i32 : i32 to index
      %c0_43 = arith.constant 0 : index
      %c0_44 = arith.constant 0 : index
      %247 = vector.load %arg3[%246, %c0_43, %c0_44] : memref<8x16x384xbf16, #tpu.memory_space<vmem>>, vector<1x16x384xbf16>
      %248 = vector.shape_cast %247 : vector<1x16x384xbf16> to vector<16x384xbf16>
      %249 = arith.extf %248 : vector<16x384xbf16> to vector<16x384xf32>
      %250 = vector.extract_strided_slice %249 {offsets = [0, 0], sizes = [8, 384], strides = [1, 1]} : vector<16x384xf32> to vector<8x384xf32>
      %251 = arith.truncf %210 : vector<8x128xf32> to vector<8x128xbf16>
      %cst_45 = arith.constant dense<0.000000e+00> : vector<8x384xf32>
      %252 = tpu.matmul %251, %12, %cst_45 {dimension_numbers = #tpu.dot_dimension_numbers<[1], [0], [0], [1], [0, 0, 1, 1], [], []>} : vector<8x128xbf16>, vector<128x384xbf16>, vector<8x384xf32> -> vector<8x384xf32>
      %253 = vector.extract_strided_slice %250 {offsets = [0, 0], sizes = [8, 128], strides = [1, 1]} : vector<8x384xf32> to vector<8x128xf32>
      %254 = vector.extract_strided_slice %252 {offsets = [0, 0], sizes = [8, 128], strides = [1, 1]} : vector<8x384xf32> to vector<8x128xf32>
      %255 = arith.addf %253, %254 : vector<8x128xf32>
      %256 = arith.negf %255 : vector<8x128xf32>
      %257 = math.exp %256 : vector<8x128xf32>
      %cst_46 = arith.constant 1.000000e+00 : f32
      %258 = vector.broadcast %cst_46 : f32 to vector<8x128xf32>
      %259 = arith.addf %258, %257 : vector<8x128xf32>
      %260 = arith.divf %258, %259 : vector<8x128xf32>
      %261 = vector.extract_strided_slice %250 {offsets = [0, 128], sizes = [8, 128], strides = [1, 1]} : vector<8x384xf32> to vector<8x128xf32>
      %262 = vector.extract_strided_slice %252 {offsets = [0, 128], sizes = [8, 128], strides = [1, 1]} : vector<8x384xf32> to vector<8x128xf32>
      %263 = arith.addf %261, %262 : vector<8x128xf32>
      %264 = arith.negf %263 : vector<8x128xf32>
      %265 = math.exp %264 : vector<8x128xf32>
      %cst_47 = arith.constant 1.000000e+00 : f32
      %266 = vector.broadcast %cst_47 : f32 to vector<8x128xf32>
      %267 = arith.addf %266, %265 : vector<8x128xf32>
      %268 = arith.divf %266, %267 : vector<8x128xf32>
      %269 = vector.extract_strided_slice %250 {offsets = [0, 256], sizes = [8, 128], strides = [1, 1]} : vector<8x384xf32> to vector<8x128xf32>
      %270 = vector.extract_strided_slice %252 {offsets = [0, 256], sizes = [8, 128], strides = [1, 1]} : vector<8x384xf32> to vector<8x128xf32>
      %271 = arith.addf %270, %15 : vector<8x128xf32>
      %272 = arith.mulf %260, %271 : vector<8x128xf32>
      %273 = arith.addf %269, %272 : vector<8x128xf32>
      %274 = math.tanh %273 : vector<8x128xf32>
      %cst_48 = arith.constant 1.000000e+00 : f32
      %275 = vector.broadcast %cst_48 : f32 to vector<8x128xf32>
      %276 = arith.subf %275, %268 : vector<8x128xf32>
      %277 = arith.mulf %276, %274 : vector<8x128xf32>
      %278 = arith.mulf %268, %210 : vector<8x128xf32>
      %279 = arith.addf %277, %278 : vector<8x128xf32>
      %280 = vector.broadcast %c3_i32 : i32 to vector<8x1xi32>
      %281 = arith.cmpi slt, %280, %20 : vector<8x1xi32>
      %282 = vector.shape_cast %281 : vector<8x1xi1> to vector<8x1xi1>
      %283 = vector.broadcast %282 : vector<8x1xi1> to vector<8x128xi1>
      %284 = arith.select %283, %279, %210 : vector<8x128xi1>, vector<8x128xf32>
      %285 = vector.extract_strided_slice %249 {offsets = [8, 0], sizes = [8, 384], strides = [1, 1]} : vector<16x384xf32> to vector<8x384xf32>
      %286 = arith.truncf %245 : vector<8x128xf32> to vector<8x128xbf16>
      %cst_49 = arith.constant dense<0.000000e+00> : vector<8x384xf32>
      %287 = tpu.matmul %286, %12, %cst_49 {dimension_numbers = #tpu.dot_dimension_numbers<[1], [0], [0], [1], [0, 0, 1, 1], [], []>} : vector<8x128xbf16>, vector<128x384xbf16>, vector<8x384xf32> -> vector<8x384xf32>
      %288 = vector.extract_strided_slice %285 {offsets = [0, 0], sizes = [8, 128], strides = [1, 1]} : vector<8x384xf32> to vector<8x128xf32>
      %289 = vector.extract_strided_slice %287 {offsets = [0, 0], sizes = [8, 128], strides = [1, 1]} : vector<8x384xf32> to vector<8x128xf32>
      %290 = arith.addf %288, %289 : vector<8x128xf32>
      %291 = arith.negf %290 : vector<8x128xf32>
      %292 = math.exp %291 : vector<8x128xf32>
      %cst_50 = arith.constant 1.000000e+00 : f32
      %293 = vector.broadcast %cst_50 : f32 to vector<8x128xf32>
      %294 = arith.addf %293, %292 : vector<8x128xf32>
      %295 = arith.divf %293, %294 : vector<8x128xf32>
      %296 = vector.extract_strided_slice %285 {offsets = [0, 128], sizes = [8, 128], strides = [1, 1]} : vector<8x384xf32> to vector<8x128xf32>
      %297 = vector.extract_strided_slice %287 {offsets = [0, 128], sizes = [8, 128], strides = [1, 1]} : vector<8x384xf32> to vector<8x128xf32>
      %298 = arith.addf %296, %297 : vector<8x128xf32>
      %299 = arith.negf %298 : vector<8x128xf32>
      %300 = math.exp %299 : vector<8x128xf32>
      %cst_51 = arith.constant 1.000000e+00 : f32
      %301 = vector.broadcast %cst_51 : f32 to vector<8x128xf32>
      %302 = arith.addf %301, %300 : vector<8x128xf32>
      %303 = arith.divf %301, %302 : vector<8x128xf32>
      %304 = vector.extract_strided_slice %285 {offsets = [0, 256], sizes = [8, 128], strides = [1, 1]} : vector<8x384xf32> to vector<8x128xf32>
      %305 = vector.extract_strided_slice %287 {offsets = [0, 256], sizes = [8, 128], strides = [1, 1]} : vector<8x384xf32> to vector<8x128xf32>
      %306 = arith.addf %305, %15 : vector<8x128xf32>
      %307 = arith.mulf %295, %306 : vector<8x128xf32>
      %308 = arith.addf %304, %307 : vector<8x128xf32>
      %309 = math.tanh %308 : vector<8x128xf32>
      %cst_52 = arith.constant 1.000000e+00 : f32
      %310 = vector.broadcast %cst_52 : f32 to vector<8x128xf32>
      %311 = arith.subf %310, %303 : vector<8x128xf32>
      %312 = arith.mulf %311, %309 : vector<8x128xf32>
      %313 = arith.mulf %303, %245 : vector<8x128xf32>
      %314 = arith.addf %312, %313 : vector<8x128xf32>
      %315 = vector.broadcast %c3_i32 : i32 to vector<8x1xi32>
      %316 = arith.cmpi slt, %315, %21 : vector<8x1xi32>
      %317 = vector.shape_cast %316 : vector<8x1xi1> to vector<8x1xi1>
      %318 = vector.broadcast %317 : vector<8x1xi1> to vector<8x128xi1>
      %319 = arith.select %318, %314, %245 : vector<8x128xi1>, vector<8x128xf32>
      %c4_i32 = arith.constant 4 : i32
      %320 = arith.index_cast %c4_i32 : i32 to index
      %c0_53 = arith.constant 0 : index
      %c0_54 = arith.constant 0 : index
      %321 = vector.load %arg3[%320, %c0_53, %c0_54] : memref<8x16x384xbf16, #tpu.memory_space<vmem>>, vector<1x16x384xbf16>
      %322 = vector.shape_cast %321 : vector<1x16x384xbf16> to vector<16x384xbf16>
      %323 = arith.extf %322 : vector<16x384xbf16> to vector<16x384xf32>
      %324 = vector.extract_strided_slice %323 {offsets = [0, 0], sizes = [8, 384], strides = [1, 1]} : vector<16x384xf32> to vector<8x384xf32>
      %325 = arith.truncf %284 : vector<8x128xf32> to vector<8x128xbf16>
      %cst_55 = arith.constant dense<0.000000e+00> : vector<8x384xf32>
      %326 = tpu.matmul %325, %12, %cst_55 {dimension_numbers = #tpu.dot_dimension_numbers<[1], [0], [0], [1], [0, 0, 1, 1], [], []>} : vector<8x128xbf16>, vector<128x384xbf16>, vector<8x384xf32> -> vector<8x384xf32>
      %327 = vector.extract_strided_slice %324 {offsets = [0, 0], sizes = [8, 128], strides = [1, 1]} : vector<8x384xf32> to vector<8x128xf32>
      %328 = vector.extract_strided_slice %326 {offsets = [0, 0], sizes = [8, 128], strides = [1, 1]} : vector<8x384xf32> to vector<8x128xf32>
      %329 = arith.addf %327, %328 : vector<8x128xf32>
      %330 = arith.negf %329 : vector<8x128xf32>
      %331 = math.exp %330 : vector<8x128xf32>
      %cst_56 = arith.constant 1.000000e+00 : f32
      %332 = vector.broadcast %cst_56 : f32 to vector<8x128xf32>
      %333 = arith.addf %332, %331 : vector<8x128xf32>
      %334 = arith.divf %332, %333 : vector<8x128xf32>
      %335 = vector.extract_strided_slice %324 {offsets = [0, 128], sizes = [8, 128], strides = [1, 1]} : vector<8x384xf32> to vector<8x128xf32>
      %336 = vector.extract_strided_slice %326 {offsets = [0, 128], sizes = [8, 128], strides = [1, 1]} : vector<8x384xf32> to vector<8x128xf32>
      %337 = arith.addf %335, %336 : vector<8x128xf32>
      %338 = arith.negf %337 : vector<8x128xf32>
      %339 = math.exp %338 : vector<8x128xf32>
      %cst_57 = arith.constant 1.000000e+00 : f32
      %340 = vector.broadcast %cst_57 : f32 to vector<8x128xf32>
      %341 = arith.addf %340, %339 : vector<8x128xf32>
      %342 = arith.divf %340, %341 : vector<8x128xf32>
      %343 = vector.extract_strided_slice %324 {offsets = [0, 256], sizes = [8, 128], strides = [1, 1]} : vector<8x384xf32> to vector<8x128xf32>
      %344 = vector.extract_strided_slice %326 {offsets = [0, 256], sizes = [8, 128], strides = [1, 1]} : vector<8x384xf32> to vector<8x128xf32>
      %345 = arith.addf %344, %15 : vector<8x128xf32>
      %346 = arith.mulf %334, %345 : vector<8x128xf32>
      %347 = arith.addf %343, %346 : vector<8x128xf32>
      %348 = math.tanh %347 : vector<8x128xf32>
      %cst_58 = arith.constant 1.000000e+00 : f32
      %349 = vector.broadcast %cst_58 : f32 to vector<8x128xf32>
      %350 = arith.subf %349, %342 : vector<8x128xf32>
      %351 = arith.mulf %350, %348 : vector<8x128xf32>
      %352 = arith.mulf %342, %284 : vector<8x128xf32>
      %353 = arith.addf %351, %352 : vector<8x128xf32>
      %354 = vector.broadcast %c4_i32 : i32 to vector<8x1xi32>
      %355 = arith.cmpi slt, %354, %20 : vector<8x1xi32>
      %356 = vector.shape_cast %355 : vector<8x1xi1> to vector<8x1xi1>
      %357 = vector.broadcast %356 : vector<8x1xi1> to vector<8x128xi1>
      %358 = arith.select %357, %353, %284 : vector<8x128xi1>, vector<8x128xf32>
      %359 = vector.extract_strided_slice %323 {offsets = [8, 0], sizes = [8, 384], strides = [1, 1]} : vector<16x384xf32> to vector<8x384xf32>
      %360 = arith.truncf %319 : vector<8x128xf32> to vector<8x128xbf16>
      %cst_59 = arith.constant dense<0.000000e+00> : vector<8x384xf32>
      %361 = tpu.matmul %360, %12, %cst_59 {dimension_numbers = #tpu.dot_dimension_numbers<[1], [0], [0], [1], [0, 0, 1, 1], [], []>} : vector<8x128xbf16>, vector<128x384xbf16>, vector<8x384xf32> -> vector<8x384xf32>
      %362 = vector.extract_strided_slice %359 {offsets = [0, 0], sizes = [8, 128], strides = [1, 1]} : vector<8x384xf32> to vector<8x128xf32>
      %363 = vector.extract_strided_slice %361 {offsets = [0, 0], sizes = [8, 128], strides = [1, 1]} : vector<8x384xf32> to vector<8x128xf32>
      %364 = arith.addf %362, %363 : vector<8x128xf32>
      %365 = arith.negf %364 : vector<8x128xf32>
      %366 = math.exp %365 : vector<8x128xf32>
      %cst_60 = arith.constant 1.000000e+00 : f32
      %367 = vector.broadcast %cst_60 : f32 to vector<8x128xf32>
      %368 = arith.addf %367, %366 : vector<8x128xf32>
      %369 = arith.divf %367, %368 : vector<8x128xf32>
      %370 = vector.extract_strided_slice %359 {offsets = [0, 128], sizes = [8, 128], strides = [1, 1]} : vector<8x384xf32> to vector<8x128xf32>
      %371 = vector.extract_strided_slice %361 {offsets = [0, 128], sizes = [8, 128], strides = [1, 1]} : vector<8x384xf32> to vector<8x128xf32>
      %372 = arith.addf %370, %371 : vector<8x128xf32>
      %373 = arith.negf %372 : vector<8x128xf32>
      %374 = math.exp %373 : vector<8x128xf32>
      %cst_61 = arith.constant 1.000000e+00 : f32
      %375 = vector.broadcast %cst_61 : f32 to vector<8x128xf32>
      %376 = arith.addf %375, %374 : vector<8x128xf32>
      %377 = arith.divf %375, %376 : vector<8x128xf32>
      %378 = vector.extract_strided_slice %359 {offsets = [0, 256], sizes = [8, 128], strides = [1, 1]} : vector<8x384xf32> to vector<8x128xf32>
      %379 = vector.extract_strided_slice %361 {offsets = [0, 256], sizes = [8, 128], strides = [1, 1]} : vector<8x384xf32> to vector<8x128xf32>
      %380 = arith.addf %379, %15 : vector<8x128xf32>
      %381 = arith.mulf %369, %380 : vector<8x128xf32>
      %382 = arith.addf %378, %381 : vector<8x128xf32>
      %383 = math.tanh %382 : vector<8x128xf32>
      %cst_62 = arith.constant 1.000000e+00 : f32
      %384 = vector.broadcast %cst_62 : f32 to vector<8x128xf32>
      %385 = arith.subf %384, %377 : vector<8x128xf32>
      %386 = arith.mulf %385, %383 : vector<8x128xf32>
      %387 = arith.mulf %377, %319 : vector<8x128xf32>
      %388 = arith.addf %386, %387 : vector<8x128xf32>
      %389 = vector.broadcast %c4_i32 : i32 to vector<8x1xi32>
      %390 = arith.cmpi slt, %389, %21 : vector<8x1xi32>
      %391 = vector.shape_cast %390 : vector<8x1xi1> to vector<8x1xi1>
      %392 = vector.broadcast %391 : vector<8x1xi1> to vector<8x128xi1>
      %393 = arith.select %392, %388, %319 : vector<8x128xi1>, vector<8x128xf32>
      %c5_i32 = arith.constant 5 : i32
      %394 = arith.index_cast %c5_i32 : i32 to index
      %c0_63 = arith.constant 0 : index
      %c0_64 = arith.constant 0 : index
      %395 = vector.load %arg3[%394, %c0_63, %c0_64] : memref<8x16x384xbf16, #tpu.memory_space<vmem>>, vector<1x16x384xbf16>
      %396 = vector.shape_cast %395 : vector<1x16x384xbf16> to vector<16x384xbf16>
      %397 = arith.extf %396 : vector<16x384xbf16> to vector<16x384xf32>
      %398 = vector.extract_strided_slice %397 {offsets = [0, 0], sizes = [8, 384], strides = [1, 1]} : vector<16x384xf32> to vector<8x384xf32>
      %399 = arith.truncf %358 : vector<8x128xf32> to vector<8x128xbf16>
      %cst_65 = arith.constant dense<0.000000e+00> : vector<8x384xf32>
      %400 = tpu.matmul %399, %12, %cst_65 {dimension_numbers = #tpu.dot_dimension_numbers<[1], [0], [0], [1], [0, 0, 1, 1], [], []>} : vector<8x128xbf16>, vector<128x384xbf16>, vector<8x384xf32> -> vector<8x384xf32>
      %401 = vector.extract_strided_slice %398 {offsets = [0, 0], sizes = [8, 128], strides = [1, 1]} : vector<8x384xf32> to vector<8x128xf32>
      %402 = vector.extract_strided_slice %400 {offsets = [0, 0], sizes = [8, 128], strides = [1, 1]} : vector<8x384xf32> to vector<8x128xf32>
      %403 = arith.addf %401, %402 : vector<8x128xf32>
      %404 = arith.negf %403 : vector<8x128xf32>
      %405 = math.exp %404 : vector<8x128xf32>
      %cst_66 = arith.constant 1.000000e+00 : f32
      %406 = vector.broadcast %cst_66 : f32 to vector<8x128xf32>
      %407 = arith.addf %406, %405 : vector<8x128xf32>
      %408 = arith.divf %406, %407 : vector<8x128xf32>
      %409 = vector.extract_strided_slice %398 {offsets = [0, 128], sizes = [8, 128], strides = [1, 1]} : vector<8x384xf32> to vector<8x128xf32>
      %410 = vector.extract_strided_slice %400 {offsets = [0, 128], sizes = [8, 128], strides = [1, 1]} : vector<8x384xf32> to vector<8x128xf32>
      %411 = arith.addf %409, %410 : vector<8x128xf32>
      %412 = arith.negf %411 : vector<8x128xf32>
      %413 = math.exp %412 : vector<8x128xf32>
      %cst_67 = arith.constant 1.000000e+00 : f32
      %414 = vector.broadcast %cst_67 : f32 to vector<8x128xf32>
      %415 = arith.addf %414, %413 : vector<8x128xf32>
      %416 = arith.divf %414, %415 : vector<8x128xf32>
      %417 = vector.extract_strided_slice %398 {offsets = [0, 256], sizes = [8, 128], strides = [1, 1]} : vector<8x384xf32> to vector<8x128xf32>
      %418 = vector.extract_strided_slice %400 {offsets = [0, 256], sizes = [8, 128], strides = [1, 1]} : vector<8x384xf32> to vector<8x128xf32>
      %419 = arith.addf %418, %15 : vector<8x128xf32>
      %420 = arith.mulf %408, %419 : vector<8x128xf32>
      %421 = arith.addf %417, %420 : vector<8x128xf32>
      %422 = math.tanh %421 : vector<8x128xf32>
      %cst_68 = arith.constant 1.000000e+00 : f32
      %423 = vector.broadcast %cst_68 : f32 to vector<8x128xf32>
      %424 = arith.subf %423, %416 : vector<8x128xf32>
      %425 = arith.mulf %424, %422 : vector<8x128xf32>
      %426 = arith.mulf %416, %358 : vector<8x128xf32>
      %427 = arith.addf %425, %426 : vector<8x128xf32>
      %428 = vector.broadcast %c5_i32 : i32 to vector<8x1xi32>
      %429 = arith.cmpi slt, %428, %20 : vector<8x1xi32>
      %430 = vector.shape_cast %429 : vector<8x1xi1> to vector<8x1xi1>
      %431 = vector.broadcast %430 : vector<8x1xi1> to vector<8x128xi1>
      %432 = arith.select %431, %427, %358 : vector<8x128xi1>, vector<8x128xf32>
      %433 = vector.extract_strided_slice %397 {offsets = [8, 0], sizes = [8, 384], strides = [1, 1]} : vector<16x384xf32> to vector<8x384xf32>
      %434 = arith.truncf %393 : vector<8x128xf32> to vector<8x128xbf16>
      %cst_69 = arith.constant dense<0.000000e+00> : vector<8x384xf32>
      %435 = tpu.matmul %434, %12, %cst_69 {dimension_numbers = #tpu.dot_dimension_numbers<[1], [0], [0], [1], [0, 0, 1, 1], [], []>} : vector<8x128xbf16>, vector<128x384xbf16>, vector<8x384xf32> -> vector<8x384xf32>
      %436 = vector.extract_strided_slice %433 {offsets = [0, 0], sizes = [8, 128], strides = [1, 1]} : vector<8x384xf32> to vector<8x128xf32>
      %437 = vector.extract_strided_slice %435 {offsets = [0, 0], sizes = [8, 128], strides = [1, 1]} : vector<8x384xf32> to vector<8x128xf32>
      %438 = arith.addf %436, %437 : vector<8x128xf32>
      %439 = arith.negf %438 : vector<8x128xf32>
      %440 = math.exp %439 : vector<8x128xf32>
      %cst_70 = arith.constant 1.000000e+00 : f32
      %441 = vector.broadcast %cst_70 : f32 to vector<8x128xf32>
      %442 = arith.addf %441, %440 : vector<8x128xf32>
      %443 = arith.divf %441, %442 : vector<8x128xf32>
      %444 = vector.extract_strided_slice %433 {offsets = [0, 128], sizes = [8, 128], strides = [1, 1]} : vector<8x384xf32> to vector<8x128xf32>
      %445 = vector.extract_strided_slice %435 {offsets = [0, 128], sizes = [8, 128], strides = [1, 1]} : vector<8x384xf32> to vector<8x128xf32>
      %446 = arith.addf %444, %445 : vector<8x128xf32>
      %447 = arith.negf %446 : vector<8x128xf32>
      %448 = math.exp %447 : vector<8x128xf32>
      %cst_71 = arith.constant 1.000000e+00 : f32
      %449 = vector.broadcast %cst_71 : f32 to vector<8x128xf32>
      %450 = arith.addf %449, %448 : vector<8x128xf32>
      %451 = arith.divf %449, %450 : vector<8x128xf32>
      %452 = vector.extract_strided_slice %433 {offsets = [0, 256], sizes = [8, 128], strides = [1, 1]} : vector<8x384xf32> to vector<8x128xf32>
      %453 = vector.extract_strided_slice %435 {offsets = [0, 256], sizes = [8, 128], strides = [1, 1]} : vector<8x384xf32> to vector<8x128xf32>
      %454 = arith.addf %453, %15 : vector<8x128xf32>
      %455 = arith.mulf %443, %454 : vector<8x128xf32>
      %456 = arith.addf %452, %455 : vector<8x128xf32>
      %457 = math.tanh %456 : vector<8x128xf32>
      %cst_72 = arith.constant 1.000000e+00 : f32
      %458 = vector.broadcast %cst_72 : f32 to vector<8x128xf32>
      %459 = arith.subf %458, %451 : vector<8x128xf32>
      %460 = arith.mulf %459, %457 : vector<8x128xf32>
      %461 = arith.mulf %451, %393 : vector<8x128xf32>
      %462 = arith.addf %460, %461 : vector<8x128xf32>
      %463 = vector.broadcast %c5_i32 : i32 to vector<8x1xi32>
      %464 = arith.cmpi slt, %463, %21 : vector<8x1xi32>
      %465 = vector.shape_cast %464 : vector<8x1xi1> to vector<8x1xi1>
      %466 = vector.broadcast %465 : vector<8x1xi1> to vector<8x128xi1>
      %467 = arith.select %466, %462, %393 : vector<8x128xi1>, vector<8x128xf32>
      %c6_i32 = arith.constant 6 : i32
      %468 = arith.index_cast %c6_i32 : i32 to index
      %c0_73 = arith.constant 0 : index
      %c0_74 = arith.constant 0 : index
      %469 = vector.load %arg3[%468, %c0_73, %c0_74] : memref<8x16x384xbf16, #tpu.memory_space<vmem>>, vector<1x16x384xbf16>
      %470 = vector.shape_cast %469 : vector<1x16x384xbf16> to vector<16x384xbf16>
      %471 = arith.extf %470 : vector<16x384xbf16> to vector<16x384xf32>
      %472 = vector.extract_strided_slice %471 {offsets = [0, 0], sizes = [8, 384], strides = [1, 1]} : vector<16x384xf32> to vector<8x384xf32>
      %473 = arith.truncf %432 : vector<8x128xf32> to vector<8x128xbf16>
      %cst_75 = arith.constant dense<0.000000e+00> : vector<8x384xf32>
      %474 = tpu.matmul %473, %12, %cst_75 {dimension_numbers = #tpu.dot_dimension_numbers<[1], [0], [0], [1], [0, 0, 1, 1], [], []>} : vector<8x128xbf16>, vector<128x384xbf16>, vector<8x384xf32> -> vector<8x384xf32>
      %475 = vector.extract_strided_slice %472 {offsets = [0, 0], sizes = [8, 128], strides = [1, 1]} : vector<8x384xf32> to vector<8x128xf32>
      %476 = vector.extract_strided_slice %474 {offsets = [0, 0], sizes = [8, 128], strides = [1, 1]} : vector<8x384xf32> to vector<8x128xf32>
      %477 = arith.addf %475, %476 : vector<8x128xf32>
      %478 = arith.negf %477 : vector<8x128xf32>
      %479 = math.exp %478 : vector<8x128xf32>
      %cst_76 = arith.constant 1.000000e+00 : f32
      %480 = vector.broadcast %cst_76 : f32 to vector<8x128xf32>
      %481 = arith.addf %480, %479 : vector<8x128xf32>
      %482 = arith.divf %480, %481 : vector<8x128xf32>
      %483 = vector.extract_strided_slice %472 {offsets = [0, 128], sizes = [8, 128], strides = [1, 1]} : vector<8x384xf32> to vector<8x128xf32>
      %484 = vector.extract_strided_slice %474 {offsets = [0, 128], sizes = [8, 128], strides = [1, 1]} : vector<8x384xf32> to vector<8x128xf32>
      %485 = arith.addf %483, %484 : vector<8x128xf32>
      %486 = arith.negf %485 : vector<8x128xf32>
      %487 = math.exp %486 : vector<8x128xf32>
      %cst_77 = arith.constant 1.000000e+00 : f32
      %488 = vector.broadcast %cst_77 : f32 to vector<8x128xf32>
      %489 = arith.addf %488, %487 : vector<8x128xf32>
      %490 = arith.divf %488, %489 : vector<8x128xf32>
      %491 = vector.extract_strided_slice %472 {offsets = [0, 256], sizes = [8, 128], strides = [1, 1]} : vector<8x384xf32> to vector<8x128xf32>
      %492 = vector.extract_strided_slice %474 {offsets = [0, 256], sizes = [8, 128], strides = [1, 1]} : vector<8x384xf32> to vector<8x128xf32>
      %493 = arith.addf %492, %15 : vector<8x128xf32>
      %494 = arith.mulf %482, %493 : vector<8x128xf32>
      %495 = arith.addf %491, %494 : vector<8x128xf32>
      %496 = math.tanh %495 : vector<8x128xf32>
      %cst_78 = arith.constant 1.000000e+00 : f32
      %497 = vector.broadcast %cst_78 : f32 to vector<8x128xf32>
      %498 = arith.subf %497, %490 : vector<8x128xf32>
      %499 = arith.mulf %498, %496 : vector<8x128xf32>
      %500 = arith.mulf %490, %432 : vector<8x128xf32>
      %501 = arith.addf %499, %500 : vector<8x128xf32>
      %502 = vector.broadcast %c6_i32 : i32 to vector<8x1xi32>
      %503 = arith.cmpi slt, %502, %20 : vector<8x1xi32>
      %504 = vector.shape_cast %503 : vector<8x1xi1> to vector<8x1xi1>
      %505 = vector.broadcast %504 : vector<8x1xi1> to vector<8x128xi1>
      %506 = arith.select %505, %501, %432 : vector<8x128xi1>, vector<8x128xf32>
      %507 = vector.extract_strided_slice %471 {offsets = [8, 0], sizes = [8, 384], strides = [1, 1]} : vector<16x384xf32> to vector<8x384xf32>
      %508 = arith.truncf %467 : vector<8x128xf32> to vector<8x128xbf16>
      %cst_79 = arith.constant dense<0.000000e+00> : vector<8x384xf32>
      %509 = tpu.matmul %508, %12, %cst_79 {dimension_numbers = #tpu.dot_dimension_numbers<[1], [0], [0], [1], [0, 0, 1, 1], [], []>} : vector<8x128xbf16>, vector<128x384xbf16>, vector<8x384xf32> -> vector<8x384xf32>
      %510 = vector.extract_strided_slice %507 {offsets = [0, 0], sizes = [8, 128], strides = [1, 1]} : vector<8x384xf32> to vector<8x128xf32>
      %511 = vector.extract_strided_slice %509 {offsets = [0, 0], sizes = [8, 128], strides = [1, 1]} : vector<8x384xf32> to vector<8x128xf32>
      %512 = arith.addf %510, %511 : vector<8x128xf32>
      %513 = arith.negf %512 : vector<8x128xf32>
      %514 = math.exp %513 : vector<8x128xf32>
      %cst_80 = arith.constant 1.000000e+00 : f32
      %515 = vector.broadcast %cst_80 : f32 to vector<8x128xf32>
      %516 = arith.addf %515, %514 : vector<8x128xf32>
      %517 = arith.divf %515, %516 : vector<8x128xf32>
      %518 = vector.extract_strided_slice %507 {offsets = [0, 128], sizes = [8, 128], strides = [1, 1]} : vector<8x384xf32> to vector<8x128xf32>
      %519 = vector.extract_strided_slice %509 {offsets = [0, 128], sizes = [8, 128], strides = [1, 1]} : vector<8x384xf32> to vector<8x128xf32>
      %520 = arith.addf %518, %519 : vector<8x128xf32>
      %521 = arith.negf %520 : vector<8x128xf32>
      %522 = math.exp %521 : vector<8x128xf32>
      %cst_81 = arith.constant 1.000000e+00 : f32
      %523 = vector.broadcast %cst_81 : f32 to vector<8x128xf32>
      %524 = arith.addf %523, %522 : vector<8x128xf32>
      %525 = arith.divf %523, %524 : vector<8x128xf32>
      %526 = vector.extract_strided_slice %507 {offsets = [0, 256], sizes = [8, 128], strides = [1, 1]} : vector<8x384xf32> to vector<8x128xf32>
      %527 = vector.extract_strided_slice %509 {offsets = [0, 256], sizes = [8, 128], strides = [1, 1]} : vector<8x384xf32> to vector<8x128xf32>
      %528 = arith.addf %527, %15 : vector<8x128xf32>
      %529 = arith.mulf %517, %528 : vector<8x128xf32>
      %530 = arith.addf %526, %529 : vector<8x128xf32>
      %531 = math.tanh %530 : vector<8x128xf32>
      %cst_82 = arith.constant 1.000000e+00 : f32
      %532 = vector.broadcast %cst_82 : f32 to vector<8x128xf32>
      %533 = arith.subf %532, %525 : vector<8x128xf32>
      %534 = arith.mulf %533, %531 : vector<8x128xf32>
      %535 = arith.mulf %525, %467 : vector<8x128xf32>
      %536 = arith.addf %534, %535 : vector<8x128xf32>
      %537 = vector.broadcast %c6_i32 : i32 to vector<8x1xi32>
      %538 = arith.cmpi slt, %537, %21 : vector<8x1xi32>
      %539 = vector.shape_cast %538 : vector<8x1xi1> to vector<8x1xi1>
      %540 = vector.broadcast %539 : vector<8x1xi1> to vector<8x128xi1>
      %541 = arith.select %540, %536, %467 : vector<8x128xi1>, vector<8x128xf32>
      %c7_i32 = arith.constant 7 : i32
      %542 = arith.index_cast %c7_i32 : i32 to index
      %c0_83 = arith.constant 0 : index
      %c0_84 = arith.constant 0 : index
      %543 = vector.load %arg3[%542, %c0_83, %c0_84] : memref<8x16x384xbf16, #tpu.memory_space<vmem>>, vector<1x16x384xbf16>
      %544 = vector.shape_cast %543 : vector<1x16x384xbf16> to vector<16x384xbf16>
      %545 = arith.extf %544 : vector<16x384xbf16> to vector<16x384xf32>
      %546 = vector.extract_strided_slice %545 {offsets = [0, 0], sizes = [8, 384], strides = [1, 1]} : vector<16x384xf32> to vector<8x384xf32>
      %547 = arith.truncf %506 : vector<8x128xf32> to vector<8x128xbf16>
      %cst_85 = arith.constant dense<0.000000e+00> : vector<8x384xf32>
      %548 = tpu.matmul %547, %12, %cst_85 {dimension_numbers = #tpu.dot_dimension_numbers<[1], [0], [0], [1], [0, 0, 1, 1], [], []>} : vector<8x128xbf16>, vector<128x384xbf16>, vector<8x384xf32> -> vector<8x384xf32>
      %549 = vector.extract_strided_slice %546 {offsets = [0, 0], sizes = [8, 128], strides = [1, 1]} : vector<8x384xf32> to vector<8x128xf32>
      %550 = vector.extract_strided_slice %548 {offsets = [0, 0], sizes = [8, 128], strides = [1, 1]} : vector<8x384xf32> to vector<8x128xf32>
      %551 = arith.addf %549, %550 : vector<8x128xf32>
      %552 = arith.negf %551 : vector<8x128xf32>
      %553 = math.exp %552 : vector<8x128xf32>
      %cst_86 = arith.constant 1.000000e+00 : f32
      %554 = vector.broadcast %cst_86 : f32 to vector<8x128xf32>
      %555 = arith.addf %554, %553 : vector<8x128xf32>
      %556 = arith.divf %554, %555 : vector<8x128xf32>
      %557 = vector.extract_strided_slice %546 {offsets = [0, 128], sizes = [8, 128], strides = [1, 1]} : vector<8x384xf32> to vector<8x128xf32>
      %558 = vector.extract_strided_slice %548 {offsets = [0, 128], sizes = [8, 128], strides = [1, 1]} : vector<8x384xf32> to vector<8x128xf32>
      %559 = arith.addf %557, %558 : vector<8x128xf32>
      %560 = arith.negf %559 : vector<8x128xf32>
      %561 = math.exp %560 : vector<8x128xf32>
      %cst_87 = arith.constant 1.000000e+00 : f32
      %562 = vector.broadcast %cst_87 : f32 to vector<8x128xf32>
      %563 = arith.addf %562, %561 : vector<8x128xf32>
      %564 = arith.divf %562, %563 : vector<8x128xf32>
      %565 = vector.extract_strided_slice %546 {offsets = [0, 256], sizes = [8, 128], strides = [1, 1]} : vector<8x384xf32> to vector<8x128xf32>
      %566 = vector.extract_strided_slice %548 {offsets = [0, 256], sizes = [8, 128], strides = [1, 1]} : vector<8x384xf32> to vector<8x128xf32>
      %567 = arith.addf %566, %15 : vector<8x128xf32>
      %568 = arith.mulf %556, %567 : vector<8x128xf32>
      %569 = arith.addf %565, %568 : vector<8x128xf32>
      %570 = math.tanh %569 : vector<8x128xf32>
      %cst_88 = arith.constant 1.000000e+00 : f32
      %571 = vector.broadcast %cst_88 : f32 to vector<8x128xf32>
      %572 = arith.subf %571, %564 : vector<8x128xf32>
      %573 = arith.mulf %572, %570 : vector<8x128xf32>
      %574 = arith.mulf %564, %506 : vector<8x128xf32>
      %575 = arith.addf %573, %574 : vector<8x128xf32>
      %576 = vector.broadcast %c7_i32 : i32 to vector<8x1xi32>
      %577 = arith.cmpi slt, %576, %20 : vector<8x1xi32>
      %578 = vector.shape_cast %577 : vector<8x1xi1> to vector<8x1xi1>
      %579 = vector.broadcast %578 : vector<8x1xi1> to vector<8x128xi1>
      %580 = arith.select %579, %575, %506 : vector<8x128xi1>, vector<8x128xf32>
      %581 = vector.extract_strided_slice %545 {offsets = [8, 0], sizes = [8, 384], strides = [1, 1]} : vector<16x384xf32> to vector<8x384xf32>
      %582 = arith.truncf %541 : vector<8x128xf32> to vector<8x128xbf16>
      %cst_89 = arith.constant dense<0.000000e+00> : vector<8x384xf32>
      %583 = tpu.matmul %582, %12, %cst_89 {dimension_numbers = #tpu.dot_dimension_numbers<[1], [0], [0], [1], [0, 0, 1, 1], [], []>} : vector<8x128xbf16>, vector<128x384xbf16>, vector<8x384xf32> -> vector<8x384xf32>
      %584 = vector.extract_strided_slice %581 {offsets = [0, 0], sizes = [8, 128], strides = [1, 1]} : vector<8x384xf32> to vector<8x128xf32>
      %585 = vector.extract_strided_slice %583 {offsets = [0, 0], sizes = [8, 128], strides = [1, 1]} : vector<8x384xf32> to vector<8x128xf32>
      %586 = arith.addf %584, %585 : vector<8x128xf32>
      %587 = arith.negf %586 : vector<8x128xf32>
      %588 = math.exp %587 : vector<8x128xf32>
      %cst_90 = arith.constant 1.000000e+00 : f32
      %589 = vector.broadcast %cst_90 : f32 to vector<8x128xf32>
      %590 = arith.addf %589, %588 : vector<8x128xf32>
      %591 = arith.divf %589, %590 : vector<8x128xf32>
      %592 = vector.extract_strided_slice %581 {offsets = [0, 128], sizes = [8, 128], strides = [1, 1]} : vector<8x384xf32> to vector<8x128xf32>
      %593 = vector.extract_strided_slice %583 {offsets = [0, 128], sizes = [8, 128], strides = [1, 1]} : vector<8x384xf32> to vector<8x128xf32>
      %594 = arith.addf %592, %593 : vector<8x128xf32>
      %595 = arith.negf %594 : vector<8x128xf32>
      %596 = math.exp %595 : vector<8x128xf32>
      %cst_91 = arith.constant 1.000000e+00 : f32
      %597 = vector.broadcast %cst_91 : f32 to vector<8x128xf32>
      %598 = arith.addf %597, %596 : vector<8x128xf32>
      %599 = arith.divf %597, %598 : vector<8x128xf32>
      %600 = vector.extract_strided_slice %581 {offsets = [0, 256], sizes = [8, 128], strides = [1, 1]} : vector<8x384xf32> to vector<8x128xf32>
      %601 = vector.extract_strided_slice %583 {offsets = [0, 256], sizes = [8, 128], strides = [1, 1]} : vector<8x384xf32> to vector<8x128xf32>
      %602 = arith.addf %601, %15 : vector<8x128xf32>
      %603 = arith.mulf %591, %602 : vector<8x128xf32>
      %604 = arith.addf %600, %603 : vector<8x128xf32>
      %605 = math.tanh %604 : vector<8x128xf32>
      %cst_92 = arith.constant 1.000000e+00 : f32
      %606 = vector.broadcast %cst_92 : f32 to vector<8x128xf32>
      %607 = arith.subf %606, %599 : vector<8x128xf32>
      %608 = arith.mulf %607, %605 : vector<8x128xf32>
      %609 = arith.mulf %599, %541 : vector<8x128xf32>
      %610 = arith.addf %608, %609 : vector<8x128xf32>
      %611 = vector.broadcast %c7_i32 : i32 to vector<8x1xi32>
      %612 = arith.cmpi slt, %611, %21 : vector<8x1xi32>
      %613 = vector.shape_cast %612 : vector<8x1xi1> to vector<8x1xi1>
      %614 = vector.broadcast %613 : vector<8x1xi1> to vector<8x128xi1>
      %615 = arith.select %614, %610, %541 : vector<8x128xi1>, vector<8x128xf32>
      %c8_i32_93 = arith.constant 8 : i32
      %c0_94 = arith.constant 0 : index
      %c0_95 = arith.constant 0 : index
      %616 = vector.load %arg10[%c0_94, %c0_95] : memref<16x128xf32, #tpu.memory_space<vmem>>, vector<8x128xf32>
      tpu.vector_store %arg10[%c0_94, %c0_95], %580 {strides = array<i32>} : memref<16x128xf32, #tpu.memory_space<vmem>>, vector<8x128xf32>,
      %c8_96 = arith.constant 8 : index
      %c0_97 = arith.constant 0 : index
      %617 = vector.load %arg10[%c8_96, %c0_97] : memref<16x128xf32, #tpu.memory_space<vmem>>, vector<8x128xf32>
      tpu.vector_store %arg10[%c8_96, %c0_97], %615 {strides = array<i32>} : memref<16x128xf32, #tpu.memory_space<vmem>>, vector<8x128xf32>,
    } else {
    }
    %c0_i32_2 = arith.constant 0 : i32
    %9 = arith.cmpi eq, %arg1, %c0_i32_2 : i32
    %10 = arith.extui %9 : i1 to i32
    %c0_i32_3 = arith.constant 0 : i32
    %11 = arith.cmpi ne, %10, %c0_i32_3 : i32
    scf.if %11 {
      %c0 = arith.constant 0 : index
      %c0_4 = arith.constant 0 : index
      %12 = vector.load %arg10[%c0, %c0_4] : memref<16x128xf32, #tpu.memory_space<vmem>>, vector<16x128xf32>
      %13 = arith.truncf %12 : vector<16x128xf32> to vector<16x128xbf16>
      %c0_5 = arith.constant 0 : index
      %c0_6 = arith.constant 0 : index
      %14 = vector.load %arg7[%c0_5, %c0_6] : memref<128x128xbf16, #tpu.memory_space<vmem>>, vector<128x128xbf16>
      %cst = arith.constant dense<0.000000e+00> : vector<16x128xf32>
      %15 = tpu.matmul %13, %14, %cst {dimension_numbers = #tpu.dot_dimension_numbers<[1], [0], [0], [1], [0, 0, 1, 1], [], []>} : vector<16x128xbf16>, vector<128x128xbf16>, vector<16x128xf32> -> vector<16x128xf32>
      %c0_7 = arith.constant 0 : index
      %c0_8 = arith.constant 0 : index
      %16 = vector.load %arg8[%c0_7, %c0_8] : memref<1x128xf32, #tpu.memory_space<vmem>>, vector<1x128xf32>
      %17 = vector.broadcast %16 : vector<1x128xf32> to vector<16x128xf32>
      %18 = arith.addf %15, %17 : vector<16x128xf32>
      %19 = tpu.iota {dimensions = array<i32: 1>} : vector<16x128xi32>
      %c8_i32_9 = arith.constant 8 : i32
      %20 = vector.broadcast %c8_i32_9 : i32 to vector<16x128xi32>
      %21 = arith.cmpi slt, %19, %20 : vector<16x128xi32>
      %cst_10 = arith.constant -1.000000e+30 : f32
      %22 = vector.broadcast %cst_10 : f32 to vector<16x128xf32>
      %23 = arith.select %21, %18, %22 : vector<16x128xi1>, vector<16x128xf32>
      %cst_11 = arith.constant dense<0xFF800000> : vector<16xf32>
      %24 = vector.multi_reduction <maximumf>, %23, %cst_11 [1] : vector<16x128xf32> to vector<16xf32>
      %cst_12 = arith.constant 0xFF800000 : f32
      %25 = vector.broadcast %cst_12 : f32 to vector<16xf32>
      %26 = arith.maximumf %25, %24 : vector<16xf32>
      %27 = vector.shape_cast %26 : vector<16xf32> to vector<16x1xf32>
      %28 = vector.broadcast %27 : vector<16x1xf32> to vector<16x128xf32>
      %29 = arith.subf %23, %28 : vector<16x128xf32>
      %30 = math.exp %29 : vector<16x128xf32>
      %cst_13 = arith.constant dense<0.000000e+00> : vector<16xf32>
      %31 = vector.multi_reduction <add>, %30, %cst_13 [1] : vector<16x128xf32> to vector<16xf32>
      %32 = vector.shape_cast %31 : vector<16xf32> to vector<16x1xf32>
      %33 = math.log %32 : vector<16x1xf32>
      %34 = vector.broadcast %33 : vector<16x1xf32> to vector<16x128xf32>
      %35 = arith.subf %29, %34 : vector<16x128xf32>
      %c0_14 = arith.constant 0 : index
      %c0_15 = arith.constant 0 : index
      %36 = vector.load %arg9[%c0_14, %c0_15] : memref<16x128xf32, #tpu.memory_space<vmem>>, vector<16x128xf32>
      tpu.vector_store %arg9[%c0_14, %c0_15], %35 {strides = array<i32>} : memref<16x128xf32, #tpu.memory_space<vmem>>, vector<16x128xf32>,
    } else {
    }
    return
  }
  func.func @transform_0(%arg0: i32, %arg1: i32, %arg2: memref<1xi32, #tpu.memory_space<smem>>) -> (i32, i32, i32) {
    %c0_i32 = arith.constant 0 : i32
    %c0_i32_0 = arith.constant 0 : i32
    return %arg1, %arg0, %c0_i32 : i32, i32, i32
  }
  func.func @transform_1(%arg0: i32, %arg1: i32, %arg2: memref<1xi32, #tpu.memory_space<smem>>) -> (i32, i32) {
    %c0_i32 = arith.constant 0 : i32
    %c0_i32_0 = arith.constant 0 : i32
    return %arg0, %c0_i32 : i32, i32
  }
  func.func @transform_2(%arg0: i32, %arg1: i32, %arg2: memref<1xi32, #tpu.memory_space<smem>>) -> (i32, i32) {
    %c0_i32 = arith.constant 0 : i32
    %c0_i32_0 = arith.constant 0 : i32
    %c0_i32_1 = arith.constant 0 : i32
    return %c0_i32, %c0_i32_0 : i32, i32
  }
  func.func @transform_3(%arg0: i32, %arg1: i32, %arg2: memref<1xi32, #tpu.memory_space<smem>>) -> (i32, i32) {
    %c0_i32 = arith.constant 0 : i32
    %c0_i32_0 = arith.constant 0 : i32
    %c0_i32_1 = arith.constant 0 : i32
    return %c0_i32, %c0_i32_0 : i32, i32
  }
  func.func @transform_4(%arg0: i32, %arg1: i32, %arg2: memref<1xi32, #tpu.memory_space<smem>>) -> (i32, i32) {
    %c0_i32 = arith.constant 0 : i32
    %c0_i32_0 = arith.constant 0 : i32
    %c0_i32_1 = arith.constant 0 : i32
    return %c0_i32, %c0_i32_0 : i32, i32
  }
  func.func @transform_5(%arg0: i32, %arg1: i32, %arg2: memref<1xi32, #tpu.memory_space<smem>>) -> (i32, i32) {
    %c0_i32 = arith.constant 0 : i32
    %c0_i32_0 = arith.constant 0 : i32
    %c0_i32_1 = arith.constant 0 : i32
    return %c0_i32, %c0_i32_0 : i32, i32
  }
  func.func @transform_6(%arg0: i32, %arg1: i32, %arg2: memref<1xi32, #tpu.memory_space<smem>>) -> (i32, i32) {
    %c0_i32 = arith.constant 0 : i32
    %c0_i32_0 = arith.constant 0 : i32
    return %arg0, %c0_i32 : i32, i32
  }
}

module attributes {stable_mosaic.version = 11 : i64} {
  func.func @gru_recurrence_kernel(%arg0: i32, %arg1: i32, %arg2: memref<1xi32, #tpu.memory_space<smem>>, %arg3: memref<8x16x384xbf16, #tpu.memory_space<vmem>>, %arg4: memref<16x1xi32, #tpu.memory_space<vmem>>, %arg5: memref<128x384xbf16, #tpu.memory_space<vmem>>, %arg6: memref<1x128xf32, #tpu.memory_space<vmem>>, %arg7: memref<128x128xbf16, #tpu.memory_space<vmem>>, %arg8: memref<1x128xf32, #tpu.memory_space<vmem>>, %arg9: memref<16x128xf32, #tpu.memory_space<vmem>>, %arg10: memref<16x128xf32, #tpu.memory_space<vmem>>) attributes {dimension_semantics = [#tpu.dimension_semantics<parallel>, #tpu.dimension_semantics<arbitrary>], iteration_bounds = array<i64: 1, 1>, scalar_prefetch = 1 : i64, scratch_operands = 1 : i64, tpu.core_type = #tpu.core_type<tc>, window_params = [{transform_indices = @transform_0, window_bounds = array<i64: 8, 16, 384>}, {transform_indices = @transform_1, window_bounds = array<i64: 16, 1>}, {pipeline_mode = #tpu.pipeline_mode<synchronous>, transform_indices = @transform_2, window_bounds = array<i64: 128, 384>}, {pipeline_mode = #tpu.pipeline_mode<synchronous>, transform_indices = @transform_3, window_bounds = array<i64: 1, 128>}, {pipeline_mode = #tpu.pipeline_mode<synchronous>, transform_indices = @transform_4, window_bounds = array<i64: 128, 128>}, {pipeline_mode = #tpu.pipeline_mode<synchronous>, transform_indices = @transform_5, window_bounds = array<i64: 1, 128>}, {transform_indices = @transform_6, window_bounds = array<i64: 16, 128>}]} {
    %c0_i32 = arith.constant 0 : i32
    %0 = arith.cmpi eq, %arg1, %c0_i32 : i32
    %1 = arith.extui %0 : i1 to i32
    %c0_i32_0 = arith.constant 0 : i32
    %2 = arith.cmpi ne, %1, %c0_i32_0 : i32
    scf.if %2 {
      %cst = arith.constant 0.000000e+00 : f32
      %12 = vector.broadcast %cst : f32 to vector<16x128xf32>
      %c0 = arith.constant 0 : index
      %c0_4 = arith.constant 0 : index
      %13 = vector.load %arg10[%c0, %c0_4] : memref<16x128xf32, #tpu.memory_space<vmem>>, vector<16x128xf32>
      tpu.vector_store %arg10[%c0, %c0_4], %12 {strides = array<i32>} : memref<16x128xf32, #tpu.memory_space<vmem>>, vector<16x128xf32>,
    } else {
    }
    %c8_i32 = arith.constant 8 : i32
    %3 = arith.muli %arg1, %c8_i32 : i32
    %4 = arith.index_cast %arg0 : i32 to index
    %5 = memref.load %arg2[%4] : memref<1xi32, #tpu.memory_space<smem>>
    %6 = arith.cmpi slt, %3, %5 : i32
    %7 = arith.extui %6 : i1 to i32
    %c0_i32_1 = arith.constant 0 : i32
    %8 = arith.cmpi ne, %7, %c0_i32_1 : i32
    scf.if %8 {
      %c0 = arith.constant 0 : index
      %c0_4 = arith.constant 0 : index
      %12 = vector.load %arg5[%c0, %c0_4] : memref<128x384xbf16, #tpu.memory_space<vmem>>, vector<128x384xbf16>
      %c0_5 = arith.constant 0 : index
      %c0_6 = arith.constant 0 : index
      %13 = vector.load %arg6[%c0_5, %c0_6] : memref<1x128xf32, #tpu.memory_space<vmem>>, vector<1x128xf32>
      %14 = vector.shape_cast %13 : vector<1x128xf32> to vector<1x128xf32>
      %15 = vector.broadcast %14 : vector<1x128xf32> to vector<8x128xf32>
      %c0_7 = arith.constant 0 : index
      %c0_8 = arith.constant 0 : index
      %16 = vector.load %arg4[%c0_7, %c0_8] : memref<16x1xi32, #tpu.memory_space<vmem>>, vector<16x1xi32>
      %c8_i32_9 = arith.constant 8 : i32
      %17 = arith.muli %arg1, %c8_i32_9 : i32
      %18 = vector.broadcast %17 : i32 to vector<16x1xi32>
      %19 = arith.subi %16, %18 : vector<16x1xi32>
      %20 = vector.extract_strided_slice %19 {offsets = [0, 0], sizes = [8, 1], strides = [1, 1]} : vector<16x1xi32> to vector<8x1xi32>
      %21 = vector.extract_strided_slice %19 {offsets = [8, 0], sizes = [8, 1], strides = [1, 1]} : vector<16x1xi32> to vector<8x1xi32>
      %c0_10 = arith.constant 0 : index
      %c0_11 = arith.constant 0 : index
      %22 = vector.load %arg10[%c0_10, %c0_11] : memref<16x128xf32, #tpu.memory_space<vmem>>, vector<8x128xf32>
      %c8 = arith.constant 8 : index
      %c0_12 = arith.constant 0 : index
      %23 = vector.load %arg10[%c8, %c0_12] : memref<16x128xf32, #tpu.memory_space<vmem>>, vector<8x128xf32>
      %c0_i32_13 = arith.constant 0 : i32
      %24 = arith.index_cast %c0_i32_13 : i32 to index
      %c0_14 = arith.constant 0 : index
      %c0_15 = arith.constant 0 : index
      %25 = vector.load %arg3[%24, %c0_14, %c0_15] : memref<8x16x384xbf16, #tpu.memory_space<vmem>>, vector<1x16x384xbf16>
      %26 = vector.shape_cast %25 : vector<1x16x384xbf16> to vector<16x384xbf16>
      %27 = arith.extf %26 : vector<16x384xbf16> to vector<16x384xf32>
      %28 = vector.extract_strided_slice %27 {offsets = [0, 0], sizes = [8, 384], strides = [1, 1]} : vector<16x384xf32> to vector<8x384xf32>
      %29 = arith.truncf %22 : vector<8x128xf32> to vector<8x128xbf16>
      %cst = arith.constant dense<0.000000e+00> : vector<8x384xf32>
      %30 = tpu.matmul %29, %12, %cst {dimension_numbers = #tpu.dot_dimension_numbers<[1], [0], [0], [1], [0, 0, 1, 1], [], []>} : vector<8x128xbf16>, vector<128x384xbf16>, vector<8x384xf32> -> vector<8x384xf32>
      %31 = vector.extract_strided_slice %28 {offsets = [0, 0], sizes = [8, 128], strides = [1, 1]} : vector<8x384xf32> to vector<8x128xf32>
      %32 = vector.extract_strided_slice %30 {offsets = [0, 0], sizes = [8, 128], strides = [1, 1]} : vector<8x384xf32> to vector<8x128xf32>
      %33 = arith.addf %31, %32 : vector<8x128xf32>
      %34 = arith.negf %33 : vector<8x128xf32>
      %35 = math.exp %34 : vector<8x128xf32>
      %cst_16 = arith.constant 1.000000e+00 : f32
      %36 = vector.broadcast %cst_16 : f32 to vector<8x128xf32>
      %37 = arith.addf %36, %35 : vector<8x128xf32>
      %38 = arith.divf %36, %37 : vector<8x128xf32>
      %39 = vector.extract_strided_slice %28 {offsets = [0, 128], sizes = [8, 128], strides = [1, 1]} : vector<8x384xf32> to vector<8x128xf32>
      %40 = vector.extract_strided_slice %30 {offsets = [0, 128], sizes = [8, 128], strides = [1, 1]} : vector<8x384xf32> to vector<8x128xf32>
      %41 = arith.addf %39, %40 : vector<8x128xf32>
      %42 = arith.negf %41 : vector<8x128xf32>
      %43 = math.exp %42 : vector<8x128xf32>
      %cst_17 = arith.constant 1.000000e+00 : f32
      %44 = vector.broadcast %cst_17 : f32 to vector<8x128xf32>
      %45 = arith.addf %44, %43 : vector<8x128xf32>
      %46 = arith.divf %44, %45 : vector<8x128xf32>
      %47 = vector.extract_strided_slice %28 {offsets = [0, 256], sizes = [8, 128], strides = [1, 1]} : vector<8x384xf32> to vector<8x128xf32>
      %48 = vector.extract_strided_slice %30 {offsets = [0, 256], sizes = [8, 128], strides = [1, 1]} : vector<8x384xf32> to vector<8x128xf32>
      %49 = arith.addf %48, %15 : vector<8x128xf32>
      %50 = arith.mulf %38, %49 : vector<8x128xf32>
      %51 = arith.addf %47, %50 : vector<8x128xf32>
      %52 = math.tanh %51 : vector<8x128xf32>
      %cst_18 = arith.constant 1.000000e+00 : f32
      %53 = vector.broadcast %cst_18 : f32 to vector<8x128xf32>
      %54 = arith.subf %53, %46 : vector<8x128xf32>
      %55 = arith.mulf %54, %52 : vector<8x128xf32>
      %56 = arith.mulf %46, %22 : vector<8x128xf32>
      %57 = arith.addf %55, %56 : vector<8x128xf32>
      %58 = vector.broadcast %c0_i32_13 : i32 to vector<8x1xi32>
      %59 = arith.cmpi slt, %58, %20 : vector<8x1xi32>
      %60 = vector.shape_cast %59 : vector<8x1xi1> to vector<8x1xi1>
      %61 = vector.broadcast %60 : vector<8x1xi1> to vector<8x128xi1>
      %62 = arith.select %61, %57, %22 : vector<8x128xi1>, vector<8x128xf32>
      %63 = vector.extract_strided_slice %27 {offsets = [8, 0], sizes = [8, 384], strides = [1, 1]} : vector<16x384xf32> to vector<8x384xf32>
      %64 = arith.truncf %23 : vector<8x128xf32> to vector<8x128xbf16>
      %cst_19 = arith.constant dense<0.000000e+00> : vector<8x384xf32>
      %65 = tpu.matmul %64, %12, %cst_19 {dimension_numbers = #tpu.dot_dimension_numbers<[1], [0], [0], [1], [0, 0, 1, 1], [], []>} : vector<8x128xbf16>, vector<128x384xbf16>, vector<8x384xf32> -> vector<8x384xf32>
      %66 = vector.extract_strided_slice %63 {offsets = [0, 0], sizes = [8, 128], strides = [1, 1]} : vector<8x384xf32> to vector<8x128xf32>
      %67 = vector.extract_strided_slice %65 {offsets = [0, 0], sizes = [8, 128], strides = [1, 1]} : vector<8x384xf32> to vector<8x128xf32>
      %68 = arith.addf %66, %67 : vector<8x128xf32>
      %69 = arith.negf %68 : vector<8x128xf32>
      %70 = math.exp %69 : vector<8x128xf32>
      %cst_20 = arith.constant 1.000000e+00 : f32
      %71 = vector.broadcast %cst_20 : f32 to vector<8x128xf32>
      %72 = arith.addf %71, %70 : vector<8x128xf32>
      %73 = arith.divf %71, %72 : vector<8x128xf32>
      %74 = vector.extract_strided_slice %63 {offsets = [0, 128], sizes = [8, 128], strides = [1, 1]} : vector<8x384xf32> to vector<8x128xf32>
      %75 = vector.extract_strided_slice %65 {offsets = [0, 128], sizes = [8, 128], strides = [1, 1]} : vector<8x384xf32> to vector<8x128xf32>
      %76 = arith.addf %74, %75 : vector<8x128xf32>
      %77 = arith.negf %76 : vector<8x128xf32>
      %78 = math.exp %77 : vector<8x128xf32>
      %cst_21 = arith.constant 1.000000e+00 : f32
      %79 = vector.broadcast %cst_21 : f32 to vector<8x128xf32>
      %80 = arith.addf %79, %78 : vector<8x128xf32>
      %81 = arith.divf %79, %80 : vector<8x128xf32>
      %82 = vector.extract_strided_slice %63 {offsets = [0, 256], sizes = [8, 128], strides = [1, 1]} : vector<8x384xf32> to vector<8x128xf32>
      %83 = vector.extract_strided_slice %65 {offsets = [0, 256], sizes = [8, 128], strides = [1, 1]} : vector<8x384xf32> to vector<8x128xf32>
      %84 = arith.addf %83, %15 : vector<8x128xf32>
      %85 = arith.mulf %73, %84 : vector<8x128xf32>
      %86 = arith.addf %82, %85 : vector<8x128xf32>
      %87 = math.tanh %86 : vector<8x128xf32>
      %cst_22 = arith.constant 1.000000e+00 : f32
      %88 = vector.broadcast %cst_22 : f32 to vector<8x128xf32>
      %89 = arith.subf %88, %81 : vector<8x128xf32>
      %90 = arith.mulf %89, %87 : vector<8x128xf32>
      %91 = arith.mulf %81, %23 : vector<8x128xf32>
      %92 = arith.addf %90, %91 : vector<8x128xf32>
      %93 = vector.broadcast %c0_i32_13 : i32 to vector<8x1xi32>
      %94 = arith.cmpi slt, %93, %21 : vector<8x1xi32>
      %95 = vector.shape_cast %94 : vector<8x1xi1> to vector<8x1xi1>
      %96 = vector.broadcast %95 : vector<8x1xi1> to vector<8x128xi1>
      %97 = arith.select %96, %92, %23 : vector<8x128xi1>, vector<8x128xf32>
      %c1_i32 = arith.constant 1 : i32
      %98 = arith.index_cast %c1_i32 : i32 to index
      %c0_23 = arith.constant 0 : index
      %c0_24 = arith.constant 0 : index
      %99 = vector.load %arg3[%98, %c0_23, %c0_24] : memref<8x16x384xbf16, #tpu.memory_space<vmem>>, vector<1x16x384xbf16>
      %100 = vector.shape_cast %99 : vector<1x16x384xbf16> to vector<16x384xbf16>
      %101 = arith.extf %100 : vector<16x384xbf16> to vector<16x384xf32>
      %102 = vector.extract_strided_slice %101 {offsets = [0, 0], sizes = [8, 384], strides = [1, 1]} : vector<16x384xf32> to vector<8x384xf32>
      %103 = arith.truncf %62 : vector<8x128xf32> to vector<8x128xbf16>
      %cst_25 = arith.constant dense<0.000000e+00> : vector<8x384xf32>
      %104 = tpu.matmul %103, %12, %cst_25 {dimension_numbers = #tpu.dot_dimension_numbers<[1], [0], [0], [1], [0, 0, 1, 1], [], []>} : vector<8x128xbf16>, vector<128x384xbf16>, vector<8x384xf32> -> vector<8x384xf32>
      %105 = vector.extract_strided_slice %102 {offsets = [0, 0], sizes = [8, 128], strides = [1, 1]} : vector<8x384xf32> to vector<8x128xf32>
      %106 = vector.extract_strided_slice %104 {offsets = [0, 0], sizes = [8, 128], strides = [1, 1]} : vector<8x384xf32> to vector<8x128xf32>
      %107 = arith.addf %105, %106 : vector<8x128xf32>
      %108 = arith.negf %107 : vector<8x128xf32>
      %109 = math.exp %108 : vector<8x128xf32>
      %cst_26 = arith.constant 1.000000e+00 : f32
      %110 = vector.broadcast %cst_26 : f32 to vector<8x128xf32>
      %111 = arith.addf %110, %109 : vector<8x128xf32>
      %112 = arith.divf %110, %111 : vector<8x128xf32>
      %113 = vector.extract_strided_slice %102 {offsets = [0, 128], sizes = [8, 128], strides = [1, 1]} : vector<8x384xf32> to vector<8x128xf32>
      %114 = vector.extract_strided_slice %104 {offsets = [0, 128], sizes = [8, 128], strides = [1, 1]} : vector<8x384xf32> to vector<8x128xf32>
      %115 = arith.addf %113, %114 : vector<8x128xf32>
      %116 = arith.negf %115 : vector<8x128xf32>
      %117 = math.exp %116 : vector<8x128xf32>
      %cst_27 = arith.constant 1.000000e+00 : f32
      %118 = vector.broadcast %cst_27 : f32 to vector<8x128xf32>
      %119 = arith.addf %118, %117 : vector<8x128xf32>
      %120 = arith.divf %118, %119 : vector<8x128xf32>
      %121 = vector.extract_strided_slice %102 {offsets = [0, 256], sizes = [8, 128], strides = [1, 1]} : vector<8x384xf32> to vector<8x128xf32>
      %122 = vector.extract_strided_slice %104 {offsets = [0, 256], sizes = [8, 128], strides = [1, 1]} : vector<8x384xf32> to vector<8x128xf32>
      %123 = arith.addf %122, %15 : vector<8x128xf32>
      %124 = arith.mulf %112, %123 : vector<8x128xf32>
      %125 = arith.addf %121, %124 : vector<8x128xf32>
      %126 = math.tanh %125 : vector<8x128xf32>
      %cst_28 = arith.constant 1.000000e+00 : f32
      %127 = vector.broadcast %cst_28 : f32 to vector<8x128xf32>
      %128 = arith.subf %127, %120 : vector<8x128xf32>
      %129 = arith.mulf %128, %126 : vector<8x128xf32>
      %130 = arith.mulf %120, %62 : vector<8x128xf32>
      %131 = arith.addf %129, %130 : vector<8x128xf32>
      %132 = vector.broadcast %c1_i32 : i32 to vector<8x1xi32>
      %133 = arith.cmpi slt, %132, %20 : vector<8x1xi32>
      %134 = vector.shape_cast %133 : vector<8x1xi1> to vector<8x1xi1>
      %135 = vector.broadcast %134 : vector<8x1xi1> to vector<8x128xi1>
      %136 = arith.select %135, %131, %62 : vector<8x128xi1>, vector<8x128xf32>
      %137 = vector.extract_strided_slice %101 {offsets = [8, 0], sizes = [8, 384], strides = [1, 1]} : vector<16x384xf32> to vector<8x384xf32>
      %138 = arith.truncf %97 : vector<8x128xf32> to vector<8x128xbf16>
      %cst_29 = arith.constant dense<0.000000e+00> : vector<8x384xf32>
      %139 = tpu.matmul %138, %12, %cst_29 {dimension_numbers = #tpu.dot_dimension_numbers<[1], [0], [0], [1], [0, 0, 1, 1], [], []>} : vector<8x128xbf16>, vector<128x384xbf16>, vector<8x384xf32> -> vector<8x384xf32>
      %140 = vector.extract_strided_slice %137 {offsets = [0, 0], sizes = [8, 128], strides = [1, 1]} : vector<8x384xf32> to vector<8x128xf32>
      %141 = vector.extract_strided_slice %139 {offsets = [0, 0], sizes = [8, 128], strides = [1, 1]} : vector<8x384xf32> to vector<8x128xf32>
      %142 = arith.addf %140, %141 : vector<8x128xf32>
      %143 = arith.negf %142 : vector<8x128xf32>
      %144 = math.exp %143 : vector<8x128xf32>
      %cst_30 = arith.constant 1.000000e+00 : f32
      %145 = vector.broadcast %cst_30 : f32 to vector<8x128xf32>
      %146 = arith.addf %145, %144 : vector<8x128xf32>
      %147 = arith.divf %145, %146 : vector<8x128xf32>
      %148 = vector.extract_strided_slice %137 {offsets = [0, 128], sizes = [8, 128], strides = [1, 1]} : vector<8x384xf32> to vector<8x128xf32>
      %149 = vector.extract_strided_slice %139 {offsets = [0, 128], sizes = [8, 128], strides = [1, 1]} : vector<8x384xf32> to vector<8x128xf32>
      %150 = arith.addf %148, %149 : vector<8x128xf32>
      %151 = arith.negf %150 : vector<8x128xf32>
      %152 = math.exp %151 : vector<8x128xf32>
      %cst_31 = arith.constant 1.000000e+00 : f32
      %153 = vector.broadcast %cst_31 : f32 to vector<8x128xf32>
      %154 = arith.addf %153, %152 : vector<8x128xf32>
      %155 = arith.divf %153, %154 : vector<8x128xf32>
      %156 = vector.extract_strided_slice %137 {offsets = [0, 256], sizes = [8, 128], strides = [1, 1]} : vector<8x384xf32> to vector<8x128xf32>
      %157 = vector.extract_strided_slice %139 {offsets = [0, 256], sizes = [8, 128], strides = [1, 1]} : vector<8x384xf32> to vector<8x128xf32>
      %158 = arith.addf %157, %15 : vector<8x128xf32>
      %159 = arith.mulf %147, %158 : vector<8x128xf32>
      %160 = arith.addf %156, %159 : vector<8x128xf32>
      %161 = math.tanh %160 : vector<8x128xf32>
      %cst_32 = arith.constant 1.000000e+00 : f32
      %162 = vector.broadcast %cst_32 : f32 to vector<8x128xf32>
      %163 = arith.subf %162, %155 : vector<8x128xf32>
      %164 = arith.mulf %163, %161 : vector<8x128xf32>
      %165 = arith.mulf %155, %97 : vector<8x128xf32>
      %166 = arith.addf %164, %165 : vector<8x128xf32>
      %167 = vector.broadcast %c1_i32 : i32 to vector<8x1xi32>
      %168 = arith.cmpi slt, %167, %21 : vector<8x1xi32>
      %169 = vector.shape_cast %168 : vector<8x1xi1> to vector<8x1xi1>
      %170 = vector.broadcast %169 : vector<8x1xi1> to vector<8x128xi1>
      %171 = arith.select %170, %166, %97 : vector<8x128xi1>, vector<8x128xf32>
      %c2_i32 = arith.constant 2 : i32
      %172 = arith.index_cast %c2_i32 : i32 to index
      %c0_33 = arith.constant 0 : index
      %c0_34 = arith.constant 0 : index
      %173 = vector.load %arg3[%172, %c0_33, %c0_34] : memref<8x16x384xbf16, #tpu.memory_space<vmem>>, vector<1x16x384xbf16>
      %174 = vector.shape_cast %173 : vector<1x16x384xbf16> to vector<16x384xbf16>
      %175 = arith.extf %174 : vector<16x384xbf16> to vector<16x384xf32>
      %176 = vector.extract_strided_slice %175 {offsets = [0, 0], sizes = [8, 384], strides = [1, 1]} : vector<16x384xf32> to vector<8x384xf32>
      %177 = arith.truncf %136 : vector<8x128xf32> to vector<8x128xbf16>
      %cst_35 = arith.constant dense<0.000000e+00> : vector<8x384xf32>
      %178 = tpu.matmul %177, %12, %cst_35 {dimension_numbers = #tpu.dot_dimension_numbers<[1], [0], [0], [1], [0, 0, 1, 1], [], []>} : vector<8x128xbf16>, vector<128x384xbf16>, vector<8x384xf32> -> vector<8x384xf32>
      %179 = vector.extract_strided_slice %176 {offsets = [0, 0], sizes = [8, 128], strides = [1, 1]} : vector<8x384xf32> to vector<8x128xf32>
      %180 = vector.extract_strided_slice %178 {offsets = [0, 0], sizes = [8, 128], strides = [1, 1]} : vector<8x384xf32> to vector<8x128xf32>
      %181 = arith.addf %179, %180 : vector<8x128xf32>
      %182 = arith.negf %181 : vector<8x128xf32>
      %183 = math.exp %182 : vector<8x128xf32>
      %cst_36 = arith.constant 1.000000e+00 : f32
      %184 = vector.broadcast %cst_36 : f32 to vector<8x128xf32>
      %185 = arith.addf %184, %183 : vector<8x128xf32>
      %186 = arith.divf %184, %185 : vector<8x128xf32>
      %187 = vector.extract_strided_slice %176 {offsets = [0, 128], sizes = [8, 128], strides = [1, 1]} : vector<8x384xf32> to vector<8x128xf32>
      %188 = vector.extract_strided_slice %178 {offsets = [0, 128], sizes = [8, 128], strides = [1, 1]} : vector<8x384xf32> to vector<8x128xf32>
      %189 = arith.addf %187, %188 : vector<8x128xf32>
      %190 = arith.negf %189 : vector<8x128xf32>
      %191 = math.exp %190 : vector<8x128xf32>
      %cst_37 = arith.constant 1.000000e+00 : f32
      %192 = vector.broadcast %cst_37 : f32 to vector<8x128xf32>
      %193 = arith.addf %192, %191 : vector<8x128xf32>
      %194 = arith.divf %192, %193 : vector<8x128xf32>
      %195 = vector.extract_strided_slice %176 {offsets = [0, 256], sizes = [8, 128], strides = [1, 1]} : vector<8x384xf32> to vector<8x128xf32>
      %196 = vector.extract_strided_slice %178 {offsets = [0, 256], sizes = [8, 128], strides = [1, 1]} : vector<8x384xf32> to vector<8x128xf32>
      %197 = arith.addf %196, %15 : vector<8x128xf32>
      %198 = arith.mulf %186, %197 : vector<8x128xf32>
      %199 = arith.addf %195, %198 : vector<8x128xf32>
      %200 = math.tanh %199 : vector<8x128xf32>
      %cst_38 = arith.constant 1.000000e+00 : f32
      %201 = vector.broadcast %cst_38 : f32 to vector<8x128xf32>
      %202 = arith.subf %201, %194 : vector<8x128xf32>
      %203 = arith.mulf %202, %200 : vector<8x128xf32>
      %204 = arith.mulf %194, %136 : vector<8x128xf32>
      %205 = arith.addf %203, %204 : vector<8x128xf32>
      %206 = vector.broadcast %c2_i32 : i32 to vector<8x1xi32>
      %207 = arith.cmpi slt, %206, %20 : vector<8x1xi32>
      %208 = vector.shape_cast %207 : vector<8x1xi1> to vector<8x1xi1>
      %209 = vector.broadcast %208 : vector<8x1xi1> to vector<8x128xi1>
      %210 = arith.select %209, %205, %136 : vector<8x128xi1>, vector<8x128xf32>
      %211 = vector.extract_strided_slice %175 {offsets = [8, 0], sizes = [8, 384], strides = [1, 1]} : vector<16x384xf32> to vector<8x384xf32>
      %212 = arith.truncf %171 : vector<8x128xf32> to vector<8x128xbf16>
      %cst_39 = arith.constant dense<0.000000e+00> : vector<8x384xf32>
      %213 = tpu.matmul %212, %12, %cst_39 {dimension_numbers = #tpu.dot_dimension_numbers<[1], [0], [0], [1], [0, 0, 1, 1], [], []>} : vector<8x128xbf16>, vector<128x384xbf16>, vector<8x384xf32> -> vector<8x384xf32>
      %214 = vector.extract_strided_slice %211 {offsets = [0, 0], sizes = [8, 128], strides = [1, 1]} : vector<8x384xf32> to vector<8x128xf32>
      %215 = vector.extract_strided_slice %213 {offsets = [0, 0], sizes = [8, 128], strides = [1, 1]} : vector<8x384xf32> to vector<8x128xf32>
      %216 = arith.addf %214, %215 : vector<8x128xf32>
      %217 = arith.negf %216 : vector<8x128xf32>
      %218 = math.exp %217 : vector<8x128xf32>
      %cst_40 = arith.constant 1.000000e+00 : f32
      %219 = vector.broadcast %cst_40 : f32 to vector<8x128xf32>
      %220 = arith.addf %219, %218 : vector<8x128xf32>
      %221 = arith.divf %219, %220 : vector<8x128xf32>
      %222 = vector.extract_strided_slice %211 {offsets = [0, 128], sizes = [8, 128], strides = [1, 1]} : vector<8x384xf32> to vector<8x128xf32>
      %223 = vector.extract_strided_slice %213 {offsets = [0, 128], sizes = [8, 128], strides = [1, 1]} : vector<8x384xf32> to vector<8x128xf32>
      %224 = arith.addf %222, %223 : vector<8x128xf32>
      %225 = arith.negf %224 : vector<8x128xf32>
      %226 = math.exp %225 : vector<8x128xf32>
      %cst_41 = arith.constant 1.000000e+00 : f32
      %227 = vector.broadcast %cst_41 : f32 to vector<8x128xf32>
      %228 = arith.addf %227, %226 : vector<8x128xf32>
      %229 = arith.divf %227, %228 : vector<8x128xf32>
      %230 = vector.extract_strided_slice %211 {offsets = [0, 256], sizes = [8, 128], strides = [1, 1]} : vector<8x384xf32> to vector<8x128xf32>
      %231 = vector.extract_strided_slice %213 {offsets = [0, 256], sizes = [8, 128], strides = [1, 1]} : vector<8x384xf32> to vector<8x128xf32>
      %232 = arith.addf %231, %15 : vector<8x128xf32>
      %233 = arith.mulf %221, %232 : vector<8x128xf32>
      %234 = arith.addf %230, %233 : vector<8x128xf32>
      %235 = math.tanh %234 : vector<8x128xf32>
      %cst_42 = arith.constant 1.000000e+00 : f32
      %236 = vector.broadcast %cst_42 : f32 to vector<8x128xf32>
      %237 = arith.subf %236, %229 : vector<8x128xf32>
      %238 = arith.mulf %237, %235 : vector<8x128xf32>
      %239 = arith.mulf %229, %171 : vector<8x128xf32>
      %240 = arith.addf %238, %239 : vector<8x128xf32>
      %241 = vector.broadcast %c2_i32 : i32 to vector<8x1xi32>
      %242 = arith.cmpi slt, %241, %21 : vector<8x1xi32>
      %243 = vector.shape_cast %242 : vector<8x1xi1> to vector<8x1xi1>
      %244 = vector.broadcast %243 : vector<8x1xi1> to vector<8x128xi1>
      %245 = arith.select %244, %240, %171 : vector<8x128xi1>, vector<8x128xf32>
      %c3_i32 = arith.constant 3 : i32
      %246 = arith.index_cast %c3_i32 : i32 to index
      %c0_43 = arith.constant 0 : index
      %c0_44 = arith.constant 0 : index
      %247 = vector.load %arg3[%246, %c0_43, %c0_44] : memref<8x16x384xbf16, #tpu.memory_space<vmem>>, vector<1x16x384xbf16>
      %248 = vector.shape_cast %247 : vector<1x16x384xbf16> to vector<16x384xbf16>
      %249 = arith.extf %248 : vector<16x384xbf16> to vector<16x384xf32>
      %250 = vector.extract_strided_slice %249 {offsets = [0, 0], sizes = [8, 384], strides = [1, 1]} : vector<16x384xf32> to vector<8x384xf32>
      %251 = arith.truncf %210 : vector<8x128xf32> to vector<8x128xbf16>
      %cst_45 = arith.constant dense<0.000000e+00> : vector<8x384xf32>
      %252 = tpu.matmul %251, %12, %cst_45 {dimension_numbers = #tpu.dot_dimension_numbers<[1], [0], [0], [1], [0, 0, 1, 1], [], []>} : vector<8x128xbf16>, vector<128x384xbf16>, vector<8x384xf32> -> vector<8x384xf32>
      %253 = vector.extract_strided_slice %250 {offsets = [0, 0], sizes = [8, 128], strides = [1, 1]} : vector<8x384xf32> to vector<8x128xf32>
      %254 = vector.extract_strided_slice %252 {offsets = [0, 0], sizes = [8, 128], strides = [1, 1]} : vector<8x384xf32> to vector<8x128xf32>
      %255 = arith.addf %253, %254 : vector<8x128xf32>
      %256 = arith.negf %255 : vector<8x128xf32>
      %257 = math.exp %256 : vector<8x128xf32>
      %cst_46 = arith.constant 1.000000e+00 : f32
      %258 = vector.broadcast %cst_46 : f32 to vector<8x128xf32>
      %259 = arith.addf %258, %257 : vector<8x128xf32>
      %260 = arith.divf %258, %259 : vector<8x128xf32>
      %261 = vector.extract_strided_slice %250 {offsets = [0, 128], sizes = [8, 128], strides = [1, 1]} : vector<8x384xf32> to vector<8x128xf32>
      %262 = vector.extract_strided_slice %252 {offsets = [0, 128], sizes = [8, 128], strides = [1, 1]} : vector<8x384xf32> to vector<8x128xf32>
      %263 = arith.addf %261, %262 : vector<8x128xf32>
      %264 = arith.negf %263 : vector<8x128xf32>
      %265 = math.exp %264 : vector<8x128xf32>
      %cst_47 = arith.constant 1.000000e+00 : f32
      %266 = vector.broadcast %cst_47 : f32 to vector<8x128xf32>
      %267 = arith.addf %266, %265 : vector<8x128xf32>
      %268 = arith.divf %266, %267 : vector<8x128xf32>
      %269 = vector.extract_strided_slice %250 {offsets = [0, 256], sizes = [8, 128], strides = [1, 1]} : vector<8x384xf32> to vector<8x128xf32>
      %270 = vector.extract_strided_slice %252 {offsets = [0, 256], sizes = [8, 128], strides = [1, 1]} : vector<8x384xf32> to vector<8x128xf32>
      %271 = arith.addf %270, %15 : vector<8x128xf32>
      %272 = arith.mulf %260, %271 : vector<8x128xf32>
      %273 = arith.addf %269, %272 : vector<8x128xf32>
      %274 = math.tanh %273 : vector<8x128xf32>
      %cst_48 = arith.constant 1.000000e+00 : f32
      %275 = vector.broadcast %cst_48 : f32 to vector<8x128xf32>
      %276 = arith.subf %275, %268 : vector<8x128xf32>
      %277 = arith.mulf %276, %274 : vector<8x128xf32>
      %278 = arith.mulf %268, %210 : vector<8x128xf32>
      %279 = arith.addf %277, %278 : vector<8x128xf32>
      %280 = vector.broadcast %c3_i32 : i32 to vector<8x1xi32>
      %281 = arith.cmpi slt, %280, %20 : vector<8x1xi32>
      %282 = vector.shape_cast %281 : vector<8x1xi1> to vector<8x1xi1>
      %283 = vector.broadcast %282 : vector<8x1xi1> to vector<8x128xi1>
      %284 = arith.select %283, %279, %210 : vector<8x128xi1>, vector<8x128xf32>
      %285 = vector.extract_strided_slice %249 {offsets = [8, 0], sizes = [8, 384], strides = [1, 1]} : vector<16x384xf32> to vector<8x384xf32>
      %286 = arith.truncf %245 : vector<8x128xf32> to vector<8x128xbf16>
      %cst_49 = arith.constant dense<0.000000e+00> : vector<8x384xf32>
      %287 = tpu.matmul %286, %12, %cst_49 {dimension_numbers = #tpu.dot_dimension_numbers<[1], [0], [0], [1], [0, 0, 1, 1], [], []>} : vector<8x128xbf16>, vector<128x384xbf16>, vector<8x384xf32> -> vector<8x384xf32>
      %288 = vector.extract_strided_slice %285 {offsets = [0, 0], sizes = [8, 128], strides = [1, 1]} : vector<8x384xf32> to vector<8x128xf32>
      %289 = vector.extract_strided_slice %287 {offsets = [0, 0], sizes = [8, 128], strides = [1, 1]} : vector<8x384xf32> to vector<8x128xf32>
      %290 = arith.addf %288, %289 : vector<8x128xf32>
      %291 = arith.negf %290 : vector<8x128xf32>
      %292 = math.exp %291 : vector<8x128xf32>
      %cst_50 = arith.constant 1.000000e+00 : f32
      %293 = vector.broadcast %cst_50 : f32 to vector<8x128xf32>
      %294 = arith.addf %293, %292 : vector<8x128xf32>
      %295 = arith.divf %293, %294 : vector<8x128xf32>
      %296 = vector.extract_strided_slice %285 {offsets = [0, 128], sizes = [8, 128], strides = [1, 1]} : vector<8x384xf32> to vector<8x128xf32>
      %297 = vector.extract_strided_slice %287 {offsets = [0, 128], sizes = [8, 128], strides = [1, 1]} : vector<8x384xf32> to vector<8x128xf32>
      %298 = arith.addf %296, %297 : vector<8x128xf32>
      %299 = arith.negf %298 : vector<8x128xf32>
      %300 = math.exp %299 : vector<8x128xf32>
      %cst_51 = arith.constant 1.000000e+00 : f32
      %301 = vector.broadcast %cst_51 : f32 to vector<8x128xf32>
      %302 = arith.addf %301, %300 : vector<8x128xf32>
      %303 = arith.divf %301, %302 : vector<8x128xf32>
      %304 = vector.extract_strided_slice %285 {offsets = [0, 256], sizes = [8, 128], strides = [1, 1]} : vector<8x384xf32> to vector<8x128xf32>
      %305 = vector.extract_strided_slice %287 {offsets = [0, 256], sizes = [8, 128], strides = [1, 1]} : vector<8x384xf32> to vector<8x128xf32>
      %306 = arith.addf %305, %15 : vector<8x128xf32>
      %307 = arith.mulf %295, %306 : vector<8x128xf32>
      %308 = arith.addf %304, %307 : vector<8x128xf32>
      %309 = math.tanh %308 : vector<8x128xf32>
      %cst_52 = arith.constant 1.000000e+00 : f32
      %310 = vector.broadcast %cst_52 : f32 to vector<8x128xf32>
      %311 = arith.subf %310, %303 : vector<8x128xf32>
      %312 = arith.mulf %311, %309 : vector<8x128xf32>
      %313 = arith.mulf %303, %245 : vector<8x128xf32>
      %314 = arith.addf %312, %313 : vector<8x128xf32>
      %315 = vector.broadcast %c3_i32 : i32 to vector<8x1xi32>
      %316 = arith.cmpi slt, %315, %21 : vector<8x1xi32>
      %317 = vector.shape_cast %316 : vector<8x1xi1> to vector<8x1xi1>
      %318 = vector.broadcast %317 : vector<8x1xi1> to vector<8x128xi1>
      %319 = arith.select %318, %314, %245 : vector<8x128xi1>, vector<8x128xf32>
      %c4_i32 = arith.constant 4 : i32
      %320 = arith.index_cast %c4_i32 : i32 to index
      %c0_53 = arith.constant 0 : index
      %c0_54 = arith.constant 0 : index
      %321 = vector.load %arg3[%320, %c0_53, %c0_54] : memref<8x16x384xbf16, #tpu.memory_space<vmem>>, vector<1x16x384xbf16>
      %322 = vector.shape_cast %321 : vector<1x16x384xbf16> to vector<16x384xbf16>
      %323 = arith.extf %322 : vector<16x384xbf16> to vector<16x384xf32>
      %324 = vector.extract_strided_slice %323 {offsets = [0, 0], sizes = [8, 384], strides = [1, 1]} : vector<16x384xf32> to vector<8x384xf32>
      %325 = arith.truncf %284 : vector<8x128xf32> to vector<8x128xbf16>
      %cst_55 = arith.constant dense<0.000000e+00> : vector<8x384xf32>
      %326 = tpu.matmul %325, %12, %cst_55 {dimension_numbers = #tpu.dot_dimension_numbers<[1], [0], [0], [1], [0, 0, 1, 1], [], []>} : vector<8x128xbf16>, vector<128x384xbf16>, vector<8x384xf32> -> vector<8x384xf32>
      %327 = vector.extract_strided_slice %324 {offsets = [0, 0], sizes = [8, 128], strides = [1, 1]} : vector<8x384xf32> to vector<8x128xf32>
      %328 = vector.extract_strided_slice %326 {offsets = [0, 0], sizes = [8, 128], strides = [1, 1]} : vector<8x384xf32> to vector<8x128xf32>
      %329 = arith.addf %327, %328 : vector<8x128xf32>
      %330 = arith.negf %329 : vector<8x128xf32>
      %331 = math.exp %330 : vector<8x128xf32>
      %cst_56 = arith.constant 1.000000e+00 : f32
      %332 = vector.broadcast %cst_56 : f32 to vector<8x128xf32>
      %333 = arith.addf %332, %331 : vector<8x128xf32>
      %334 = arith.divf %332, %333 : vector<8x128xf32>
      %335 = vector.extract_strided_slice %324 {offsets = [0, 128], sizes = [8, 128], strides = [1, 1]} : vector<8x384xf32> to vector<8x128xf32>
      %336 = vector.extract_strided_slice %326 {offsets = [0, 128], sizes = [8, 128], strides = [1, 1]} : vector<8x384xf32> to vector<8x128xf32>
      %337 = arith.addf %335, %336 : vector<8x128xf32>
      %338 = arith.negf %337 : vector<8x128xf32>
      %339 = math.exp %338 : vector<8x128xf32>
      %cst_57 = arith.constant 1.000000e+00 : f32
      %340 = vector.broadcast %cst_57 : f32 to vector<8x128xf32>
      %341 = arith.addf %340, %339 : vector<8x128xf32>
      %342 = arith.divf %340, %341 : vector<8x128xf32>
      %343 = vector.extract_strided_slice %324 {offsets = [0, 256], sizes = [8, 128], strides = [1, 1]} : vector<8x384xf32> to vector<8x128xf32>
      %344 = vector.extract_strided_slice %326 {offsets = [0, 256], sizes = [8, 128], strides = [1, 1]} : vector<8x384xf32> to vector<8x128xf32>
      %345 = arith.addf %344, %15 : vector<8x128xf32>
      %346 = arith.mulf %334, %345 : vector<8x128xf32>
      %347 = arith.addf %343, %346 : vector<8x128xf32>
      %348 = math.tanh %347 : vector<8x128xf32>
      %cst_58 = arith.constant 1.000000e+00 : f32
      %349 = vector.broadcast %cst_58 : f32 to vector<8x128xf32>
      %350 = arith.subf %349, %342 : vector<8x128xf32>
      %351 = arith.mulf %350, %348 : vector<8x128xf32>
      %352 = arith.mulf %342, %284 : vector<8x128xf32>
      %353 = arith.addf %351, %352 : vector<8x128xf32>
      %354 = vector.broadcast %c4_i32 : i32 to vector<8x1xi32>
      %355 = arith.cmpi slt, %354, %20 : vector<8x1xi32>
      %356 = vector.shape_cast %355 : vector<8x1xi1> to vector<8x1xi1>
      %357 = vector.broadcast %356 : vector<8x1xi1> to vector<8x128xi1>
      %358 = arith.select %357, %353, %284 : vector<8x128xi1>, vector<8x128xf32>
      %359 = vector.extract_strided_slice %323 {offsets = [8, 0], sizes = [8, 384], strides = [1, 1]} : vector<16x384xf32> to vector<8x384xf32>
      %360 = arith.truncf %319 : vector<8x128xf32> to vector<8x128xbf16>
      %cst_59 = arith.constant dense<0.000000e+00> : vector<8x384xf32>
      %361 = tpu.matmul %360, %12, %cst_59 {dimension_numbers = #tpu.dot_dimension_numbers<[1], [0], [0], [1], [0, 0, 1, 1], [], []>} : vector<8x128xbf16>, vector<128x384xbf16>, vector<8x384xf32> -> vector<8x384xf32>
      %362 = vector.extract_strided_slice %359 {offsets = [0, 0], sizes = [8, 128], strides = [1, 1]} : vector<8x384xf32> to vector<8x128xf32>
      %363 = vector.extract_strided_slice %361 {offsets = [0, 0], sizes = [8, 128], strides = [1, 1]} : vector<8x384xf32> to vector<8x128xf32>
      %364 = arith.addf %362, %363 : vector<8x128xf32>
      %365 = arith.negf %364 : vector<8x128xf32>
      %366 = math.exp %365 : vector<8x128xf32>
      %cst_60 = arith.constant 1.000000e+00 : f32
      %367 = vector.broadcast %cst_60 : f32 to vector<8x128xf32>
      %368 = arith.addf %367, %366 : vector<8x128xf32>
      %369 = arith.divf %367, %368 : vector<8x128xf32>
      %370 = vector.extract_strided_slice %359 {offsets = [0, 128], sizes = [8, 128], strides = [1, 1]} : vector<8x384xf32> to vector<8x128xf32>
      %371 = vector.extract_strided_slice %361 {offsets = [0, 128], sizes = [8, 128], strides = [1, 1]} : vector<8x384xf32> to vector<8x128xf32>
      %372 = arith.addf %370, %371 : vector<8x128xf32>
      %373 = arith.negf %372 : vector<8x128xf32>
      %374 = math.exp %373 : vector<8x128xf32>
      %cst_61 = arith.constant 1.000000e+00 : f32
      %375 = vector.broadcast %cst_61 : f32 to vector<8x128xf32>
      %376 = arith.addf %375, %374 : vector<8x128xf32>
      %377 = arith.divf %375, %376 : vector<8x128xf32>
      %378 = vector.extract_strided_slice %359 {offsets = [0, 256], sizes = [8, 128], strides = [1, 1]} : vector<8x384xf32> to vector<8x128xf32>
      %379 = vector.extract_strided_slice %361 {offsets = [0, 256], sizes = [8, 128], strides = [1, 1]} : vector<8x384xf32> to vector<8x128xf32>
      %380 = arith.addf %379, %15 : vector<8x128xf32>
      %381 = arith.mulf %369, %380 : vector<8x128xf32>
      %382 = arith.addf %378, %381 : vector<8x128xf32>
      %383 = math.tanh %382 : vector<8x128xf32>
      %cst_62 = arith.constant 1.000000e+00 : f32
      %384 = vector.broadcast %cst_62 : f32 to vector<8x128xf32>
      %385 = arith.subf %384, %377 : vector<8x128xf32>
      %386 = arith.mulf %385, %383 : vector<8x128xf32>
      %387 = arith.mulf %377, %319 : vector<8x128xf32>
      %388 = arith.addf %386, %387 : vector<8x128xf32>
      %389 = vector.broadcast %c4_i32 : i32 to vector<8x1xi32>
      %390 = arith.cmpi slt, %389, %21 : vector<8x1xi32>
      %391 = vector.shape_cast %390 : vector<8x1xi1> to vector<8x1xi1>
      %392 = vector.broadcast %391 : vector<8x1xi1> to vector<8x128xi1>
      %393 = arith.select %392, %388, %319 : vector<8x128xi1>, vector<8x128xf32>
      %c5_i32 = arith.constant 5 : i32
      %394 = arith.index_cast %c5_i32 : i32 to index
      %c0_63 = arith.constant 0 : index
      %c0_64 = arith.constant 0 : index
      %395 = vector.load %arg3[%394, %c0_63, %c0_64] : memref<8x16x384xbf16, #tpu.memory_space<vmem>>, vector<1x16x384xbf16>
      %396 = vector.shape_cast %395 : vector<1x16x384xbf16> to vector<16x384xbf16>
      %397 = arith.extf %396 : vector<16x384xbf16> to vector<16x384xf32>
      %398 = vector.extract_strided_slice %397 {offsets = [0, 0], sizes = [8, 384], strides = [1, 1]} : vector<16x384xf32> to vector<8x384xf32>
      %399 = arith.truncf %358 : vector<8x128xf32> to vector<8x128xbf16>
      %cst_65 = arith.constant dense<0.000000e+00> : vector<8x384xf32>
      %400 = tpu.matmul %399, %12, %cst_65 {dimension_numbers = #tpu.dot_dimension_numbers<[1], [0], [0], [1], [0, 0, 1, 1], [], []>} : vector<8x128xbf16>, vector<128x384xbf16>, vector<8x384xf32> -> vector<8x384xf32>
      %401 = vector.extract_strided_slice %398 {offsets = [0, 0], sizes = [8, 128], strides = [1, 1]} : vector<8x384xf32> to vector<8x128xf32>
      %402 = vector.extract_strided_slice %400 {offsets = [0, 0], sizes = [8, 128], strides = [1, 1]} : vector<8x384xf32> to vector<8x128xf32>
      %403 = arith.addf %401, %402 : vector<8x128xf32>
      %404 = arith.negf %403 : vector<8x128xf32>
      %405 = math.exp %404 : vector<8x128xf32>
      %cst_66 = arith.constant 1.000000e+00 : f32
      %406 = vector.broadcast %cst_66 : f32 to vector<8x128xf32>
      %407 = arith.addf %406, %405 : vector<8x128xf32>
      %408 = arith.divf %406, %407 : vector<8x128xf32>
      %409 = vector.extract_strided_slice %398 {offsets = [0, 128], sizes = [8, 128], strides = [1, 1]} : vector<8x384xf32> to vector<8x128xf32>
      %410 = vector.extract_strided_slice %400 {offsets = [0, 128], sizes = [8, 128], strides = [1, 1]} : vector<8x384xf32> to vector<8x128xf32>
      %411 = arith.addf %409, %410 : vector<8x128xf32>
      %412 = arith.negf %411 : vector<8x128xf32>
      %413 = math.exp %412 : vector<8x128xf32>
      %cst_67 = arith.constant 1.000000e+00 : f32
      %414 = vector.broadcast %cst_67 : f32 to vector<8x128xf32>
      %415 = arith.addf %414, %413 : vector<8x128xf32>
      %416 = arith.divf %414, %415 : vector<8x128xf32>
      %417 = vector.extract_strided_slice %398 {offsets = [0, 256], sizes = [8, 128], strides = [1, 1]} : vector<8x384xf32> to vector<8x128xf32>
      %418 = vector.extract_strided_slice %400 {offsets = [0, 256], sizes = [8, 128], strides = [1, 1]} : vector<8x384xf32> to vector<8x128xf32>
      %419 = arith.addf %418, %15 : vector<8x128xf32>
      %420 = arith.mulf %408, %419 : vector<8x128xf32>
      %421 = arith.addf %417, %420 : vector<8x128xf32>
      %422 = math.tanh %421 : vector<8x128xf32>
      %cst_68 = arith.constant 1.000000e+00 : f32
      %423 = vector.broadcast %cst_68 : f32 to vector<8x128xf32>
      %424 = arith.subf %423, %416 : vector<8x128xf32>
      %425 = arith.mulf %424, %422 : vector<8x128xf32>
      %426 = arith.mulf %416, %358 : vector<8x128xf32>
      %427 = arith.addf %425, %426 : vector<8x128xf32>
      %428 = vector.broadcast %c5_i32 : i32 to vector<8x1xi32>
      %429 = arith.cmpi slt, %428, %20 : vector<8x1xi32>
      %430 = vector.shape_cast %429 : vector<8x1xi1> to vector<8x1xi1>
      %431 = vector.broadcast %430 : vector<8x1xi1> to vector<8x128xi1>
      %432 = arith.select %431, %427, %358 : vector<8x128xi1>, vector<8x128xf32>
      %433 = vector.extract_strided_slice %397 {offsets = [8, 0], sizes = [8, 384], strides = [1, 1]} : vector<16x384xf32> to vector<8x384xf32>
      %434 = arith.truncf %393 : vector<8x128xf32> to vector<8x128xbf16>
      %cst_69 = arith.constant dense<0.000000e+00> : vector<8x384xf32>
      %435 = tpu.matmul %434, %12, %cst_69 {dimension_numbers = #tpu.dot_dimension_numbers<[1], [0], [0], [1], [0, 0, 1, 1], [], []>} : vector<8x128xbf16>, vector<128x384xbf16>, vector<8x384xf32> -> vector<8x384xf32>
      %436 = vector.extract_strided_slice %433 {offsets = [0, 0], sizes = [8, 128], strides = [1, 1]} : vector<8x384xf32> to vector<8x128xf32>
      %437 = vector.extract_strided_slice %435 {offsets = [0, 0], sizes = [8, 128], strides = [1, 1]} : vector<8x384xf32> to vector<8x128xf32>
      %438 = arith.addf %436, %437 : vector<8x128xf32>
      %439 = arith.negf %438 : vector<8x128xf32>
      %440 = math.exp %439 : vector<8x128xf32>
      %cst_70 = arith.constant 1.000000e+00 : f32
      %441 = vector.broadcast %cst_70 : f32 to vector<8x128xf32>
      %442 = arith.addf %441, %440 : vector<8x128xf32>
      %443 = arith.divf %441, %442 : vector<8x128xf32>
      %444 = vector.extract_strided_slice %433 {offsets = [0, 128], sizes = [8, 128], strides = [1, 1]} : vector<8x384xf32> to vector<8x128xf32>
      %445 = vector.extract_strided_slice %435 {offsets = [0, 128], sizes = [8, 128], strides = [1, 1]} : vector<8x384xf32> to vector<8x128xf32>
      %446 = arith.addf %444, %445 : vector<8x128xf32>
      %447 = arith.negf %446 : vector<8x128xf32>
      %448 = math.exp %447 : vector<8x128xf32>
      %cst_71 = arith.constant 1.000000e+00 : f32
      %449 = vector.broadcast %cst_71 : f32 to vector<8x128xf32>
      %450 = arith.addf %449, %448 : vector<8x128xf32>
      %451 = arith.divf %449, %450 : vector<8x128xf32>
      %452 = vector.extract_strided_slice %433 {offsets = [0, 256], sizes = [8, 128], strides = [1, 1]} : vector<8x384xf32> to vector<8x128xf32>
      %453 = vector.extract_strided_slice %435 {offsets = [0, 256], sizes = [8, 128], strides = [1, 1]} : vector<8x384xf32> to vector<8x128xf32>
      %454 = arith.addf %453, %15 : vector<8x128xf32>
      %455 = arith.mulf %443, %454 : vector<8x128xf32>
      %456 = arith.addf %452, %455 : vector<8x128xf32>
      %457 = math.tanh %456 : vector<8x128xf32>
      %cst_72 = arith.constant 1.000000e+00 : f32
      %458 = vector.broadcast %cst_72 : f32 to vector<8x128xf32>
      %459 = arith.subf %458, %451 : vector<8x128xf32>
      %460 = arith.mulf %459, %457 : vector<8x128xf32>
      %461 = arith.mulf %451, %393 : vector<8x128xf32>
      %462 = arith.addf %460, %461 : vector<8x128xf32>
      %463 = vector.broadcast %c5_i32 : i32 to vector<8x1xi32>
      %464 = arith.cmpi slt, %463, %21 : vector<8x1xi32>
      %465 = vector.shape_cast %464 : vector<8x1xi1> to vector<8x1xi1>
      %466 = vector.broadcast %465 : vector<8x1xi1> to vector<8x128xi1>
      %467 = arith.select %466, %462, %393 : vector<8x128xi1>, vector<8x128xf32>
      %c6_i32 = arith.constant 6 : i32
      %468 = arith.index_cast %c6_i32 : i32 to index
      %c0_73 = arith.constant 0 : index
      %c0_74 = arith.constant 0 : index
      %469 = vector.load %arg3[%468, %c0_73, %c0_74] : memref<8x16x384xbf16, #tpu.memory_space<vmem>>, vector<1x16x384xbf16>
      %470 = vector.shape_cast %469 : vector<1x16x384xbf16> to vector<16x384xbf16>
      %471 = arith.extf %470 : vector<16x384xbf16> to vector<16x384xf32>
      %472 = vector.extract_strided_slice %471 {offsets = [0, 0], sizes = [8, 384], strides = [1, 1]} : vector<16x384xf32> to vector<8x384xf32>
      %473 = arith.truncf %432 : vector<8x128xf32> to vector<8x128xbf16>
      %cst_75 = arith.constant dense<0.000000e+00> : vector<8x384xf32>
      %474 = tpu.matmul %473, %12, %cst_75 {dimension_numbers = #tpu.dot_dimension_numbers<[1], [0], [0], [1], [0, 0, 1, 1], [], []>} : vector<8x128xbf16>, vector<128x384xbf16>, vector<8x384xf32> -> vector<8x384xf32>
      %475 = vector.extract_strided_slice %472 {offsets = [0, 0], sizes = [8, 128], strides = [1, 1]} : vector<8x384xf32> to vector<8x128xf32>
      %476 = vector.extract_strided_slice %474 {offsets = [0, 0], sizes = [8, 128], strides = [1, 1]} : vector<8x384xf32> to vector<8x128xf32>
      %477 = arith.addf %475, %476 : vector<8x128xf32>
      %478 = arith.negf %477 : vector<8x128xf32>
      %479 = math.exp %478 : vector<8x128xf32>
      %cst_76 = arith.constant 1.000000e+00 : f32
      %480 = vector.broadcast %cst_76 : f32 to vector<8x128xf32>
      %481 = arith.addf %480, %479 : vector<8x128xf32>
      %482 = arith.divf %480, %481 : vector<8x128xf32>
      %483 = vector.extract_strided_slice %472 {offsets = [0, 128], sizes = [8, 128], strides = [1, 1]} : vector<8x384xf32> to vector<8x128xf32>
      %484 = vector.extract_strided_slice %474 {offsets = [0, 128], sizes = [8, 128], strides = [1, 1]} : vector<8x384xf32> to vector<8x128xf32>
      %485 = arith.addf %483, %484 : vector<8x128xf32>
      %486 = arith.negf %485 : vector<8x128xf32>
      %487 = math.exp %486 : vector<8x128xf32>
      %cst_77 = arith.constant 1.000000e+00 : f32
      %488 = vector.broadcast %cst_77 : f32 to vector<8x128xf32>
      %489 = arith.addf %488, %487 : vector<8x128xf32>
      %490 = arith.divf %488, %489 : vector<8x128xf32>
      %491 = vector.extract_strided_slice %472 {offsets = [0, 256], sizes = [8, 128], strides = [1, 1]} : vector<8x384xf32> to vector<8x128xf32>
      %492 = vector.extract_strided_slice %474 {offsets = [0, 256], sizes = [8, 128], strides = [1, 1]} : vector<8x384xf32> to vector<8x128xf32>
      %493 = arith.addf %492, %15 : vector<8x128xf32>
      %494 = arith.mulf %482, %493 : vector<8x128xf32>
      %495 = arith.addf %491, %494 : vector<8x128xf32>
      %496 = math.tanh %495 : vector<8x128xf32>
      %cst_78 = arith.constant 1.000000e+00 : f32
      %497 = vector.broadcast %cst_78 : f32 to vector<8x128xf32>
      %498 = arith.subf %497, %490 : vector<8x128xf32>
      %499 = arith.mulf %498, %496 : vector<8x128xf32>
      %500 = arith.mulf %490, %432 : vector<8x128xf32>
      %501 = arith.addf %499, %500 : vector<8x128xf32>
      %502 = vector.broadcast %c6_i32 : i32 to vector<8x1xi32>
      %503 = arith.cmpi slt, %502, %20 : vector<8x1xi32>
      %504 = vector.shape_cast %503 : vector<8x1xi1> to vector<8x1xi1>
      %505 = vector.broadcast %504 : vector<8x1xi1> to vector<8x128xi1>
      %506 = arith.select %505, %501, %432 : vector<8x128xi1>, vector<8x128xf32>
      %507 = vector.extract_strided_slice %471 {offsets = [8, 0], sizes = [8, 384], strides = [1, 1]} : vector<16x384xf32> to vector<8x384xf32>
      %508 = arith.truncf %467 : vector<8x128xf32> to vector<8x128xbf16>
      %cst_79 = arith.constant dense<0.000000e+00> : vector<8x384xf32>
      %509 = tpu.matmul %508, %12, %cst_79 {dimension_numbers = #tpu.dot_dimension_numbers<[1], [0], [0], [1], [0, 0, 1, 1], [], []>} : vector<8x128xbf16>, vector<128x384xbf16>, vector<8x384xf32> -> vector<8x384xf32>
      %510 = vector.extract_strided_slice %507 {offsets = [0, 0], sizes = [8, 128], strides = [1, 1]} : vector<8x384xf32> to vector<8x128xf32>
      %511 = vector.extract_strided_slice %509 {offsets = [0, 0], sizes = [8, 128], strides = [1, 1]} : vector<8x384xf32> to vector<8x128xf32>
      %512 = arith.addf %510, %511 : vector<8x128xf32>
      %513 = arith.negf %512 : vector<8x128xf32>
      %514 = math.exp %513 : vector<8x128xf32>
      %cst_80 = arith.constant 1.000000e+00 : f32
      %515 = vector.broadcast %cst_80 : f32 to vector<8x128xf32>
      %516 = arith.addf %515, %514 : vector<8x128xf32>
      %517 = arith.divf %515, %516 : vector<8x128xf32>
      %518 = vector.extract_strided_slice %507 {offsets = [0, 128], sizes = [8, 128], strides = [1, 1]} : vector<8x384xf32> to vector<8x128xf32>
      %519 = vector.extract_strided_slice %509 {offsets = [0, 128], sizes = [8, 128], strides = [1, 1]} : vector<8x384xf32> to vector<8x128xf32>
      %520 = arith.addf %518, %519 : vector<8x128xf32>
      %521 = arith.negf %520 : vector<8x128xf32>
      %522 = math.exp %521 : vector<8x128xf32>
      %cst_81 = arith.constant 1.000000e+00 : f32
      %523 = vector.broadcast %cst_81 : f32 to vector<8x128xf32>
      %524 = arith.addf %523, %522 : vector<8x128xf32>
      %525 = arith.divf %523, %524 : vector<8x128xf32>
      %526 = vector.extract_strided_slice %507 {offsets = [0, 256], sizes = [8, 128], strides = [1, 1]} : vector<8x384xf32> to vector<8x128xf32>
      %527 = vector.extract_strided_slice %509 {offsets = [0, 256], sizes = [8, 128], strides = [1, 1]} : vector<8x384xf32> to vector<8x128xf32>
      %528 = arith.addf %527, %15 : vector<8x128xf32>
      %529 = arith.mulf %517, %528 : vector<8x128xf32>
      %530 = arith.addf %526, %529 : vector<8x128xf32>
      %531 = math.tanh %530 : vector<8x128xf32>
      %cst_82 = arith.constant 1.000000e+00 : f32
      %532 = vector.broadcast %cst_82 : f32 to vector<8x128xf32>
      %533 = arith.subf %532, %525 : vector<8x128xf32>
      %534 = arith.mulf %533, %531 : vector<8x128xf32>
      %535 = arith.mulf %525, %467 : vector<8x128xf32>
      %536 = arith.addf %534, %535 : vector<8x128xf32>
      %537 = vector.broadcast %c6_i32 : i32 to vector<8x1xi32>
      %538 = arith.cmpi slt, %537, %21 : vector<8x1xi32>
      %539 = vector.shape_cast %538 : vector<8x1xi1> to vector<8x1xi1>
      %540 = vector.broadcast %539 : vector<8x1xi1> to vector<8x128xi1>
      %541 = arith.select %540, %536, %467 : vector<8x128xi1>, vector<8x128xf32>
      %c7_i32 = arith.constant 7 : i32
      %542 = arith.index_cast %c7_i32 : i32 to index
      %c0_83 = arith.constant 0 : index
      %c0_84 = arith.constant 0 : index
      %543 = vector.load %arg3[%542, %c0_83, %c0_84] : memref<8x16x384xbf16, #tpu.memory_space<vmem>>, vector<1x16x384xbf16>
      %544 = vector.shape_cast %543 : vector<1x16x384xbf16> to vector<16x384xbf16>
      %545 = arith.extf %544 : vector<16x384xbf16> to vector<16x384xf32>
      %546 = vector.extract_strided_slice %545 {offsets = [0, 0], sizes = [8, 384], strides = [1, 1]} : vector<16x384xf32> to vector<8x384xf32>
      %547 = arith.truncf %506 : vector<8x128xf32> to vector<8x128xbf16>
      %cst_85 = arith.constant dense<0.000000e+00> : vector<8x384xf32>
      %548 = tpu.matmul %547, %12, %cst_85 {dimension_numbers = #tpu.dot_dimension_numbers<[1], [0], [0], [1], [0, 0, 1, 1], [], []>} : vector<8x128xbf16>, vector<128x384xbf16>, vector<8x384xf32> -> vector<8x384xf32>
      %549 = vector.extract_strided_slice %546 {offsets = [0, 0], sizes = [8, 128], strides = [1, 1]} : vector<8x384xf32> to vector<8x128xf32>
      %550 = vector.extract_strided_slice %548 {offsets = [0, 0], sizes = [8, 128], strides = [1, 1]} : vector<8x384xf32> to vector<8x128xf32>
      %551 = arith.addf %549, %550 : vector<8x128xf32>
      %552 = arith.negf %551 : vector<8x128xf32>
      %553 = math.exp %552 : vector<8x128xf32>
      %cst_86 = arith.constant 1.000000e+00 : f32
      %554 = vector.broadcast %cst_86 : f32 to vector<8x128xf32>
      %555 = arith.addf %554, %553 : vector<8x128xf32>
      %556 = arith.divf %554, %555 : vector<8x128xf32>
      %557 = vector.extract_strided_slice %546 {offsets = [0, 128], sizes = [8, 128], strides = [1, 1]} : vector<8x384xf32> to vector<8x128xf32>
      %558 = vector.extract_strided_slice %548 {offsets = [0, 128], sizes = [8, 128], strides = [1, 1]} : vector<8x384xf32> to vector<8x128xf32>
      %559 = arith.addf %557, %558 : vector<8x128xf32>
      %560 = arith.negf %559 : vector<8x128xf32>
      %561 = math.exp %560 : vector<8x128xf32>
      %cst_87 = arith.constant 1.000000e+00 : f32
      %562 = vector.broadcast %cst_87 : f32 to vector<8x128xf32>
      %563 = arith.addf %562, %561 : vector<8x128xf32>
      %564 = arith.divf %562, %563 : vector<8x128xf32>
      %565 = vector.extract_strided_slice %546 {offsets = [0, 256], sizes = [8, 128], strides = [1, 1]} : vector<8x384xf32> to vector<8x128xf32>
      %566 = vector.extract_strided_slice %548 {offsets = [0, 256], sizes = [8, 128], strides = [1, 1]} : vector<8x384xf32> to vector<8x128xf32>
      %567 = arith.addf %566, %15 : vector<8x128xf32>
      %568 = arith.mulf %556, %567 : vector<8x128xf32>
      %569 = arith.addf %565, %568 : vector<8x128xf32>
      %570 = math.tanh %569 : vector<8x128xf32>
      %cst_88 = arith.constant 1.000000e+00 : f32
      %571 = vector.broadcast %cst_88 : f32 to vector<8x128xf32>
      %572 = arith.subf %571, %564 : vector<8x128xf32>
      %573 = arith.mulf %572, %570 : vector<8x128xf32>
      %574 = arith.mulf %564, %506 : vector<8x128xf32>
      %575 = arith.addf %573, %574 : vector<8x128xf32>
      %576 = vector.broadcast %c7_i32 : i32 to vector<8x1xi32>
      %577 = arith.cmpi slt, %576, %20 : vector<8x1xi32>
      %578 = vector.shape_cast %577 : vector<8x1xi1> to vector<8x1xi1>
      %579 = vector.broadcast %578 : vector<8x1xi1> to vector<8x128xi1>
      %580 = arith.select %579, %575, %506 : vector<8x128xi1>, vector<8x128xf32>
      %581 = vector.extract_strided_slice %545 {offsets = [8, 0], sizes = [8, 384], strides = [1, 1]} : vector<16x384xf32> to vector<8x384xf32>
      %582 = arith.truncf %541 : vector<8x128xf32> to vector<8x128xbf16>
      %cst_89 = arith.constant dense<0.000000e+00> : vector<8x384xf32>
      %583 = tpu.matmul %582, %12, %cst_89 {dimension_numbers = #tpu.dot_dimension_numbers<[1], [0], [0], [1], [0, 0, 1, 1], [], []>} : vector<8x128xbf16>, vector<128x384xbf16>, vector<8x384xf32> -> vector<8x384xf32>
      %584 = vector.extract_strided_slice %581 {offsets = [0, 0], sizes = [8, 128], strides = [1, 1]} : vector<8x384xf32> to vector<8x128xf32>
      %585 = vector.extract_strided_slice %583 {offsets = [0, 0], sizes = [8, 128], strides = [1, 1]} : vector<8x384xf32> to vector<8x128xf32>
      %586 = arith.addf %584, %585 : vector<8x128xf32>
      %587 = arith.negf %586 : vector<8x128xf32>
      %588 = math.exp %587 : vector<8x128xf32>
      %cst_90 = arith.constant 1.000000e+00 : f32
      %589 = vector.broadcast %cst_90 : f32 to vector<8x128xf32>
      %590 = arith.addf %589, %588 : vector<8x128xf32>
      %591 = arith.divf %589, %590 : vector<8x128xf32>
      %592 = vector.extract_strided_slice %581 {offsets = [0, 128], sizes = [8, 128], strides = [1, 1]} : vector<8x384xf32> to vector<8x128xf32>
      %593 = vector.extract_strided_slice %583 {offsets = [0, 128], sizes = [8, 128], strides = [1, 1]} : vector<8x384xf32> to vector<8x128xf32>
      %594 = arith.addf %592, %593 : vector<8x128xf32>
      %595 = arith.negf %594 : vector<8x128xf32>
      %596 = math.exp %595 : vector<8x128xf32>
      %cst_91 = arith.constant 1.000000e+00 : f32
      %597 = vector.broadcast %cst_91 : f32 to vector<8x128xf32>
      %598 = arith.addf %597, %596 : vector<8x128xf32>
      %599 = arith.divf %597, %598 : vector<8x128xf32>
      %600 = vector.extract_strided_slice %581 {offsets = [0, 256], sizes = [8, 128], strides = [1, 1]} : vector<8x384xf32> to vector<8x128xf32>
      %601 = vector.extract_strided_slice %583 {offsets = [0, 256], sizes = [8, 128], strides = [1, 1]} : vector<8x384xf32> to vector<8x128xf32>
      %602 = arith.addf %601, %15 : vector<8x128xf32>
      %603 = arith.mulf %591, %602 : vector<8x128xf32>
      %604 = arith.addf %600, %603 : vector<8x128xf32>
      %605 = math.tanh %604 : vector<8x128xf32>
      %cst_92 = arith.constant 1.000000e+00 : f32
      %606 = vector.broadcast %cst_92 : f32 to vector<8x128xf32>
      %607 = arith.subf %606, %599 : vector<8x128xf32>
      %608 = arith.mulf %607, %605 : vector<8x128xf32>
      %609 = arith.mulf %599, %541 : vector<8x128xf32>
      %610 = arith.addf %608, %609 : vector<8x128xf32>
      %611 = vector.broadcast %c7_i32 : i32 to vector<8x1xi32>
      %612 = arith.cmpi slt, %611, %21 : vector<8x1xi32>
      %613 = vector.shape_cast %612 : vector<8x1xi1> to vector<8x1xi1>
      %614 = vector.broadcast %613 : vector<8x1xi1> to vector<8x128xi1>
      %615 = arith.select %614, %610, %541 : vector<8x128xi1>, vector<8x128xf32>
      %c8_i32_93 = arith.constant 8 : i32
      %c0_94 = arith.constant 0 : index
      %c0_95 = arith.constant 0 : index
      %616 = vector.load %arg10[%c0_94, %c0_95] : memref<16x128xf32, #tpu.memory_space<vmem>>, vector<8x128xf32>
      tpu.vector_store %arg10[%c0_94, %c0_95], %580 {strides = array<i32>} : memref<16x128xf32, #tpu.memory_space<vmem>>, vector<8x128xf32>,
      %c8_96 = arith.constant 8 : index
      %c0_97 = arith.constant 0 : index
      %617 = vector.load %arg10[%c8_96, %c0_97] : memref<16x128xf32, #tpu.memory_space<vmem>>, vector<8x128xf32>
      tpu.vector_store %arg10[%c8_96, %c0_97], %615 {strides = array<i32>} : memref<16x128xf32, #tpu.memory_space<vmem>>, vector<8x128xf32>,
    } else {
    }
    %c0_i32_2 = arith.constant 0 : i32
    %9 = arith.cmpi eq, %arg1, %c0_i32_2 : i32
    %10 = arith.extui %9 : i1 to i32
    %c0_i32_3 = arith.constant 0 : i32
    %11 = arith.cmpi ne, %10, %c0_i32_3 : i32
    scf.if %11 {
      %c0 = arith.constant 0 : index
      %c0_4 = arith.constant 0 : index
      %12 = vector.load %arg10[%c0, %c0_4] : memref<16x128xf32, #tpu.memory_space<vmem>>, vector<16x128xf32>
      %13 = arith.truncf %12 : vector<16x128xf32> to vector<16x128xbf16>
      %c0_5 = arith.constant 0 : index
      %c0_6 = arith.constant 0 : index
      %14 = vector.load %arg7[%c0_5, %c0_6] : memref<128x128xbf16, #tpu.memory_space<vmem>>, vector<128x128xbf16>
      %cst = arith.constant dense<0.000000e+00> : vector<16x128xf32>
      %15 = tpu.matmul %13, %14, %cst {dimension_numbers = #tpu.dot_dimension_numbers<[1], [0], [0], [1], [0, 0, 1, 1], [], []>} : vector<16x128xbf16>, vector<128x128xbf16>, vector<16x128xf32> -> vector<16x128xf32>
      %c0_7 = arith.constant 0 : index
      %c0_8 = arith.constant 0 : index
      %16 = vector.load %arg8[%c0_7, %c0_8] : memref<1x128xf32, #tpu.memory_space<vmem>>, vector<1x128xf32>
      %17 = vector.broadcast %16 : vector<1x128xf32> to vector<16x128xf32>
      %18 = arith.addf %15, %17 : vector<16x128xf32>
      %19 = tpu.iota {dimensions = array<i32: 1>} : vector<16x128xi32>
      %c8_i32_9 = arith.constant 8 : i32
      %20 = vector.broadcast %c8_i32_9 : i32 to vector<16x128xi32>
      %21 = arith.cmpi slt, %19, %20 : vector<16x128xi32>
      %cst_10 = arith.constant -1.000000e+30 : f32
      %22 = vector.broadcast %cst_10 : f32 to vector<16x128xf32>
      %23 = arith.select %21, %18, %22 : vector<16x128xi1>, vector<16x128xf32>
      %cst_11 = arith.constant dense<0xFF800000> : vector<16xf32>
      %24 = vector.multi_reduction <maximumf>, %23, %cst_11 [1] : vector<16x128xf32> to vector<16xf32>
      %cst_12 = arith.constant 0xFF800000 : f32
      %25 = vector.broadcast %cst_12 : f32 to vector<16xf32>
      %26 = arith.maximumf %25, %24 : vector<16xf32>
      %27 = vector.shape_cast %26 : vector<16xf32> to vector<16x1xf32>
      %28 = vector.broadcast %27 : vector<16x1xf32> to vector<16x128xf32>
      %29 = arith.subf %23, %28 : vector<16x128xf32>
      %30 = math.exp %29 : vector<16x128xf32>
      %cst_13 = arith.constant dense<0.000000e+00> : vector<16xf32>
      %31 = vector.multi_reduction <add>, %30, %cst_13 [1] : vector<16x128xf32> to vector<16xf32>
      %32 = vector.shape_cast %31 : vector<16xf32> to vector<16x1xf32>
      %33 = math.log %32 : vector<16x1xf32>
      %34 = vector.broadcast %33 : vector<16x1xf32> to vector<16x128xf32>
      %35 = arith.subf %29, %34 : vector<16x128xf32>
      %c0_14 = arith.constant 0 : index
      %c0_15 = arith.constant 0 : index
      %36 = vector.load %arg9[%c0_14, %c0_15] : memref<16x128xf32, #tpu.memory_space<vmem>>, vector<16x128xf32>
      tpu.vector_store %arg9[%c0_14, %c0_15], %35 {strides = array<i32>} : memref<16x128xf32, #tpu.memory_space<vmem>>, vector<16x128xf32>,
    } else {
    }
    return
  }
  func.func @transform_0(%arg0: i32, %arg1: i32, %arg2: memref<1xi32, #tpu.memory_space<smem>>) -> (i32, i32, i32) {
    %c0_i32 = arith.constant 0 : i32
    %c0_i32_0 = arith.constant 0 : i32
    return %arg1, %arg0, %c0_i32 : i32, i32, i32
  }
  func.func @transform_1(%arg0: i32, %arg1: i32, %arg2: memref<1xi32, #tpu.memory_space<smem>>) -> (i32, i32) {
    %c0_i32 = arith.constant 0 : i32
    %c0_i32_0 = arith.constant 0 : i32
    return %arg0, %c0_i32 : i32, i32
  }
  func.func @transform_2(%arg0: i32, %arg1: i32, %arg2: memref<1xi32, #tpu.memory_space<smem>>) -> (i32, i32) {
    %c0_i32 = arith.constant 0 : i32
    %c0_i32_0 = arith.constant 0 : i32
    %c0_i32_1 = arith.constant 0 : i32
    return %c0_i32, %c0_i32_0 : i32, i32
  }
  func.func @transform_3(%arg0: i32, %arg1: i32, %arg2: memref<1xi32, #tpu.memory_space<smem>>) -> (i32, i32) {
    %c0_i32 = arith.constant 0 : i32
    %c0_i32_0 = arith.constant 0 : i32
    %c0_i32_1 = arith.constant 0 : i32
    return %c0_i32, %c0_i32_0 : i32, i32
  }
  func.func @transform_4(%arg0: i32, %arg1: i32, %arg2: memref<1xi32, #tpu.memory_space<smem>>) -> (i32, i32) {
    %c0_i32 = arith.constant 0 : i32
    %c0_i32_0 = arith.constant 0 : i32
    %c0_i32_1 = arith.constant 0 : i32
    return %c0_i32, %c0_i32_0 : i32, i32
  }
  func.func @transform_5(%arg0: i32, %arg1: i32, %arg2: memref<1xi32, #tpu.memory_space<smem>>) -> (i32, i32) {
    %c0_i32 = arith.constant 0 : i32
    %c0_i32_0 = arith.constant 0 : i32
    %c0_i32_1 = arith.constant 0 : i32
    return %c0_i32, %c0_i32_0 : i32, i32
  }
  func.func @transform_6(%arg0: i32, %arg1: i32, %arg2: memref<1xi32, #tpu.memory_space<smem>>) -> (i32, i32) {
    %c0_i32 = arith.constant 0 : i32
    %c0_i32_0 = arith.constant 0 : i32
    return %arg0, %c0_i32 : i32, i32
  }
}

</mosaic_0001>

<llo_original>
// kernel: tpu_custom_call.1
$region0: #{tpu_custom_call.1}
  #allocation0 [shape = 'u32[]', space=smem, size = 0x4, offset = 0x4, fixed_abs, tag = 'smem constant byte address 0x4 - core index']
  #allocation1 [shape = 'u32[72,128]{1,0:T(1,128)}', space=vmem, size = 0x9000, scoped, tag = 'internal scratch']
  #allocation2 [shape = 'f32[16,128]{1,0:T(8,128)}', space=vmem, size = 0x2000, scoped, tag = 'scratch operand']
  #allocation3 [shape = 's32[1]{0}', space=sflag, size = 0x4, scoped, tag = 'scoped memory for tpu_custom_call.1']
  #allocation4 [shape = 's32[1]{0:T(128)S(6)}', space=smem, size = 0x200, scoped, tag = 'prefetched SMEM operand 0']
  %s0 = inlined_call_operand.<no memory space> [shape: s32[1], index: 0, kind: input, shape index: {}]
  %s1 = inlined_call_operand.hbm [shape: bf16[8,16,384], index: 1, kind: input, shape index: {}]
  %s2 = inlined_call_operand.vmem [shape: s32[16,1], index: 2, kind: input, shape index: {}]
  %s3 = inlined_call_operand.hbm [shape: bf16[128,384], index: 3, kind: input, shape index: {}]
  %s4 = inlined_call_operand.vmem [shape: f32[1,128], index: 4, kind: input, shape index: {}]
  %s5 = inlined_call_operand.hbm [shape: bf16[128,128], index: 5, kind: input, shape index: {}]
  %s6 = inlined_call_operand.vmem [shape: f32[1,128], index: 6, kind: input, shape index: {}]
  %s7 = inlined_call_operand.hbm [shape: f32[16,128], index: 7, kind: output, shape index: {}]
  %s8 = sld [smem:[#allocation0]]
  $region58: #{tpu_custom_call.1} parent=0
    _
  %s10 = ssub.s32 1, %s8
  %s11 = scalar_select 0, %s10, %s8
  %12 = sst [smem:[#allocation4]] %s0
  $region1: #{tpu_custom_call.1} parent=0
    #allocation5 [shape = 'u8[98304]{0}', space=vmem, size = 0x18000, scoped, tag = 'input window, operand 1, single buffered']
    #allocation6 [shape = 's32[1]{0}', space=sflag, size = 0x4, scoped, tag = 'scoped memory for tpu_custom_call.1']
    #allocation7 [shape = 's32[1]{0}', space=sflag, size = 0x4, scoped, tag = 'scoped memory for tpu_custom_call.1']
    #allocation8 [shape = 'u8[98304]{0}', space=vmem, size = 0x18000, scoped, tag = 'input window, operand 3, single buffered']
    #allocation9 [shape = 's32[1]{0}', space=sflag, size = 0x4, scoped, tag = 'scoped memory for tpu_custom_call.1']
    #allocation10 [shape = 'u8[32768]{0}', space=vmem, size = 0x8000, scoped, tag = 'input window, operand 5, single buffered']
    #allocation11 [shape = 'u8[8192]{0}', space=vmem, size = 0x2000, scoped, tag = 'output window, operand 0, single buffered']
    %13 = vsyncpa [#allocation6], 0
    %14 = vsyncpa [#allocation9], 0
    %15 = vsyncpa [#allocation7], 0
    // Predicated region
    $region2: #{tpu_custom_call.1} parent=1 // pred_check
      _
    $region3: #{tpu_custom_call.1} parent=1 // pred_check_branch
      %17 = sbr.rel (0) target = $region5
    $region4: #{tpu_custom_call.1} parent=1 // pred_region
      %19 = vsyncadd [#allocation6], 0
      %s20 = sshll.u32 %s1, 4
      %s21 = int_to_ptr.hbm [resolvable:$true] %s20
      %s22 = sshll.u32 [#allocation5], 4
      %s23 = int_to_ptr.vmem [resolvable:$true] %s22
      %28 = dma.hbm_to_vmem [thread:$0]  %s21, 3072, %s23, [#allocation6], 192, 192, 12
    $region5: #{tpu_custom_call.1} parent=1 // pred_fallthru
      _
    // Predicated region
    $region6: #{tpu_custom_call.1} parent=1 // pred_check
      _
    $region7: #{tpu_custom_call.1} parent=1 // pred_check_branch
      %30 = sbr.rel (0) target = $region9
    $region8: #{tpu_custom_call.1} parent=1 // pred_region
      _
    $region9: #{tpu_custom_call.1} parent=1 // pred_fallthru
      _
    // Predicated region
    $region10: #{tpu_custom_call.1} parent=1 // pred_check
      _
    $region11: #{tpu_custom_call.1} parent=1 // pred_check_branch
      %32 = sbr.rel (0) target = $region13
    $region12: #{tpu_custom_call.1} parent=1 // pred_region
      %34 = vsyncadd [#allocation9], 0
      %s35 = sshll.u32 %s3, 4
      %s36 = int_to_ptr.hbm [resolvable:$true] %s35
      %s37 = sshll.u32 [#allocation8], 4
      %s38 = int_to_ptr.vmem [resolvable:$true] %s37
      %43 = dma.hbm_to_vmem [thread:$0]  %s36, 3072, %s38, [#allocation9], 192, 192, 12
    $region13: #{tpu_custom_call.1} parent=1 // pred_fallthru
      _
    // Predicated region
    $region14: #{tpu_custom_call.1} parent=1 // pred_check
      _
    $region15: #{tpu_custom_call.1} parent=1 // pred_check_branch
      %45 = sbr.rel (0) target = $region17
    $region16: #{tpu_custom_call.1} parent=1 // pred_region
      _
    $region17: #{tpu_custom_call.1} parent=1 // pred_fallthru
      _
    // Predicated region
    $region18: #{tpu_custom_call.1} parent=1 // pred_check
      _
    $region19: #{tpu_custom_call.1} parent=1 // pred_check_branch
      %47 = sbr.rel (0) target = $region21
    $region20: #{tpu_custom_call.1} parent=1 // pred_region
      %49 = vsyncadd [#allocation9], 0
      %s50 = sshll.u32 %s5, 4
      %s51 = int_to_ptr.hbm [resolvable:$true] %s50
      %s52 = sshll.u32 [#allocation10], 4
      %s53 = int_to_ptr.vmem [resolvable:$true] %s52
      %58 = dma.hbm_to_vmem [thread:$0]  %s51, 1024, %s53, [#allocation9], 64, 64, 4
    $region21: #{tpu_custom_call.1} parent=1 // pred_fallthru
      _
    // Predicated region
    $region22: #{tpu_custom_call.1} parent=1 // pred_check
      _
    $region23: #{tpu_custom_call.1} parent=1 // pred_check_branch
      %60 = sbr.rel (0) target = $region25
    $region24: #{tpu_custom_call.1} parent=1 // pred_region
      _
    $region25: #{tpu_custom_call.1} parent=1 // pred_fallthru
      _
    // Predicated region
    $region26: #{tpu_custom_call.1} parent=1 // pred_check
      _
    $region27: #{tpu_custom_call.1} parent=1 // pred_check_branch
      %62 = sbr.rel (0) target = $region29
    $region28: #{tpu_custom_call.1} parent=1 // pred_region
      %64 = dma.done [#allocation6], 3072
    $region29: #{tpu_custom_call.1} parent=1 // pred_fallthru
      _
    // Predicated region
    $region30: #{tpu_custom_call.1} parent=1 // pred_check
      _
    $region31: #{tpu_custom_call.1} parent=1 // pred_check_branch
      %66 = sbr.rel (0) target = $region33
    $region32: #{tpu_custom_call.1} parent=1 // pred_region
      %68 = dma.done [#allocation9], 3072
    $region33: #{tpu_custom_call.1} parent=1 // pred_fallthru
      _
    // Predicated region
    $region34: #{tpu_custom_call.1} parent=1 // pred_check
      _
    $region35: #{tpu_custom_call.1} parent=1 // pred_check_branch
      %70 = sbr.rel (0) target = $region37
    $region36: #{tpu_custom_call.1} parent=1 // pred_region
      %72 = dma.done [#allocation9], 1024
    $region37: #{tpu_custom_call.1} parent=1 // pred_fallthru
      _
    %p73 = scmp.eq.s32.totalorder 0, 0
    // Predicated region
    $region38: #{tpu_custom_call.1} parent=1 // pred_check
      %p74 = pneg %p73
    $region39: #{tpu_custom_call.1} parent=1 // pred_check_branch
      %76 = sbr.rel (%p74) target = $region41
    $region40: #{tpu_custom_call.1} parent=1 // pred_region
      %77 = vst [vmem:[#allocation2] sm:$0xff] 0.0
      %78 = vst [vmem:[#allocation2 + $0x8] sm:$0xff] 0.0
    $region41: #{tpu_custom_call.1} parent=1 // pred_fallthru
      _
    %s79 = smul.u32 0, 8
    %s80 = sld [smem:[#allocation4]]
    %p81 = scmp.lt.s32.totalorder %s79, %s80
    // Predicated region
    $region42: #{tpu_custom_call.1} parent=1 // pred_check
      %p82 = pneg %p81
    $region43: #{tpu_custom_call.1} parent=1 // pred_check_branch
      %84 = sbr.rel (%p82) target = $region45
    $region44: #{tpu_custom_call.1} parent=1 // pred_region
      %v85 = vld [vmem:[#allocation8] sm:$0xff]
      %v86 = vld [vmem:[#allocation8 + $0x8] sm:$0xf]
      %v87 = vld [vmem:[#allocation8 + $0xc] sm:$0xff]
      %v88 = vld [vmem:[#allocation8 + $0x14] sm:$0xf]
      %v89 = vld [vmem:[#allocation8 + $0x18] sm:$0xff]
      %v90 = vld [vmem:[#allocation8 + $0x20] sm:$0xf]
      %v91 = vld [vmem:[#allocation8 + $0x24] sm:$0xff]
      %v92 = vld [vmem:[#allocation8 + $0x2c] sm:$0xf]
      %v93 = vld [vmem:[#allocation8 + $0x30] sm:$0xff]
      %v94 = vld [vmem:[#allocation8 + $0x38] sm:$0xf]
      %v95 = vld [vmem:[#allocation8 + $0x3c] sm:$0xff]
      %v96 = vld [vmem:[#allocation8 + $0x44] sm:$0xf]
      %v97 = vld [vmem:[#allocation8 + $0x48] sm:$0xff]
      %v98 = vld [vmem:[#allocation8 + $0x50] sm:$0xf]
      %v99 = vld [vmem:[#allocation8 + $0x54] sm:$0xff]
      %v100 = vld [vmem:[#allocation8 + $0x5c] sm:$0xf]
      %v101 = vld [vmem:[#allocation8 + $0x60] sm:$0xff]
      %v102 = vld [vmem:[#allocation8 + $0x68] sm:$0xf]
      %v103 = vld [vmem:[#allocation8 + $0x6c] sm:$0xff]
      %v104 = vld [vmem:[#allocation8 + $0x74] sm:$0xf]
      %v105 = vld [vmem:[#allocation8 + $0x78] sm:$0xff]
      %v106 = vld [vmem:[#allocation8 + $0x80] sm:$0xf]
      %v107 = vld [vmem:[#allocation8 + $0x84] sm:$0xff]
      %v108 = vld [vmem:[#allocation8 + $0x8c] sm:$0xf]
      %v109 = vld [vmem:[#allocation8 + $0x90] sm:$0xff]
      %v110 = vld [vmem:[#allocation8 + $0x98] sm:$0xf]
      %v111 = vld [vmem:[#allocation8 + $0x9c] sm:$0xff]
      %v112 = vld [vmem:[#allocation8 + $0xa4] sm:$0xf]
      %v113 = vld [vmem:[#allocation8 + $0xa8] sm:$0xff]
      %v114 = vld [vmem:[#allocation8 + $0xb0] sm:$0xf]
      %v115 = vld [vmem:[#allocation8 + $0xb4] sm:$0xff]
      %v116 = vld [vmem:[#allocation8 + $0xbc] sm:$0xf]
      %v117 = vld [vmem:[%s4] sm:$0x1]
      %v119 = vperm.slane %v117, 0
      %v121 = vld [vmem:[%s2] sm:$0xff]
      %v122 = vld [vmem:[%s2 + $0x8] sm:$0xff]
      %v123 = vstv %s79
      %v124 = vsub.s32 %v121, %v123
      %v125 = vsub.s32 %v122, %v123
      %v126 = vld [vmem:[#allocation2] sm:$0xff]
      %v127 = vld [vmem:[#allocation2 + $0x8] sm:$0xff]
      %v128 = vld [vmem:[#allocation5] sm:$0xff]
      %v129 = vld [vmem:[#allocation5 + $0x8] sm:$0xf]
      %v130 = vld [vmem:[#allocation5 + $0xc] sm:$0xff]
      %v131 = vld [vmem:[#allocation5 + $0x14] sm:$0xf]
      %v132 = vunpack.c.l.bf16 %v128
      %v133 = vunpack.c.h.bf16 %v128
      %v134 = vunpack.c.l.bf16 %v129
      %v135 = vunpack.c.l.bf16 %v130
      %v136 = vunpack.c.h.bf16 %v130
      %v137 = vunpack.c.l.bf16 %v131
      %v138 = vpack.c.bf16 %v126, %v126
      %v171 = vunpack.c.l.b16 %v85
      %v172 = vunpack.c.h.b16 %v85
      %v173 = vunpack.c.l.b16 %v86
      %v174 = vunpack.c.l.b16 %v87
      %v175 = vunpack.c.h.b16 %v87
      %v176 = vunpack.c.l.b16 %v88
      %v177 = vunpack.c.l.b16 %v89
      %v178 = vunpack.c.h.b16 %v89
      %v179 = vunpack.c.l.b16 %v90
      %v180 = vunpack.c.l.b16 %v91
      %v181 = vunpack.c.h.b16 %v91
      %v182 = vunpack.c.l.b16 %v92
      %v183 = vunpack.c.l.b16 %v93
      %v184 = vunpack.c.h.b16 %v93
      %v185 = vunpack.c.l.b16 %v94
      %v186 = vunpack.c.l.b16 %v95
      %v187 = vunpack.c.h.b16 %v95
      %v188 = vunpack.c.l.b16 %v96
      %v189 = vunpack.c.l.b16 %v97
      %v190 = vunpack.c.h.b16 %v97
      %v191 = vunpack.c.l.b16 %v98
      %v192 = vunpack.c.l.b16 %v99
      %v193 = vunpack.c.h.b16 %v99
      %v194 = vunpack.c.l.b16 %v100
      %v195 = vunpack.c.l.b16 %v101
      %v196 = vunpack.c.h.b16 %v101
      %v197 = vunpack.c.l.b16 %v102
      %v198 = vunpack.c.l.b16 %v103
      %v199 = vunpack.c.h.b16 %v103
      %v200 = vunpack.c.l.b16 %v104
      %v201 = vunpack.c.l.b16 %v105
      %v202 = vunpack.c.h.b16 %v105
      %v203 = vunpack.c.l.b16 %v106
      %v204 = vunpack.c.l.b16 %v107
      %v205 = vunpack.c.h.b16 %v107
      %v206 = vunpack.c.l.b16 %v108
      %v207 = vunpack.c.l.b16 %v109
      %v208 = vunpack.c.h.b16 %v109
      %v209 = vunpack.c.l.b16 %v110
      %v210 = vunpack.c.l.b16 %v111
      %v211 = vunpack.c.h.b16 %v111
      %v212 = vunpack.c.l.b16 %v112
      %v213 = vunpack.c.l.b16 %v113
      %v214 = vunpack.c.h.b16 %v113
      %v215 = vunpack.c.l.b16 %v114
      %v216 = vunpack.c.l.b16 %v115
      %v217 = vunpack.c.h.b16 %v115
      %v218 = vunpack.c.l.b16 %v116
      %v219 = vpack.c.b16 %v174, %v171
      %v220 = vpack.c.b16 %v175, %v172
      %v221 = vpack.c.b16 %v176, %v173
      %v222 = vpack.c.b16 %v180, %v177
      %v223 = vpack.c.b16 %v181, %v178
      %v224 = vpack.c.b16 %v182, %v179
      %v225 = vpack.c.b16 %v186, %v183
      %v226 = vpack.c.b16 %v187, %v184
      %v227 = vpack.c.b16 %v188, %v185
      %v228 = vpack.c.b16 %v192, %v189
      %v229 = vpack.c.b16 %v193, %v190
      %v230 = vpack.c.b16 %v194, %v191
      %v231 = vpack.c.b16 %v198, %v195
      %v232 = vpack.c.b16 %v199, %v196
      %v233 = vpack.c.b16 %v200, %v197
      %v234 = vpack.c.b16 %v204, %v201
      %v235 = vpack.c.b16 %v205, %v202
      %v236 = vpack.c.b16 %v206, %v203
      %v237 = vpack.c.b16 %v210, %v207
      %v238 = vpack.c.b16 %v211, %v208
      %v239 = vpack.c.b16 %v212, %v209
      %v240 = vpack.c.b16 %v216, %v213
      %v241 = vpack.c.b16 %v217, %v214
      %v242 = vpack.c.b16 %v218, %v215
      %267 = vmatpush.bf16.msra.mxu0 %v240
      %268 = vmatpush.bf16.msra.mxu0 %v237
      %269 = vmatpush.bf16.msra.mxu0 %v234
      %270 = vmatpush.bf16.msra.mxu0 %v231
      %271 = vmatpush.bf16.msra.mxu0 %v228
      %272 = vmatpush.bf16.msra.mxu0 %v225
      %273 = vmatpush.bf16.msra.mxu0 %v222
      %274 = vmatpush.bf16.msra.mxu0 %v219
      %275 = vmatmul.bf16.gmra.mxu0 %v138
      %v276 = vpop.f32.mrf.mxu0
      %v277 = vadd.f32 0.0, %v276
      %v278 = vpop.f32.mrf.mxu0
      %279 = vdwg.mxu0
      %280 = vmatpush.bf16.msra.mxu0 %v241
      %281 = vmatpush.bf16.msra.mxu0 %v238
      %282 = vmatpush.bf16.msra.mxu0 %v235
      %283 = vmatpush.bf16.msra.mxu0 %v232
      %284 = vmatpush.bf16.msra.mxu0 %v229
      %285 = vmatpush.bf16.msra.mxu0 %v226
      %286 = vmatpush.bf16.msra.mxu0 %v223
      %287 = vmatpush.bf16.msra.mxu0 %v220
      %288 = vmatmul.bf16.gmra.mxu0 %v138
      %v289 = vpop.f32.mrf.mxu0
      %v290 = vadd.f32 0.0, %v289
      %v291 = vpop.f32.mrf.mxu0
      %292 = vdwg.mxu0
      %293 = vmatpush.bf16.msra.mxu0 %v242
      %294 = vmatpush.bf16.msra.mxu0 %v239
      %295 = vmatpush.bf16.msra.mxu0 %v236
      %296 = vmatpush.bf16.msra.mxu0 %v233
      %297 = vmatpush.bf16.msra.mxu0 %v230
      %298 = vmatpush.bf16.msra.mxu0 %v227
      %299 = vmatpush.bf16.msra.mxu0 %v224
      %300 = vmatpush.bf16.msra.mxu0 %v221
      %301 = vmatmul.bf16.gmra.mxu0 %v138
      %v302 = vpop.f32.mrf.mxu0
      %v303 = vadd.f32 0.0, %v302
      %v304 = vpop.f32.mrf.mxu0
      %305 = vdwg.mxu0
      %v306 = vadd.f32 %v132, %v277
      %v307 = vxor.u32 %v306, 2147483648
      %v308 = vmul.f32 %v307, 1.442695
      %v309 = vpow.pop %v308
      %v310 = vadd.f32 %v309, 1.0
      %v311 = vrcp.pop %v310
      %v312 = vmul.f32 %v310, %v311
      %v313 = vsub.f32 1.0, %v312
      %v314 = vmul.f32 %v311, %v313
      %v315 = vadd.f32 %v311, %v314
      %vm316 = vweird.f32 %v310
      %vm317 = vweird.f32 %v311
      %vm318 = vmor %vm316, %vm317
      %v319 = vsel %vm318, %v311, %v315
      %v320 = vand.u32 2147483647, %v310
      %vm321 = vcmp.eq.f32.partialorder %v320, 8.507059e+37
      %v322 = vand.u32 %v310, 2147483648
      %v323 = vor.u32 1.1754944e-38, %v322
      %v324 = vsel %vm321, %v323, %v319
      %v325 = vmul.f32 1.0, %v324
      %v326 = vadd.f32 %v133, %v290
      %v327 = vxor.u32 %v326, 2147483648
      %v328 = vmul.f32 %v327, 1.442695
      %v329 = vpow.pop %v328
      %v330 = vadd.f32 %v329, 1.0
      %v331 = vrcp.pop %v330
      %v332 = vmul.f32 %v330, %v331
      %v333 = vsub.f32 1.0, %v332
      %v334 = vmul.f32 %v331, %v333
      %v335 = vadd.f32 %v331, %v334
      %vm336 = vweird.f32 %v330
      %vm337 = vweird.f32 %v331
      %vm338 = vmor %vm336, %vm337
      %v339 = vsel %vm338, %v331, %v335
      %v340 = vand.u32 2147483647, %v330
      %vm341 = vcmp.eq.f32.partialorder %v340, 8.507059e+37
      %v342 = vand.u32 %v330, 2147483648
      %v343 = vor.u32 1.1754944e-38, %v342
      %v344 = vsel %vm341, %v343, %v339
      %v345 = vmul.f32 1.0, %v344
      %v346 = vadd.f32 %v303, %v119
      %v347 = vmul.f32 %v325, %v346
      %v348 = vadd.f32 %v134, %v347
      %v349 = vtanh.pop %v348
      %v350 = vsub.f32 1.0, %v345
      %v351 = vmul.f32 %v350, %v349
      %v352 = vmul.f32 %v345, %v126
      %v353 = vadd.f32 %v351, %v352
      %vm354 = vcmp.gt.s32.totalorder %v124, 0
      %v355 = vsel %vm354, 1, 0
      %356 = vset.pattern.permute.xlu0 0
      %357 = vperm.xlu0 %356, %v355
      %v358 = vpop.permute.xlu0 %357
      %vm359 = vcmp.eq.s32.totalorder %v358, 1
      %v360 = vsel %vm359, %v353, %v126
      %v361 = vpack.c.bf16 %v127, %v127
      %362 = vmatpush.bf16.msra.mxu0 %v240
      %363 = vmatpush.bf16.msra.mxu0 %v237
      %364 = vmatpush.bf16.msra.mxu0 %v234
      %365 = vmatpush.bf16.msra.mxu0 %v231
      %366 = vmatpush.bf16.msra.mxu0 %v228
      %367 = vmatpush.bf16.msra.mxu0 %v225
      %368 = vmatpush.bf16.msra.mxu0 %v222
      %369 = vmatpush.bf16.msra.mxu0 %v219
      %370 = vmatmul.bf16.gmra.mxu0 %v361
      %v371 = vpop.f32.mrf.mxu0
      %v372 = vadd.f32 0.0, %v371
      %v373 = vpop.f32.mrf.mxu0
      %374 = vdwg.mxu0
      %375 = vmatpush.bf16.msra.mxu0 %v241
      %376 = vmatpush.bf16.msra.mxu0 %v238
      %377 = vmatpush.bf16.msra.mxu0 %v235
      %378 = vmatpush.bf16.msra.mxu0 %v232
      %379 = vmatpush.bf16.msra.mxu0 %v229
      %380 = vmatpush.bf16.msra.mxu0 %v226
      %381 = vmatpush.bf16.msra.mxu0 %v223
      %382 = vmatpush.bf16.msra.mxu0 %v220
      %383 = vmatmul.bf16.gmra.mxu0 %v361
      %v384 = vpop.f32.mrf.mxu0
      %v385 = vadd.f32 0.0, %v384
      %v386 = vpop.f32.mrf.mxu0
      %387 = vdwg.mxu0
      %388 = vmatpush.bf16.msra.mxu0 %v242
      %389 = vmatpush.bf16.msra.mxu0 %v239
      %390 = vmatpush.bf16.msra.mxu0 %v236
      %391 = vmatpush.bf16.msra.mxu0 %v233
      %392 = vmatpush.bf16.msra.mxu0 %v230
      %393 = vmatpush.bf16.msra.mxu0 %v227
      %394 = vmatpush.bf16.msra.mxu0 %v224
      %395 = vmatpush.bf16.msra.mxu0 %v221
      %396 = vmatmul.bf16.gmra.mxu0 %v361
      %v397 = vpop.f32.mrf.mxu0
      %v398 = vadd.f32 0.0, %v397
      %v399 = vpop.f32.mrf.mxu0
      %400 = vdwg.mxu0
      %v401 = vadd.f32 %v135, %v372
      %v402 = vxor.u32 %v401, 2147483648
      %v403 = vmul.f32 %v402, 1.442695
      %v404 = vpow.pop %v403
      %v405 = vadd.f32 %v404, 1.0
      %v406 = vrcp.pop %v405
      %v407 = vmul.f32 %v405, %v406
      %v408 = vsub.f32 1.0, %v407
      %v409 = vmul.f32 %v406, %v408
      %v410 = vadd.f32 %v406, %v409
      %vm411 = vweird.f32 %v405
      %vm412 = vweird.f32 %v406
      %vm413 = vmor %vm411, %vm412
      %v414 = vsel %vm413, %v406, %v410
      %v415 = vand.u32 2147483647, %v405
      %vm416 = vcmp.eq.f32.partialorder %v415, 8.507059e+37
      %v417 = vand.u32 %v405, 2147483648
      %v418 = vor.u32 1.1754944e-38, %v417
      %v419 = vsel %vm416, %v418, %v414
      %v420 = vmul.f32 1.0, %v419
      %v421 = vadd.f32 %v136, %v385
      %v422 = vxor.u32 %v421, 2147483648
      %v423 = vmul.f32 %v422, 1.442695
      %v424 = vpow.pop %v423
      %v425 = vadd.f32 %v424, 1.0
      %v426 = vrcp.pop %v425
      %v427 = vmul.f32 %v425, %v426
      %v428 = vsub.f32 1.0, %v427
      %v429 = vmul.f32 %v426, %v428
      %v430 = vadd.f32 %v426, %v429
      %vm431 = vweird.f32 %v425
      %vm432 = vweird.f32 %v426
      %vm433 = vmor %vm431, %vm432
      %v434 = vsel %vm433, %v426, %v430
      %v435 = vand.u32 2147483647, %v425
      %vm436 = vcmp.eq.f32.partialorder %v435, 8.507059e+37
      %v437 = vand.u32 %v425, 2147483648
      %v438 = vor.u32 1.1754944e-38, %v437
      %v439 = vsel %vm436, %v438, %v434
      %v440 = vmul.f32 1.0, %v439
      %v441 = vadd.f32 %v398, %v119
      %v442 = vmul.f32 %v420, %v441
      %v443 = vadd.f32 %v137, %v442
      %v444 = vtanh.pop %v443
      %v445 = vsub.f32 1.0, %v440
      %v446 = vmul.f32 %v445, %v444
      %v447 = vmul.f32 %v440, %v127
      %v448 = vadd.f32 %v446, %v447
      %vm449 = vcmp.gt.s32.totalorder %v125, 0
      %v450 = vsel %vm449, 1, 0
      %451 = vset.pattern.permute.xlu0 0
      %452 = vperm.xlu0 %451, %v450
      %v453 = vpop.permute.xlu0 %452
      %vm454 = vcmp.eq.s32.totalorder %v453, 1
      %v455 = vsel %vm454, %v448, %v127
      %s456 = scalar_lea.vmem [#allocation5], 24
      %v457 = vld [vmem:[%s456] sm:$0xff]
      %v458 = vld [vmem:[%s456 + $0x8] sm:$0xf]
      %v459 = vld [vmem:[%s456 + $0xc] sm:$0xff]
      %v460 = vld [vmem:[%s456 + $0x14] sm:$0xf]
      %v461 = vunpack.c.l.bf16 %v457
      %v462 = vunpack.c.h.bf16 %v457
      %v463 = vunpack.c.l.bf16 %v458
      %v464 = vunpack.c.l.bf16 %v459
      %v465 = vunpack.c.h.bf16 %v459
      %v466 = vunpack.c.l.bf16 %v460
      %v467 = vpack.c.bf16 %v360, %v360
      %468 = vmatpush.bf16.msra.mxu0 %v240
      %469 = vmatpush.bf16.msra.mxu0 %v237
      %470 = vmatpush.bf16.msra.mxu0 %v234
      %471 = vmatpush.bf16.msra.mxu0 %v231
      %472 = vmatpush.bf16.msra.mxu0 %v228
      %473 = vmatpush.bf16.msra.mxu0 %v225
      %474 = vmatpush.bf16.msra.mxu0 %v222
      %475 = vmatpush.bf16.msra.mxu0 %v219
      %476 = vmatmul.bf16.gmra.mxu0 %v467
      %v477 = vpop.f32.mrf.mxu0
      %v478 = vadd.f32 0.0, %v477
      %v479 = vpop.f32.mrf.mxu0
      %480 = vdwg.mxu0
      %481 = vmatpush.bf16.msra.mxu0 %v241
      %482 = vmatpush.bf16.msra.mxu0 %v238
      %483 = vmatpush.bf16.msra.mxu0 %v235
      %484 = vmatpush.bf16.msra.mxu0 %v232
      %485 = vmatpush.bf16.msra.mxu0 %v229
      %486 = vmatpush.bf16.msra.mxu0 %v226
      %487 = vmatpush.bf16.msra.mxu0 %v223
      %488 = vmatpush.bf16.msra.mxu0 %v220
      %489 = vmatmul.bf16.gmra.mxu0 %v467
      %v490 = vpop.f32.mrf.mxu0
      %v491 = vadd.f32 0.0, %v490
      %v492 = vpop.f32.mrf.mxu0
      %493 = vdwg.mxu0
      %494 = vmatpush.bf16.msra.mxu0 %v242
      %495 = vmatpush.bf16.msra.mxu0 %v239
      %496 = vmatpush.bf16.msra.mxu0 %v236
      %497 = vmatpush.bf16.msra.mxu0 %v233
      %498 = vmatpush.bf16.msra.mxu0 %v230
      %499 = vmatpush.bf16.msra.mxu0 %v227
      %500 = vmatpush.bf16.msra.mxu0 %v224
      %501 = vmatpush.bf16.msra.mxu0 %v221
      %502 = vmatmul.bf16.gmra.mxu0 %v467
      %v503 = vpop.f32.mrf.mxu0
      %v504 = vadd.f32 0.0, %v503
      %v505 = vpop.f32.mrf.mxu0
      %506 = vdwg.mxu0
      %v507 = vadd.f32 %v461, %v478
      %v508 = vxor.u32 %v507, 2147483648
      %v509 = vmul.f32 %v508, 1.442695
      %v510 = vpow.pop %v509
      %v511 = vadd.f32 %v510, 1.0
      %v512 = vrcp.pop %v511
      %v513 = vmul.f32 %v511, %v512
      %v514 = vsub.f32 1.0, %v513
      %v515 = vmul.f32 %v512, %v514
      %v516 = vadd.f32 %v512, %v515
      %vm517 = vweird.f32 %v511
      %vm518 = vweird.f32 %v512
      %vm519 = vmor %vm517, %vm518
      %v520 = vsel %vm519, %v512, %v516
      %v521 = vand.u32 2147483647, %v511
      %vm522 = vcmp.eq.f32.partialorder %v521, 8.507059e+37
      %v523 = vand.u32 %v511, 2147483648
      %v524 = vor.u32 1.1754944e-38, %v523
      %v525 = vsel %vm522, %v524, %v520
      %v526 = vmul.f32 1.0, %v525
      %v527 = vadd.f32 %v462, %v491
      %v528 = vxor.u32 %v527, 2147483648
      %v529 = vmul.f32 %v528, 1.442695
      %v530 = vpow.pop %v529
      %v531 = vadd.f32 %v530, 1.0
      %v532 = vrcp.pop %v531
      %v533 = vmul.f32 %v531, %v532
      %v534 = vsub.f32 1.0, %v533
      %v535 = vmul.f32 %v532, %v534
      %v536 = vadd.f32 %v532, %v535
      %vm537 = vweird.f32 %v531
      %vm538 = vweird.f32 %v532
      %vm539 = vmor %vm537, %vm538
      %v540 = vsel %vm539, %v532, %v536
      %v541 = vand.u32 2147483647, %v531
      %vm542 = vcmp.eq.f32.partialorder %v541, 8.507059e+37
      %v543 = vand.u32 %v531, 2147483648
      %v544 = vor.u32 1.1754944e-38, %v543
      %v545 = vsel %vm542, %v544, %v540
      %v546 = vmul.f32 1.0, %v545
      %v547 = vadd.f32 %v504, %v119
      %v548 = vmul.f32 %v526, %v547
      %v549 = vadd.f32 %v463, %v548
      %v550 = vtanh.pop %v549
      %v551 = vsub.f32 1.0, %v546
      %v552 = vmul.f32 %v551, %v550
      %v553 = vmul.f32 %v546, %v360
      %v554 = vadd.f32 %v552, %v553
      %vm555 = vcmp.gt.s32.totalorder %v124, 1
      %v556 = vsel %vm555, 1, 0
      %557 = vset.pattern.permute.xlu0 0
      %558 = vperm.xlu0 %557, %v556
      %v559 = vpop.permute.xlu0 %558
      %vm560 = vcmp.eq.s32.totalorder %v559, 1
      %v561 = vsel %vm560, %v554, %v360
      %v562 = vpack.c.bf16 %v455, %v455
      %563 = vmatpush.bf16.msra.mxu0 %v240
      %564 = vmatpush.bf16.msra.mxu0 %v237
      %565 = vmatpush.bf16.msra.mxu0 %v234
      %566 = vmatpush.bf16.msra.mxu0 %v231
      %567 = vmatpush.bf16.msra.mxu0 %v228
      %568 = vmatpush.bf16.msra.mxu0 %v225
      %569 = vmatpush.bf16.msra.mxu0 %v222
      %570 = vmatpush.bf16.msra.mxu0 %v219
      %571 = vmatmul.bf16.gmra.mxu0 %v562
      %v572 = vpop.f32.mrf.mxu0
      %v573 = vadd.f32 0.0, %v572
      %v574 = vpop.f32.mrf.mxu0
      %575 = vdwg.mxu0
      %576 = vmatpush.bf16.msra.mxu0 %v241
      %577 = vmatpush.bf16.msra.mxu0 %v238
      %578 = vmatpush.bf16.msra.mxu0 %v235
      %579 = vmatpush.bf16.msra.mxu0 %v232
      %580 = vmatpush.bf16.msra.mxu0 %v229
      %581 = vmatpush.bf16.msra.mxu0 %v226
      %582 = vmatpush.bf16.msra.mxu0 %v223
      %583 = vmatpush.bf16.msra.mxu0 %v220
      %584 = vmatmul.bf16.gmra.mxu0 %v562
      %v585 = vpop.f32.mrf.mxu0
      %v586 = vadd.f32 0.0, %v585
      %v587 = vpop.f32.mrf.mxu0
      %588 = vdwg.mxu0
      %589 = vmatpush.bf16.msra.mxu0 %v242
      %590 = vmatpush.bf16.msra.mxu0 %v239
      %591 = vmatpush.bf16.msra.mxu0 %v236
      %592 = vmatpush.bf16.msra.mxu0 %v233
      %593 = vmatpush.bf16.msra.mxu0 %v230
      %594 = vmatpush.bf16.msra.mxu0 %v227
      %595 = vmatpush.bf16.msra.mxu0 %v224
      %596 = vmatpush.bf16.msra.mxu0 %v221
      %597 = vmatmul.bf16.gmra.mxu0 %v562
      %v598 = vpop.f32.mrf.mxu0
      %v599 = vadd.f32 0.0, %v598
      %v600 = vpop.f32.mrf.mxu0
      %601 = vdwg.mxu0
      %v602 = vadd.f32 %v464, %v573
      %v603 = vxor.u32 %v602, 2147483648
      %v604 = vmul.f32 %v603, 1.442695
      %v605 = vpow.pop %v604
      %v606 = vadd.f32 %v605, 1.0
      %v607 = vrcp.pop %v606
      %v608 = vmul.f32 %v606, %v607
      %v609 = vsub.f32 1.0, %v608
      %v610 = vmul.f32 %v607, %v609
      %v611 = vadd.f32 %v607, %v610
      %vm612 = vweird.f32 %v606
      %vm613 = vweird.f32 %v607
      %vm614 = vmor %vm612, %vm613
      %v615 = vsel %vm614, %v607, %v611
      %v616 = vand.u32 2147483647, %v606
      %vm617 = vcmp.eq.f32.partialorder %v616, 8.507059e+37
      %v618 = vand.u32 %v606, 2147483648
      %v619 = vor.u32 1.1754944e-38, %v618
      %v620 = vsel %vm617, %v619, %v615
      %v621 = vmul.f32 1.0, %v620
      %v622 = vadd.f32 %v465, %v586
      %v623 = vxor.u32 %v622, 2147483648
      %v624 = vmul.f32 %v623, 1.442695
      %v625 = vpow.pop %v624
      %v626 = vadd.f32 %v625, 1.0
      %v627 = vrcp.pop %v626
      %v628 = vmul.f32 %v626, %v627
      %v629 = vsub.f32 1.0, %v628
      %v630 = vmul.f32 %v627, %v629
      %v631 = vadd.f32 %v627, %v630
      %vm632 = vweird.f32 %v626
      %vm633 = vweird.f32 %v627
      %vm634 = vmor %vm632, %vm633
      %v635 = vsel %vm634, %v627, %v631
      %v636 = vand.u32 2147483647, %v626
      %vm637 = vcmp.eq.f32.partialorder %v636, 8.507059e+37
      %v638 = vand.u32 %v626, 2147483648
      %v639 = vor.u32 1.1754944e-38, %v638
      %v640 = vsel %vm637, %v639, %v635
      %v641 = vmul.f32 1.0, %v640
      %v642 = vadd.f32 %v599, %v119
      %v643 = vmul.f32 %v621, %v642
      %v644 = vadd.f32 %v466, %v643
      %v645 = vtanh.pop %v644
      %v646 = vsub.f32 1.0, %v641
      %v647 = vmul.f32 %v646, %v645
      %v648 = vmul.f32 %v641, %v455
      %v649 = vadd.f32 %v647, %v648
      %vm650 = vcmp.gt.s32.totalorder %v125, 1
      %v651 = vsel %vm650, 1, 0
      %652 = vset.pattern.permute.xlu0 0
      %653 = vperm.xlu0 %652, %v651
      %v654 = vpop.permute.xlu0 %653
      %vm655 = vcmp.eq.s32.totalorder %v654, 1
      %v656 = vsel %vm655, %v649, %v455
      %s657 = scalar_lea.vmem [#allocation5], 48
      %v658 = vld [vmem:[%s657] sm:$0xff]
      %v659 = vld [vmem:[%s657 + $0x8] sm:$0xf]
      %v660 = vld [vmem:[%s657 + $0xc] sm:$0xff]
      %v661 = vld [vmem:[%s657 + $0x14] sm:$0xf]
      %v662 = vunpack.c.l.bf16 %v658
      %v663 = vunpack.c.h.bf16 %v658
      %v664 = vunpack.c.l.bf16 %v659
      %v665 = vunpack.c.l.bf16 %v660
      %v666 = vunpack.c.h.bf16 %v660
      %v667 = vunpack.c.l.bf16 %v661
      %v668 = vpack.c.bf16 %v561, %v561
      %669 = vmatpush.bf16.msra.mxu0 %v240
      %670 = vmatpush.bf16.msra.mxu0 %v237
      %671 = vmatpush.bf16.msra.mxu0 %v234
      %672 = vmatpush.bf16.msra.mxu0 %v231
      %673 = vmatpush.bf16.msra.mxu0 %v228
      %674 = vmatpush.bf16.msra.mxu0 %v225
      %675 = vmatpush.bf16.msra.mxu0 %v222
      %676 = vmatpush.bf16.msra.mxu0 %v219
      %677 = vmatmul.bf16.gmra.mxu0 %v668
      %v678 = vpop.f32.mrf.mxu0
      %v679 = vadd.f32 0.0, %v678
      %v680 = vpop.f32.mrf.mxu0
      %681 = vdwg.mxu0
      %682 = vmatpush.bf16.msra.mxu0 %v241
      %683 = vmatpush.bf16.msra.mxu0 %v238
      %684 = vmatpush.bf16.msra.mxu0 %v235
      %685 = vmatpush.bf16.msra.mxu0 %v232
      %686 = vmatpush.bf16.msra.mxu0 %v229
      %687 = vmatpush.bf16.msra.mxu0 %v226
      %688 = vmatpush.bf16.msra.mxu0 %v223
      %689 = vmatpush.bf16.msra.mxu0 %v220
      %690 = vmatmul.bf16.gmra.mxu0 %v668
      %v691 = vpop.f32.mrf.mxu0
      %v692 = vadd.f32 0.0, %v691
      %v693 = vpop.f32.mrf.mxu0
      %694 = vdwg.mxu0
      %695 = vmatpush.bf16.msra.mxu0 %v242
      %696 = vmatpush.bf16.msra.mxu0 %v239
      %697 = vmatpush.bf16.msra.mxu0 %v236
      %698 = vmatpush.bf16.msra.mxu0 %v233
      %699 = vmatpush.bf16.msra.mxu0 %v230
      %700 = vmatpush.bf16.msra.mxu0 %v227
      %701 = vmatpush.bf16.msra.mxu0 %v224
      %702 = vmatpush.bf16.msra.mxu0 %v221
      %703 = vmatmul.bf16.gmra.mxu0 %v668
      %v704 = vpop.f32.mrf.mxu0
      %v705 = vadd.f32 0.0, %v704
      %v706 = vpop.f32.mrf.mxu0
      %707 = vdwg.mxu0
      %v708 = vadd.f32 %v662, %v679
      %v709 = vxor.u32 %v708, 2147483648
      %v710 = vmul.f32 %v709, 1.442695
      %v711 = vpow.pop %v710
      %v712 = vadd.f32 %v711, 1.0
      %v713 = vrcp.pop %v712
      %v714 = vmul.f32 %v712, %v713
      %v715 = vsub.f32 1.0, %v714
      %v716 = vmul.f32 %v713, %v715
      %v717 = vadd.f32 %v713, %v716
      %vm718 = vweird.f32 %v712
      %vm719 = vweird.f32 %v713
      %vm720 = vmor %vm718, %vm719
      %v721 = vsel %vm720, %v713, %v717
      %v722 = vand.u32 2147483647, %v712
      %vm723 = vcmp.eq.f32.partialorder %v722, 8.507059e+37
      %v724 = vand.u32 %v712, 2147483648
      %v725 = vor.u32 1.1754944e-38, %v724
      %v726 = vsel %vm723, %v725, %v721
      %v727 = vmul.f32 1.0, %v726
      %v728 = vadd.f32 %v663, %v692
      %v729 = vxor.u32 %v728, 2147483648
      %v730 = vmul.f32 %v729, 1.442695
      %v731 = vpow.pop %v730
      %v732 = vadd.f32 %v731, 1.0
      %v733 = vrcp.pop %v732
      %v734 = vmul.f32 %v732, %v733
      %v735 = vsub.f32 1.0, %v734
      %v736 = vmul.f32 %v733, %v735
      %v737 = vadd.f32 %v733, %v736
      %vm738 = vweird.f32 %v732
      %vm739 = vweird.f32 %v733
      %vm740 = vmor %vm738, %vm739
      %v741 = vsel %vm740, %v733, %v737
      %v742 = vand.u32 2147483647, %v732
      %vm743 = vcmp.eq.f32.partialorder %v742, 8.507059e+37
      %v744 = vand.u32 %v732, 2147483648
      %v745 = vor.u32 1.1754944e-38, %v744
      %v746 = vsel %vm743, %v745, %v741
      %v747 = vmul.f32 1.0, %v746
      %v748 = vadd.f32 %v705, %v119
      %v749 = vmul.f32 %v727, %v748
      %v750 = vadd.f32 %v664, %v749
      %v751 = vtanh.pop %v750
      %v752 = vsub.f32 1.0, %v747
      %v753 = vmul.f32 %v752, %v751
      %v754 = vmul.f32 %v747, %v561
      %v755 = vadd.f32 %v753, %v754
      %vm756 = vcmp.gt.s32.totalorder %v124, 2
      %v757 = vsel %vm756, 1, 0
      %758 = vset.pattern.permute.xlu0 0
      %759 = vperm.xlu0 %758, %v757
      %v760 = vpop.permute.xlu0 %759
      %vm761 = vcmp.eq.s32.totalorder %v760, 1
      %v762 = vsel %vm761, %v755, %v561
      %v763 = vpack.c.bf16 %v656, %v656
      %764 = vmatpush.bf16.msra.mxu0 %v240
      %765 = vmatpush.bf16.msra.mxu0 %v237
      %766 = vmatpush.bf16.msra.mxu0 %v234
      %767 = vmatpush.bf16.msra.mxu0 %v231
      %768 = vmatpush.bf16.msra.mxu0 %v228
      %769 = vmatpush.bf16.msra.mxu0 %v225
      %770 = vmatpush.bf16.msra.mxu0 %v222
      %771 = vmatpush.bf16.msra.mxu0 %v219
      %772 = vmatmul.bf16.gmra.mxu0 %v763
      %v773 = vpop.f32.mrf.mxu0
      %v774 = vadd.f32 0.0, %v773
      %v775 = vpop.f32.mrf.mxu0
      %776 = vdwg.mxu0
      %777 = vmatpush.bf16.msra.mxu0 %v241
      %778 = vmatpush.bf16.msra.mxu0 %v238
      %779 = vmatpush.bf16.msra.mxu0 %v235
      %780 = vmatpush.bf16.msra.mxu0 %v232
      %781 = vmatpush.bf16.msra.mxu0 %v229
      %782 = vmatpush.bf16.msra.mxu0 %v226
      %783 = vmatpush.bf16.msra.mxu0 %v223
      %784 = vmatpush.bf16.msra.mxu0 %v220
      %785 = vmatmul.bf16.gmra.mxu0 %v763
      %v786 = vpop.f32.mrf.mxu0
      %v787 = vadd.f32 0.0, %v786
      %v788 = vpop.f32.mrf.mxu0
      %789 = vdwg.mxu0
      %790 = vmatpush.bf16.msra.mxu0 %v242
      %791 = vmatpush.bf16.msra.mxu0 %v239
      %792 = vmatpush.bf16.msra.mxu0 %v236
      %793 = vmatpush.bf16.msra.mxu0 %v233
      %794 = vmatpush.bf16.msra.mxu0 %v230
      %795 = vmatpush.bf16.msra.mxu0 %v227
      %796 = vmatpush.bf16.msra.mxu0 %v224
      %797 = vmatpush.bf16.msra.mxu0 %v221
      %798 = vmatmul.bf16.gmra.mxu0 %v763
      %v799 = vpop.f32.mrf.mxu0
      %v800 = vadd.f32 0.0, %v799
      %v801 = vpop.f32.mrf.mxu0
      %802 = vdwg.mxu0
      %v803 = vadd.f32 %v665, %v774
      %v804 = vxor.u32 %v803, 2147483648
      %v805 = vmul.f32 %v804, 1.442695
      %v806 = vpow.pop %v805
      %v807 = vadd.f32 %v806, 1.0
      %v808 = vrcp.pop %v807
      %v809 = vmul.f32 %v807, %v808
      %v810 = vsub.f32 1.0, %v809
      %v811 = vmul.f32 %v808, %v810
      %v812 = vadd.f32 %v808, %v811
      %vm813 = vweird.f32 %v807
      %vm814 = vweird.f32 %v808
      %vm815 = vmor %vm813, %vm814
      %v816 = vsel %vm815, %v808, %v812
      %v817 = vand.u32 2147483647, %v807
      %vm818 = vcmp.eq.f32.partialorder %v817, 8.507059e+37
      %v819 = vand.u32 %v807, 2147483648
      %v820 = vor.u32 1.1754944e-38, %v819
      %v821 = vsel %vm818, %v820, %v816
      %v822 = vmul.f32 1.0, %v821
      %v823 = vadd.f32 %v666, %v787
      %v824 = vxor.u32 %v823, 2147483648
      %v825 = vmul.f32 %v824, 1.442695
      %v826 = vpow.pop %v825
      %v827 = vadd.f32 %v826, 1.0
      %v828 = vrcp.pop %v827
      %v829 = vmul.f32 %v827, %v828
      %v830 = vsub.f32 1.0, %v829
      %v831 = vmul.f32 %v828, %v830
      %v832 = vadd.f32 %v828, %v831
      %vm833 = vweird.f32 %v827
      %vm834 = vweird.f32 %v828
      %vm835 = vmor %vm833, %vm834
      %v836 = vsel %vm835, %v828, %v832
      %v837 = vand.u32 2147483647, %v827
      %vm838 = vcmp.eq.f32.partialorder %v837, 8.507059e+37
      %v839 = vand.u32 %v827, 2147483648
      %v840 = vor.u32 1.1754944e-38, %v839
      %v841 = vsel %vm838, %v840, %v836
      %v842 = vmul.f32 1.0, %v841
      %v843 = vadd.f32 %v800, %v119
      %v844 = vmul.f32 %v822, %v843
      %v845 = vadd.f32 %v667, %v844
      %v846 = vtanh.pop %v845
      %v847 = vsub.f32 1.0, %v842
      %v848 = vmul.f32 %v847, %v846
      %v849 = vmul.f32 %v842, %v656
      %v850 = vadd.f32 %v848, %v849
      %vm851 = vcmp.gt.s32.totalorder %v125, 2
      %v852 = vsel %vm851, 1, 0
      %853 = vset.pattern.permute.xlu0 0
      %854 = vperm.xlu0 %853, %v852
      %v855 = vpop.permute.xlu0 %854
      %vm856 = vcmp.eq.s32.totalorder %v855, 1
      %v857 = vsel %vm856, %v850, %v656
      %s858 = scalar_lea.vmem [#allocation5], 72
      %v859 = vld [vmem:[%s858] sm:$0xff]
      %v860 = vld [vmem:[%s858 + $0x8] sm:$0xf]
      %v861 = vld [vmem:[%s858 + $0xc] sm:$0xff]
      %v862 = vld [vmem:[%s858 + $0x14] sm:$0xf]
      %v863 = vunpack.c.l.bf16 %v859
      %v864 = vunpack.c.h.bf16 %v859
      %v865 = vunpack.c.l.bf16 %v860
      %v866 = vunpack.c.l.bf16 %v861
      %v867 = vunpack.c.h.bf16 %v861
      %v868 = vunpack.c.l.bf16 %v862
      %v869 = vpack.c.bf16 %v762, %v762
      %870 = vmatpush.bf16.msra.mxu0 %v240
      %871 = vmatpush.bf16.msra.mxu0 %v237
      %872 = vmatpush.bf16.msra.mxu0 %v234
      %873 = vmatpush.bf16.msra.mxu0 %v231
      %874 = vmatpush.bf16.msra.mxu0 %v228
      %875 = vmatpush.bf16.msra.mxu0 %v225
      %876 = vmatpush.bf16.msra.mxu0 %v222
      %877 = vmatpush.bf16.msra.mxu0 %v219
      %878 = vmatmul.bf16.gmra.mxu0 %v869
      %v879 = vpop.f32.mrf.mxu0
      %v880 = vadd.f32 0.0, %v879
      %v881 = vpop.f32.mrf.mxu0
      %882 = vdwg.mxu0
      %883 = vmatpush.bf16.msra.mxu0 %v241
      %884 = vmatpush.bf16.msra.mxu0 %v238
      %885 = vmatpush.bf16.msra.mxu0 %v235
      %886 = vmatpush.bf16.msra.mxu0 %v232
      %887 = vmatpush.bf16.msra.mxu0 %v229
      %888 = vmatpush.bf16.msra.mxu0 %v226
      %889 = vmatpush.bf16.msra.mxu0 %v223
      %890 = vmatpush.bf16.msra.mxu0 %v220
      %891 = vmatmul.bf16.gmra.mxu0 %v869
      %v892 = vpop.f32.mrf.mxu0
      %v893 = vadd.f32 0.0, %v892
      %v894 = vpop.f32.mrf.mxu0
      %895 = vdwg.mxu0
      %896 = vmatpush.bf16.msra.mxu0 %v242
      %897 = vmatpush.bf16.msra.mxu0 %v239
      %898 = vmatpush.bf16.msra.mxu0 %v236
      %899 = vmatpush.bf16.msra.mxu0 %v233
      %900 = vmatpush.bf16.msra.mxu0 %v230
      %901 = vmatpush.bf16.msra.mxu0 %v227
      %902 = vmatpush.bf16.msra.mxu0 %v224
      %903 = vmatpush.bf16.msra.mxu0 %v221
      %904 = vmatmul.bf16.gmra.mxu0 %v869
      %v905 = vpop.f32.mrf.mxu0
      %v906 = vadd.f32 0.0, %v905
      %v907 = vpop.f32.mrf.mxu0
      %908 = vdwg.mxu0
      %v909 = vadd.f32 %v863, %v880
      %v910 = vxor.u32 %v909, 2147483648
      %v911 = vmul.f32 %v910, 1.442695
      %v912 = vpow.pop %v911
      %v913 = vadd.f32 %v912, 1.0
      %v914 = vrcp.pop %v913
      %v915 = vmul.f32 %v913, %v914
      %v916 = vsub.f32 1.0, %v915
      %v917 = vmul.f32 %v914, %v916
      %v918 = vadd.f32 %v914, %v917
      %vm919 = vweird.f32 %v913
      %vm920 = vweird.f32 %v914
      %vm921 = vmor %vm919, %vm920
      %v922 = vsel %vm921, %v914, %v918
      %v923 = vand.u32 2147483647, %v913
      %vm924 = vcmp.eq.f32.partialorder %v923, 8.507059e+37
      %v925 = vand.u32 %v913, 2147483648
      %v926 = vor.u32 1.1754944e-38, %v925
      %v927 = vsel %vm924, %v926, %v922
      %v928 = vmul.f32 1.0, %v927
      %v929 = vadd.f32 %v864, %v893
      %v930 = vxor.u32 %v929, 2147483648
      %v931 = vmul.f32 %v930, 1.442695
      %v932 = vpow.pop %v931
      %v933 = vadd.f32 %v932, 1.0
      %v934 = vrcp.pop %v933
      %v935 = vmul.f32 %v933, %v934
      %v936 = vsub.f32 1.0, %v935
      %v937 = vmul.f32 %v934, %v936
      %v938 = vadd.f32 %v934, %v937
      %vm939 = vweird.f32 %v933
      %vm940 = vweird.f32 %v934
      %vm941 = vmor %vm939, %vm940
      %v942 = vsel %vm941, %v934, %v938
      %v943 = vand.u32 2147483647, %v933
      %vm944 = vcmp.eq.f32.partialorder %v943, 8.507059e+37
      %v945 = vand.u32 %v933, 2147483648
      %v946 = vor.u32 1.1754944e-38, %v945
      %v947 = vsel %vm944, %v946, %v942
      %v948 = vmul.f32 1.0, %v947
      %v949 = vadd.f32 %v906, %v119
      %v950 = vmul.f32 %v928, %v949
      %v951 = vadd.f32 %v865, %v950
      %v952 = vtanh.pop %v951
      %v953 = vsub.f32 1.0, %v948
      %v954 = vmul.f32 %v953, %v952
      %v955 = vmul.f32 %v948, %v762
      %v956 = vadd.f32 %v954, %v955
      %vm957 = vcmp.gt.s32.totalorder %v124, 3
      %v958 = vsel %vm957, 1, 0
      %959 = vset.pattern.permute.xlu0 0
      %960 = vperm.xlu0 %959, %v958
      %v961 = vpop.permute.xlu0 %960
      %vm962 = vcmp.eq.s32.totalorder %v961, 1
      %v963 = vsel %vm962, %v956, %v762
      %v964 = vpack.c.bf16 %v857, %v857
      %965 = vmatpush.bf16.msra.mxu0 %v240
      %966 = vmatpush.bf16.msra.mxu0 %v237
      %967 = vmatpush.bf16.msra.mxu0 %v234
      %968 = vmatpush.bf16.msra.mxu0 %v231
      %969 = vmatpush.bf16.msra.mxu0 %v228
      %970 = vmatpush.bf16.msra.mxu0 %v225
      %971 = vmatpush.bf16.msra.mxu0 %v222
      %972 = vmatpush.bf16.msra.mxu0 %v219
      %973 = vmatmul.bf16.gmra.mxu0 %v964
      %v974 = vpop.f32.mrf.mxu0
      %v975 = vadd.f32 0.0, %v974
      %v976 = vpop.f32.mrf.mxu0
      %977 = vdwg.mxu0
      %978 = vmatpush.bf16.msra.mxu0 %v241
      %979 = vmatpush.bf16.msra.mxu0 %v238
      %980 = vmatpush.bf16.msra.mxu0 %v235
      %981 = vmatpush.bf16.msra.mxu0 %v232
      %982 = vmatpush.bf16.msra.mxu0 %v229
      %983 = vmatpush.bf16.msra.mxu0 %v226
      %984 = vmatpush.bf16.msra.mxu0 %v223
      %985 = vmatpush.bf16.msra.mxu0 %v220
      %986 = vmatmul.bf16.gmra.mxu0 %v964
      %v987 = vpop.f32.mrf.mxu0
      %v988 = vadd.f32 0.0, %v987
      %v989 = vpop.f32.mrf.mxu0
      %990 = vdwg.mxu0
      %991 = vmatpush.bf16.msra.mxu0 %v242
      %992 = vmatpush.bf16.msra.mxu0 %v239
      %993 = vmatpush.bf16.msra.mxu0 %v236
      %994 = vmatpush.bf16.msra.mxu0 %v233
      %995 = vmatpush.bf16.msra.mxu0 %v230
      %996 = vmatpush.bf16.msra.mxu0 %v227
      %997 = vmatpush.bf16.msra.mxu0 %v224
      %998 = vmatpush.bf16.msra.mxu0 %v221
      %999 = vmatmul.bf16.gmra.mxu0 %v964
      %v1000 = vpop.f32.mrf.mxu0
      %v1001 = vadd.f32 0.0, %v1000
      %v1002 = vpop.f32.mrf.mxu0
      %1003 = vdwg.mxu0
      %v1004 = vadd.f32 %v866, %v975
      %v1005 = vxor.u32 %v1004, 2147483648
      %v1006 = vmul.f32 %v1005, 1.442695
      %v1007 = vpow.pop %v1006
      %v1008 = vadd.f32 %v1007, 1.0
      %v1009 = vrcp.pop %v1008
      %v1010 = vmul.f32 %v1008, %v1009
      %v1011 = vsub.f32 1.0, %v1010
      %v1012 = vmul.f32 %v1009, %v1011
      %v1013 = vadd.f32 %v1009, %v1012
      %vm1014 = vweird.f32 %v1008
      %vm1015 = vweird.f32 %v1009
      %vm1016 = vmor %vm1014, %vm1015
      %v1017 = vsel %vm1016, %v1009, %v1013
      %v1018 = vand.u32 2147483647, %v1008
      %vm1019 = vcmp.eq.f32.partialorder %v1018, 8.507059e+37
      %v1020 = vand.u32 %v1008, 2147483648
      %v1021 = vor.u32 1.1754944e-38, %v1020
      %v1022 = vsel %vm1019, %v1021, %v1017
      %v1023 = vmul.f32 1.0, %v1022
      %v1024 = vadd.f32 %v867, %v988
      %v1025 = vxor.u32 %v1024, 2147483648
      %v1026 = vmul.f32 %v1025, 1.442695
      %v1027 = vpow.pop %v1026
      %v1028 = vadd.f32 %v1027, 1.0
      %v1029 = vrcp.pop %v1028
      %v1030 = vmul.f32 %v1028, %v1029
      %v1031 = vsub.f32 1.0, %v1030
      %v1032 = vmul.f32 %v1029, %v1031
      %v1033 = vadd.f32 %v1029, %v1032
      %vm1034 = vweird.f32 %v1028
      %vm1035 = vweird.f32 %v1029
      %vm1036 = vmor %vm1034, %vm1035
      %v1037 = vsel %vm1036, %v1029, %v1033
      %v1038 = vand.u32 2147483647, %v1028
      %vm1039 = vcmp.eq.f32.partialorder %v1038, 8.507059e+37
      %v1040 = vand.u32 %v1028, 2147483648
      %v1041 = vor.u32 1.1754944e-38, %v1040
      %v1042 = vsel %vm1039, %v1041, %v1037
      %v1043 = vmul.f32 1.0, %v1042
      %v1044 = vadd.f32 %v1001, %v119
      %v1045 = vmul.f32 %v1023, %v1044
      %v1046 = vadd.f32 %v868, %v1045
      %v1047 = vtanh.pop %v1046
      %v1048 = vsub.f32 1.0, %v1043
      %v1049 = vmul.f32 %v1048, %v1047
      %v1050 = vmul.f32 %v1043, %v857
      %v1051 = vadd.f32 %v1049, %v1050
      %vm1052 = vcmp.gt.s32.totalorder %v125, 3
      %v1053 = vsel %vm1052, 1, 0
      %1054 = vset.pattern.permute.xlu0 0
      %1055 = vperm.xlu0 %1054, %v1053
      %v1056 = vpop.permute.xlu0 %1055
      %vm1057 = vcmp.eq.s32.totalorder %v1056, 1
      %v1058 = vsel %vm1057, %v1051, %v857
      %s1059 = scalar_lea.vmem [#allocation5], 96
      %v1060 = vld [vmem:[%s1059] sm:$0xff]
      %v1061 = vld [vmem:[%s1059 + $0x8] sm:$0xf]
      %v1062 = vld [vmem:[%s1059 + $0xc] sm:$0xff]
      %v1063 = vld [vmem:[%s1059 + $0x14] sm:$0xf]
      %v1064 = vunpack.c.l.bf16 %v1060
      %v1065 = vunpack.c.h.bf16 %v1060
      %v1066 = vunpack.c.l.bf16 %v1061
      %v1067 = vunpack.c.l.bf16 %v1062
      %v1068 = vunpack.c.h.bf16 %v1062
      %v1069 = vunpack.c.l.bf16 %v1063
      %v1070 = vpack.c.bf16 %v963, %v963
      %1071 = vmatpush.bf16.msra.mxu0 %v240
      %1072 = vmatpush.bf16.msra.mxu0 %v237
      %1073 = vmatpush.bf16.msra.mxu0 %v234
      %1074 = vmatpush.bf16.msra.mxu0 %v231
      %1075 = vmatpush.bf16.msra.mxu0 %v228
      %1076 = vmatpush.bf16.msra.mxu0 %v225
      %1077 = vmatpush.bf16.msra.mxu0 %v222
      %1078 = vmatpush.bf16.msra.mxu0 %v219
      %1079 = vmatmul.bf16.gmra.mxu0 %v1070
      %v1080 = vpop.f32.mrf.mxu0
      %v1081 = vadd.f32 0.0, %v1080
      %v1082 = vpop.f32.mrf.mxu0
      %1083 = vdwg.mxu0
      %1084 = vmatpush.bf16.msra.mxu0 %v241
      %1085 = vmatpush.bf16.msra.mxu0 %v238
      %1086 = vmatpush.bf16.msra.mxu0 %v235
      %1087 = vmatpush.bf16.msra.mxu0 %v232
      %1088 = vmatpush.bf16.msra.mxu0 %v229
      %1089 = vmatpush.bf16.msra.mxu0 %v226
      %1090 = vmatpush.bf16.msra.mxu0 %v223
      %1091 = vmatpush.bf16.msra.mxu0 %v220
      %1092 = vmatmul.bf16.gmra.mxu0 %v1070
      %v1093 = vpop.f32.mrf.mxu0
      %v1094 = vadd.f32 0.0, %v1093
      %v1095 = vpop.f32.mrf.mxu0
      %1096 = vdwg.mxu0
      %1097 = vmatpush.bf16.msra.mxu0 %v242
      %1098 = vmatpush.bf16.msra.mxu0 %v239
      %1099 = vmatpush.bf16.msra.mxu0 %v236
      %1100 = vmatpush.bf16.msra.mxu0 %v233
      %1101 = vmatpush.bf16.msra.mxu0 %v230
      %1102 = vmatpush.bf16.msra.mxu0 %v227
      %1103 = vmatpush.bf16.msra.mxu0 %v224
      %1104 = vmatpush.bf16.msra.mxu0 %v221
      %1105 = vmatmul.bf16.gmra.mxu0 %v1070
      %v1106 = vpop.f32.mrf.mxu0
      %v1107 = vadd.f32 0.0, %v1106
      %v1108 = vpop.f32.mrf.mxu0
      %1109 = vdwg.mxu0
      %v1110 = vadd.f32 %v1064, %v1081
      %v1111 = vxor.u32 %v1110, 2147483648
      %v1112 = vmul.f32 %v1111, 1.442695
      %v1113 = vpow.pop %v1112
      %v1114 = vadd.f32 %v1113, 1.0
      %v1115 = vrcp.pop %v1114
      %v1116 = vmul.f32 %v1114, %v1115
      %v1117 = vsub.f32 1.0, %v1116
      %v1118 = vmul.f32 %v1115, %v1117
      %v1119 = vadd.f32 %v1115, %v1118
      %vm1120 = vweird.f32 %v1114
      %vm1121 = vweird.f32 %v1115
      %vm1122 = vmor %vm1120, %vm1121
      %v1123 = vsel %vm1122, %v1115, %v1119
      %v1124 = vand.u32 2147483647, %v1114
      %vm1125 = vcmp.eq.f32.partialorder %v1124, 8.507059e+37
      %v1126 = vand.u32 %v1114, 2147483648
      %v1127 = vor.u32 1.1754944e-38, %v1126
      %v1128 = vsel %vm1125, %v1127, %v1123
      %v1129 = vmul.f32 1.0, %v1128
      %v1130 = vadd.f32 %v1065, %v1094
      %v1131 = vxor.u32 %v1130, 2147483648
      %v1132 = vmul.f32 %v1131, 1.442695
      %v1133 = vpow.pop %v1132
      %v1134 = vadd.f32 %v1133, 1.0
      %v1135 = vrcp.pop %v1134
      %v1136 = vmul.f32 %v1134, %v1135
      %v1137 = vsub.f32 1.0, %v1136
      %v1138 = vmul.f32 %v1135, %v1137
      %v1139 = vadd.f32 %v1135, %v1138
      %vm1140 = vweird.f32 %v1134
      %vm1141 = vweird.f32 %v1135
      %vm1142 = vmor %vm1140, %vm1141
      %v1143 = vsel %vm1142, %v1135, %v1139
      %v1144 = vand.u32 2147483647, %v1134
      %vm1145 = vcmp.eq.f32.partialorder %v1144, 8.507059e+37
      %v1146 = vand.u32 %v1134, 2147483648
      %v1147 = vor.u32 1.1754944e-38, %v1146
      %v1148 = vsel %vm1145, %v1147, %v1143
      %v1149 = vmul.f32 1.0, %v1148
      %v1150 = vadd.f32 %v1107, %v119
      %v1151 = vmul.f32 %v1129, %v1150
      %v1152 = vadd.f32 %v1066, %v1151
      %v1153 = vtanh.pop %v1152
      %v1154 = vsub.f32 1.0, %v1149
      %v1155 = vmul.f32 %v1154, %v1153
      %v1156 = vmul.f32 %v1149, %v963
      %v1157 = vadd.f32 %v1155, %v1156
      %vm1158 = vcmp.gt.s32.totalorder %v124, 4
      %v1159 = vsel %vm1158, 1, 0
      %1160 = vset.pattern.permute.xlu0 0
      %1161 = vperm.xlu0 %1160, %v1159
      %v1162 = vpop.permute.xlu0 %1161
      %vm1163 = vcmp.eq.s32.totalorder %v1162, 1
      %v1164 = vsel %vm1163, %v1157, %v963
      %v1165 = vpack.c.bf16 %v1058, %v1058
      %1166 = vmatpush.bf16.msra.mxu0 %v240
      %1167 = vmatpush.bf16.msra.mxu0 %v237
      %1168 = vmatpush.bf16.msra.mxu0 %v234
      %1169 = vmatpush.bf16.msra.mxu0 %v231
      %1170 = vmatpush.bf16.msra.mxu0 %v228
      %1171 = vmatpush.bf16.msra.mxu0 %v225
      %1172 = vmatpush.bf16.msra.mxu0 %v222
      %1173 = vmatpush.bf16.msra.mxu0 %v219
      %1174 = vmatmul.bf16.gmra.mxu0 %v1165
      %v1175 = vpop.f32.mrf.mxu0
      %v1176 = vadd.f32 0.0, %v1175
      %v1177 = vpop.f32.mrf.mxu0
      %1178 = vdwg.mxu0
      %1179 = vmatpush.bf16.msra.mxu0 %v241
      %1180 = vmatpush.bf16.msra.mxu0 %v238
      %1181 = vmatpush.bf16.msra.mxu0 %v235
      %1182 = vmatpush.bf16.msra.mxu0 %v232
      %1183 = vmatpush.bf16.msra.mxu0 %v229
      %1184 = vmatpush.bf16.msra.mxu0 %v226
      %1185 = vmatpush.bf16.msra.mxu0 %v223
      %1186 = vmatpush.bf16.msra.mxu0 %v220
      %1187 = vmatmul.bf16.gmra.mxu0 %v1165
      %v1188 = vpop.f32.mrf.mxu0
      %v1189 = vadd.f32 0.0, %v1188
      %v1190 = vpop.f32.mrf.mxu0
      %1191 = vdwg.mxu0
      %1192 = vmatpush.bf16.msra.mxu0 %v242
      %1193 = vmatpush.bf16.msra.mxu0 %v239
      %1194 = vmatpush.bf16.msra.mxu0 %v236
      %1195 = vmatpush.bf16.msra.mxu0 %v233
      %1196 = vmatpush.bf16.msra.mxu0 %v230
      %1197 = vmatpush.bf16.msra.mxu0 %v227
      %1198 = vmatpush.bf16.msra.mxu0 %v224
      %1199 = vmatpush.bf16.msra.mxu0 %v221
      %1200 = vmatmul.bf16.gmra.mxu0 %v1165
      %v1201 = vpop.f32.mrf.mxu0
      %v1202 = vadd.f32 0.0, %v1201
      %v1203 = vpop.f32.mrf.mxu0
      %1204 = vdwg.mxu0
      %v1205 = vadd.f32 %v1067, %v1176
      %v1206 = vxor.u32 %v1205, 2147483648
      %v1207 = vmul.f32 %v1206, 1.442695
      %v1208 = vpow.pop %v1207
      %v1209 = vadd.f32 %v1208, 1.0
      %v1210 = vrcp.pop %v1209
      %v1211 = vmul.f32 %v1209, %v1210
      %v1212 = vsub.f32 1.0, %v1211
      %v1213 = vmul.f32 %v1210, %v1212
      %v1214 = vadd.f32 %v1210, %v1213
      %vm1215 = vweird.f32 %v1209
      %vm1216 = vweird.f32 %v1210
      %vm1217 = vmor %vm1215, %vm1216
      %v1218 = vsel %vm1217, %v1210, %v1214
      %v1219 = vand.u32 2147483647, %v1209
      %vm1220 = vcmp.eq.f32.partialorder %v1219, 8.507059e+37
      %v1221 = vand.u32 %v1209, 2147483648
      %v1222 = vor.u32 1.1754944e-38, %v1221
      %v1223 = vsel %vm1220, %v1222, %v1218
      %v1224 = vmul.f32 1.0, %v1223
      %v1225 = vadd.f32 %v1068, %v1189
      %v1226 = vxor.u32 %v1225, 2147483648
      %v1227 = vmul.f32 %v1226, 1.442695
      %v1228 = vpow.pop %v1227
      %v1229 = vadd.f32 %v1228, 1.0
      %v1230 = vrcp.pop %v1229
      %v1231 = vmul.f32 %v1229, %v1230
      %v1232 = vsub.f32 1.0, %v1231
      %v1233 = vmul.f32 %v1230, %v1232
      %v1234 = vadd.f32 %v1230, %v1233
      %vm1235 = vweird.f32 %v1229
      %vm1236 = vweird.f32 %v1230
      %vm1237 = vmor %vm1235, %vm1236
      %v1238 = vsel %vm1237, %v1230, %v1234
      %v1239 = vand.u32 2147483647, %v1229
      %vm1240 = vcmp.eq.f32.partialorder %v1239, 8.507059e+37
      %v1241 = vand.u32 %v1229, 2147483648
      %v1242 = vor.u32 1.1754944e-38, %v1241
      %v1243 = vsel %vm1240, %v1242, %v1238
      %v1244 = vmul.f32 1.0, %v1243
      %v1245 = vadd.f32 %v1202, %v119
      %v1246 = vmul.f32 %v1224, %v1245
      %v1247 = vadd.f32 %v1069, %v1246
      %v1248 = vtanh.pop %v1247
      %v1249 = vsub.f32 1.0, %v1244
      %v1250 = vmul.f32 %v1249, %v1248
      %v1251 = vmul.f32 %v1244, %v1058
      %v1252 = vadd.f32 %v1250, %v1251
      %vm1253 = vcmp.gt.s32.totalorder %v125, 4
      %v1254 = vsel %vm1253, 1, 0
      %1255 = vset.pattern.permute.xlu0 0
      %1256 = vperm.xlu0 %1255, %v1254
      %v1257 = vpop.permute.xlu0 %1256
      %vm1258 = vcmp.eq.s32.totalorder %v1257, 1
      %v1259 = vsel %vm1258, %v1252, %v1058
      %s1260 = scalar_lea.vmem [#allocation5], 120
      %v1261 = vld [vmem:[%s1260] sm:$0xff]
      %v1262 = vld [vmem:[%s1260 + $0x8] sm:$0xf]
      %v1263 = vld [vmem:[%s1260 + $0xc] sm:$0xff]
      %v1264 = vld [vmem:[%s1260 + $0x14] sm:$0xf]
      %v1265 = vunpack.c.l.bf16 %v1261
      %v1266 = vunpack.c.h.bf16 %v1261
      %v1267 = vunpack.c.l.bf16 %v1262
      %v1268 = vunpack.c.l.bf16 %v1263
      %v1269 = vunpack.c.h.bf16 %v1263
      %v1270 = vunpack.c.l.bf16 %v1264
      %v1271 = vpack.c.bf16 %v1164, %v1164
      %1272 = vmatpush.bf16.msra.mxu0 %v240
      %1273 = vmatpush.bf16.msra.mxu0 %v237
      %1274 = vmatpush.bf16.msra.mxu0 %v234
      %1275 = vmatpush.bf16.msra.mxu0 %v231
      %1276 = vmatpush.bf16.msra.mxu0 %v228
      %1277 = vmatpush.bf16.msra.mxu0 %v225
      %1278 = vmatpush.bf16.msra.mxu0 %v222
      %1279 = vmatpush.bf16.msra.mxu0 %v219
      %1280 = vmatmul.bf16.gmra.mxu0 %v1271
      %v1281 = vpop.f32.mrf.mxu0
      %v1282 = vadd.f32 0.0, %v1281
      %v1283 = vpop.f32.mrf.mxu0
      %1284 = vdwg.mxu0
      %1285 = vmatpush.bf16.msra.mxu0 %v241
      %1286 = vmatpush.bf16.msra.mxu0 %v238
      %1287 = vmatpush.bf16.msra.mxu0 %v235
      %1288 = vmatpush.bf16.msra.mxu0 %v232
      %1289 = vmatpush.bf16.msra.mxu0 %v229
      %1290 = vmatpush.bf16.msra.mxu0 %v226
      %1291 = vmatpush.bf16.msra.mxu0 %v223
      %1292 = vmatpush.bf16.msra.mxu0 %v220
      %1293 = vmatmul.bf16.gmra.mxu0 %v1271
      %v1294 = vpop.f32.mrf.mxu0
      %v1295 = vadd.f32 0.0, %v1294
      %v1296 = vpop.f32.mrf.mxu0
      %1297 = vdwg.mxu0
      %1298 = vmatpush.bf16.msra.mxu0 %v242
      %1299 = vmatpush.bf16.msra.mxu0 %v239
      %1300 = vmatpush.bf16.msra.mxu0 %v236
      %1301 = vmatpush.bf16.msra.mxu0 %v233
      %1302 = vmatpush.bf16.msra.mxu0 %v230
      %1303 = vmatpush.bf16.msra.mxu0 %v227
      %1304 = vmatpush.bf16.msra.mxu0 %v224
      %1305 = vmatpush.bf16.msra.mxu0 %v221
      %1306 = vmatmul.bf16.gmra.mxu0 %v1271
      %v1307 = vpop.f32.mrf.mxu0
      %v1308 = vadd.f32 0.0, %v1307
      %v1309 = vpop.f32.mrf.mxu0
      %1310 = vdwg.mxu0
      %v1311 = vadd.f32 %v1265, %v1282
      %v1312 = vxor.u32 %v1311, 2147483648
      %v1313 = vmul.f32 %v1312, 1.442695
      %v1314 = vpow.pop %v1313
      %v1315 = vadd.f32 %v1314, 1.0
      %v1316 = vrcp.pop %v1315
      %v1317 = vmul.f32 %v1315, %v1316
      %v1318 = vsub.f32 1.0, %v1317
      %v1319 = vmul.f32 %v1316, %v1318
      %v1320 = vadd.f32 %v1316, %v1319
      %vm1321 = vweird.f32 %v1315
      %vm1322 = vweird.f32 %v1316
      %vm1323 = vmor %vm1321, %vm1322
      %v1324 = vsel %vm1323, %v1316, %v1320
      %v1325 = vand.u32 2147483647, %v1315
      %vm1326 = vcmp.eq.f32.partialorder %v1325, 8.507059e+37
      %v1327 = vand.u32 %v1315, 2147483648
      %v1328 = vor.u32 1.1754944e-38, %v1327
      %v1329 = vsel %vm1326, %v1328, %v1324
      %v1330 = vmul.f32 1.0, %v1329
      %v1331 = vadd.f32 %v1266, %v1295
      %v1332 = vxor.u32 %v1331, 2147483648
      %v1333 = vmul.f32 %v1332, 1.442695
      %v1334 = vpow.pop %v1333
      %v1335 = vadd.f32 %v1334, 1.0
      %v1336 = vrcp.pop %v1335
      %v1337 = vmul.f32 %v1335, %v1336
      %v1338 = vsub.f32 1.0, %v1337
      %v1339 = vmul.f32 %v1336, %v1338
      %v1340 = vadd.f32 %v1336, %v1339
      %vm1341 = vweird.f32 %v1335
      %vm1342 = vweird.f32 %v1336
      %vm1343 = vmor %vm1341, %vm1342
      %v1344 = vsel %vm1343, %v1336, %v1340
      %v1345 = vand.u32 2147483647, %v1335
      %vm1346 = vcmp.eq.f32.partialorder %v1345, 8.507059e+37
      %v1347 = vand.u32 %v1335, 2147483648
      %v1348 = vor.u32 1.1754944e-38, %v1347
      %v1349 = vsel %vm1346, %v1348, %v1344
      %v1350 = vmul.f32 1.0, %v1349
      %v1351 = vadd.f32 %v1308, %v119
      %v1352 = vmul.f32 %v1330, %v1351
      %v1353 = vadd.f32 %v1267, %v1352
      %v1354 = vtanh.pop %v1353
      %v1355 = vsub.f32 1.0, %v1350
      %v1356 = vmul.f32 %v1355, %v1354
      %v1357 = vmul.f32 %v1350, %v1164
      %v1358 = vadd.f32 %v1356, %v1357
      %vm1359 = vcmp.gt.s32.totalorder %v124, 5
      %v1360 = vsel %vm1359, 1, 0
      %1361 = vset.pattern.permute.xlu0 0
      %1362 = vperm.xlu0 %1361, %v1360
      %v1363 = vpop.permute.xlu0 %1362
      %vm1364 = vcmp.eq.s32.totalorder %v1363, 1
      %v1365 = vsel %vm1364, %v1358, %v1164
      %v1366 = vpack.c.bf16 %v1259, %v1259
      %1367 = vmatpush.bf16.msra.mxu0 %v240
      %1368 = vmatpush.bf16.msra.mxu0 %v237
      %1369 = vmatpush.bf16.msra.mxu0 %v234
      %1370 = vmatpush.bf16.msra.mxu0 %v231
      %1371 = vmatpush.bf16.msra.mxu0 %v228
      %1372 = vmatpush.bf16.msra.mxu0 %v225
      %1373 = vmatpush.bf16.msra.mxu0 %v222
      %1374 = vmatpush.bf16.msra.mxu0 %v219
      %1375 = vmatmul.bf16.gmra.mxu0 %v1366
      %v1376 = vpop.f32.mrf.mxu0
      %v1377 = vadd.f32 0.0, %v1376
      %v1378 = vpop.f32.mrf.mxu0
      %1379 = vdwg.mxu0
      %1380 = vmatpush.bf16.msra.mxu0 %v241
      %1381 = vmatpush.bf16.msra.mxu0 %v238
      %1382 = vmatpush.bf16.msra.mxu0 %v235
      %1383 = vmatpush.bf16.msra.mxu0 %v232
      %1384 = vmatpush.bf16.msra.mxu0 %v229
      %1385 = vmatpush.bf16.msra.mxu0 %v226
      %1386 = vmatpush.bf16.msra.mxu0 %v223
      %1387 = vmatpush.bf16.msra.mxu0 %v220
      %1388 = vmatmul.bf16.gmra.mxu0 %v1366
      %v1389 = vpop.f32.mrf.mxu0
      %v1390 = vadd.f32 0.0, %v1389
      %v1391 = vpop.f32.mrf.mxu0
      %1392 = vdwg.mxu0
      %1393 = vmatpush.bf16.msra.mxu0 %v242
      %1394 = vmatpush.bf16.msra.mxu0 %v239
      %1395 = vmatpush.bf16.msra.mxu0 %v236
      %1396 = vmatpush.bf16.msra.mxu0 %v233
      %1397 = vmatpush.bf16.msra.mxu0 %v230
      %1398 = vmatpush.bf16.msra.mxu0 %v227
      %1399 = vmatpush.bf16.msra.mxu0 %v224
      %1400 = vmatpush.bf16.msra.mxu0 %v221
      %1401 = vmatmul.bf16.gmra.mxu0 %v1366
      %v1402 = vpop.f32.mrf.mxu0
      %v1403 = vadd.f32 0.0, %v1402
      %v1404 = vpop.f32.mrf.mxu0
      %1405 = vdwg.mxu0
      %v1406 = vadd.f32 %v1268, %v1377
      %v1407 = vxor.u32 %v1406, 2147483648
      %v1408 = vmul.f32 %v1407, 1.442695
      %v1409 = vpow.pop %v1408
      %v1410 = vadd.f32 %v1409, 1.0
      %v1411 = vrcp.pop %v1410
      %v1412 = vmul.f32 %v1410, %v1411
      %v1413 = vsub.f32 1.0, %v1412
      %v1414 = vmul.f32 %v1411, %v1413
      %v1415 = vadd.f32 %v1411, %v1414
      %vm1416 = vweird.f32 %v1410
      %vm1417 = vweird.f32 %v1411
      %vm1418 = vmor %vm1416, %vm1417
      %v1419 = vsel %vm1418, %v1411, %v1415
      %v1420 = vand.u32 2147483647, %v1410
      %vm1421 = vcmp.eq.f32.partialorder %v1420, 8.507059e+37
      %v1422 = vand.u32 %v1410, 2147483648
      %v1423 = vor.u32 1.1754944e-38, %v1422
      %v1424 = vsel %vm1421, %v1423, %v1419
      %v1425 = vmul.f32 1.0, %v1424
      %v1426 = vadd.f32 %v1269, %v1390
      %v1427 = vxor.u32 %v1426, 2147483648
      %v1428 = vmul.f32 %v1427, 1.442695
      %v1429 = vpow.pop %v1428
      %v1430 = vadd.f32 %v1429, 1.0
      %v1431 = vrcp.pop %v1430
      %v1432 = vmul.f32 %v1430, %v1431
      %v1433 = vsub.f32 1.0, %v1432
      %v1434 = vmul.f32 %v1431, %v1433
      %v1435 = vadd.f32 %v1431, %v1434
      %vm1436 = vweird.f32 %v1430
      %vm1437 = vweird.f32 %v1431
      %vm1438 = vmor %vm1436, %vm1437
      %v1439 = vsel %vm1438, %v1431, %v1435
      %v1440 = vand.u32 2147483647, %v1430
      %vm1441 = vcmp.eq.f32.partialorder %v1440, 8.507059e+37
      %v1442 = vand.u32 %v1430, 2147483648
      %v1443 = vor.u32 1.1754944e-38, %v1442
      %v1444 = vsel %vm1441, %v1443, %v1439
      %v1445 = vmul.f32 1.0, %v1444
      %v1446 = vadd.f32 %v1403, %v119
      %v1447 = vmul.f32 %v1425, %v1446
      %v1448 = vadd.f32 %v1270, %v1447
      %v1449 = vtanh.pop %v1448
      %v1450 = vsub.f32 1.0, %v1445
      %v1451 = vmul.f32 %v1450, %v1449
      %v1452 = vmul.f32 %v1445, %v1259
      %v1453 = vadd.f32 %v1451, %v1452
      %vm1454 = vcmp.gt.s32.totalorder %v125, 5
      %v1455 = vsel %vm1454, 1, 0
      %1456 = vset.pattern.permute.xlu0 0
      %1457 = vperm.xlu0 %1456, %v1455
      %v1458 = vpop.permute.xlu0 %1457
      %vm1459 = vcmp.eq.s32.totalorder %v1458, 1
      %v1460 = vsel %vm1459, %v1453, %v1259
      %s1461 = scalar_lea.vmem [#allocation5], 144
      %v1462 = vld [vmem:[%s1461] sm:$0xff]
      %v1463 = vld [vmem:[%s1461 + $0x8] sm:$0xf]
      %v1464 = vld [vmem:[%s1461 + $0xc] sm:$0xff]
      %v1465 = vld [vmem:[%s1461 + $0x14] sm:$0xf]
      %v1466 = vunpack.c.l.bf16 %v1462
      %v1467 = vunpack.c.h.bf16 %v1462
      %v1468 = vunpack.c.l.bf16 %v1463
      %v1469 = vunpack.c.l.bf16 %v1464
      %v1470 = vunpack.c.h.bf16 %v1464
      %v1471 = vunpack.c.l.bf16 %v1465
      %v1472 = vpack.c.bf16 %v1365, %v1365
      %1473 = vmatpush.bf16.msra.mxu0 %v240
      %1474 = vmatpush.bf16.msra.mxu0 %v237
      %1475 = vmatpush.bf16.msra.mxu0 %v234
      %1476 = vmatpush.bf16.msra.mxu0 %v231
      %1477 = vmatpush.bf16.msra.mxu0 %v228
      %1478 = vmatpush.bf16.msra.mxu0 %v225
      %1479 = vmatpush.bf16.msra.mxu0 %v222
      %1480 = vmatpush.bf16.msra.mxu0 %v219
      %1481 = vmatmul.bf16.gmra.mxu0 %v1472
      %v1482 = vpop.f32.mrf.mxu0
      %v1483 = vadd.f32 0.0, %v1482
      %v1484 = vpop.f32.mrf.mxu0
      %1485 = vdwg.mxu0
      %1486 = vmatpush.bf16.msra.mxu0 %v241
      %1487 = vmatpush.bf16.msra.mxu0 %v238
      %1488 = vmatpush.bf16.msra.mxu0 %v235
      %1489 = vmatpush.bf16.msra.mxu0 %v232
      %1490 = vmatpush.bf16.msra.mxu0 %v229
      %1491 = vmatpush.bf16.msra.mxu0 %v226
      %1492 = vmatpush.bf16.msra.mxu0 %v223
      %1493 = vmatpush.bf16.msra.mxu0 %v220
      %1494 = vmatmul.bf16.gmra.mxu0 %v1472
      %v1495 = vpop.f32.mrf.mxu0
      %v1496 = vadd.f32 0.0, %v1495
      %v1497 = vpop.f32.mrf.mxu0
      %1498 = vdwg.mxu0
      %1499 = vmatpush.bf16.msra.mxu0 %v242
      %1500 = vmatpush.bf16.msra.mxu0 %v239
      %1501 = vmatpush.bf16.msra.mxu0 %v236
      %1502 = vmatpush.bf16.msra.mxu0 %v233
      %1503 = vmatpush.bf16.msra.mxu0 %v230
      %1504 = vmatpush.bf16.msra.mxu0 %v227
      %1505 = vmatpush.bf16.msra.mxu0 %v224
      %1506 = vmatpush.bf16.msra.mxu0 %v221
      %1507 = vmatmul.bf16.gmra.mxu0 %v1472
      %v1508 = vpop.f32.mrf.mxu0
      %v1509 = vadd.f32 0.0, %v1508
      %v1510 = vpop.f32.mrf.mxu0
      %1511 = vdwg.mxu0
      %v1512 = vadd.f32 %v1466, %v1483
      %v1513 = vxor.u32 %v1512, 2147483648
      %v1514 = vmul.f32 %v1513, 1.442695
      %v1515 = vpow.pop %v1514
      %v1516 = vadd.f32 %v1515, 1.0
      %v1517 = vrcp.pop %v1516
      %v1518 = vmul.f32 %v1516, %v1517
      %v1519 = vsub.f32 1.0, %v1518
      %v1520 = vmul.f32 %v1517, %v1519
      %v1521 = vadd.f32 %v1517, %v1520
      %vm1522 = vweird.f32 %v1516
      %vm1523 = vweird.f32 %v1517
      %vm1524 = vmor %vm1522, %vm1523
      %v1525 = vsel %vm1524, %v1517, %v1521
      %v1526 = vand.u32 2147483647, %v1516
      %vm1527 = vcmp.eq.f32.partialorder %v1526, 8.507059e+37
      %v1528 = vand.u32 %v1516, 2147483648
      %v1529 = vor.u32 1.1754944e-38, %v1528
      %v1530 = vsel %vm1527, %v1529, %v1525
      %v1531 = vmul.f32 1.0, %v1530
      %v1532 = vadd.f32 %v1467, %v1496
      %v1533 = vxor.u32 %v1532, 2147483648
      %v1534 = vmul.f32 %v1533, 1.442695
      %v1535 = vpow.pop %v1534
      %v1536 = vadd.f32 %v1535, 1.0
      %v1537 = vrcp.pop %v1536
      %v1538 = vmul.f32 %v1536, %v1537
      %v1539 = vsub.f32 1.0, %v1538
      %v1540 = vmul.f32 %v1537, %v1539
      %v1541 = vadd.f32 %v1537, %v1540
      %vm1542 = vweird.f32 %v1536
      %vm1543 = vweird.f32 %v1537
      %vm1544 = vmor %vm1542, %vm1543
      %v1545 = vsel %vm1544, %v1537, %v1541
      %v1546 = vand.u32 2147483647, %v1536
      %vm1547 = vcmp.eq.f32.partialorder %v1546, 8.507059e+37
      %v1548 = vand.u32 %v1536, 2147483648
      %v1549 = vor.u32 1.1754944e-38, %v1548
      %v1550 = vsel %vm1547, %v1549, %v1545
      %v1551 = vmul.f32 1.0, %v1550
      %v1552 = vadd.f32 %v1509, %v119
      %v1553 = vmul.f32 %v1531, %v1552
      %v1554 = vadd.f32 %v1468, %v1553
      %v1555 = vtanh.pop %v1554
      %v1556 = vsub.f32 1.0, %v1551
      %v1557 = vmul.f32 %v1556, %v1555
      %v1558 = vmul.f32 %v1551, %v1365
      %v1559 = vadd.f32 %v1557, %v1558
      %vm1560 = vcmp.gt.s32.totalorder %v124, 6
      %v1561 = vsel %vm1560, 1, 0
      %1562 = vset.pattern.permute.xlu0 0
      %1563 = vperm.xlu0 %1562, %v1561
      %v1564 = vpop.permute.xlu0 %1563
      %vm1565 = vcmp.eq.s32.totalorder %v1564, 1
      %v1566 = vsel %vm1565, %v1559, %v1365
      %v1567 = vpack.c.bf16 %v1460, %v1460
      %1568 = vmatpush.bf16.msra.mxu0 %v240
      %1569 = vmatpush.bf16.msra.mxu0 %v237
      %1570 = vmatpush.bf16.msra.mxu0 %v234
      %1571 = vmatpush.bf16.msra.mxu0 %v231
      %1572 = vmatpush.bf16.msra.mxu0 %v228
      %1573 = vmatpush.bf16.msra.mxu0 %v225
      %1574 = vmatpush.bf16.msra.mxu0 %v222
      %1575 = vmatpush.bf16.msra.mxu0 %v219
      %1576 = vmatmul.bf16.gmra.mxu0 %v1567
      %v1577 = vpop.f32.mrf.mxu0
      %v1578 = vadd.f32 0.0, %v1577
      %v1579 = vpop.f32.mrf.mxu0
      %1580 = vdwg.mxu0
      %1581 = vmatpush.bf16.msra.mxu0 %v241
      %1582 = vmatpush.bf16.msra.mxu0 %v238
      %1583 = vmatpush.bf16.msra.mxu0 %v235
      %1584 = vmatpush.bf16.msra.mxu0 %v232
      %1585 = vmatpush.bf16.msra.mxu0 %v229
      %1586 = vmatpush.bf16.msra.mxu0 %v226
      %1587 = vmatpush.bf16.msra.mxu0 %v223
      %1588 = vmatpush.bf16.msra.mxu0 %v220
      %1589 = vmatmul.bf16.gmra.mxu0 %v1567
      %v1590 = vpop.f32.mrf.mxu0
      %v1591 = vadd.f32 0.0, %v1590
      %v1592 = vpop.f32.mrf.mxu0
      %1593 = vdwg.mxu0
      %1594 = vmatpush.bf16.msra.mxu0 %v242
      %1595 = vmatpush.bf16.msra.mxu0 %v239
      %1596 = vmatpush.bf16.msra.mxu0 %v236
      %1597 = vmatpush.bf16.msra.mxu0 %v233
      %1598 = vmatpush.bf16.msra.mxu0 %v230
      %1599 = vmatpush.bf16.msra.mxu0 %v227
      %1600 = vmatpush.bf16.msra.mxu0 %v224
      %1601 = vmatpush.bf16.msra.mxu0 %v221
      %1602 = vmatmul.bf16.gmra.mxu0 %v1567
      %v1603 = vpop.f32.mrf.mxu0
      %v1604 = vadd.f32 0.0, %v1603
      %v1605 = vpop.f32.mrf.mxu0
      %1606 = vdwg.mxu0
      %v1607 = vadd.f32 %v1469, %v1578
      %v1608 = vxor.u32 %v1607, 2147483648
      %v1609 = vmul.f32 %v1608, 1.442695
      %v1610 = vpow.pop %v1609
      %v1611 = vadd.f32 %v1610, 1.0
      %v1612 = vrcp.pop %v1611
      %v1613 = vmul.f32 %v1611, %v1612
      %v1614 = vsub.f32 1.0, %v1613
      %v1615 = vmul.f32 %v1612, %v1614
      %v1616 = vadd.f32 %v1612, %v1615
      %vm1617 = vweird.f32 %v1611
      %vm1618 = vweird.f32 %v1612
      %vm1619 = vmor %vm1617, %vm1618
      %v1620 = vsel %vm1619, %v1612, %v1616
      %v1621 = vand.u32 2147483647, %v1611
      %vm1622 = vcmp.eq.f32.partialorder %v1621, 8.507059e+37
      %v1623 = vand.u32 %v1611, 2147483648
      %v1624 = vor.u32 1.1754944e-38, %v1623
      %v1625 = vsel %vm1622, %v1624, %v1620
      %v1626 = vmul.f32 1.0, %v1625
      %v1627 = vadd.f32 %v1470, %v1591
      %v1628 = vxor.u32 %v1627, 2147483648
      %v1629 = vmul.f32 %v1628, 1.442695
      %v1630 = vpow.pop %v1629
      %v1631 = vadd.f32 %v1630, 1.0
      %v1632 = vrcp.pop %v1631
      %v1633 = vmul.f32 %v1631, %v1632
      %v1634 = vsub.f32 1.0, %v1633
      %v1635 = vmul.f32 %v1632, %v1634
      %v1636 = vadd.f32 %v1632, %v1635
      %vm1637 = vweird.f32 %v1631
      %vm1638 = vweird.f32 %v1632
      %vm1639 = vmor %vm1637, %vm1638
      %v1640 = vsel %vm1639, %v1632, %v1636
      %v1641 = vand.u32 2147483647, %v1631
      %vm1642 = vcmp.eq.f32.partialorder %v1641, 8.507059e+37
      %v1643 = vand.u32 %v1631, 2147483648
      %v1644 = vor.u32 1.1754944e-38, %v1643
      %v1645 = vsel %vm1642, %v1644, %v1640
      %v1646 = vmul.f32 1.0, %v1645
      %v1647 = vadd.f32 %v1604, %v119
      %v1648 = vmul.f32 %v1626, %v1647
      %v1649 = vadd.f32 %v1471, %v1648
      %v1650 = vtanh.pop %v1649
      %v1651 = vsub.f32 1.0, %v1646
      %v1652 = vmul.f32 %v1651, %v1650
      %v1653 = vmul.f32 %v1646, %v1460
      %v1654 = vadd.f32 %v1652, %v1653
      %vm1655 = vcmp.gt.s32.totalorder %v125, 6
      %v1656 = vsel %vm1655, 1, 0
      %1657 = vset.pattern.permute.xlu0 0
      %1658 = vperm.xlu0 %1657, %v1656
      %v1659 = vpop.permute.xlu0 %1658
      %vm1660 = vcmp.eq.s32.totalorder %v1659, 1
      %v1661 = vsel %vm1660, %v1654, %v1460
      %s1662 = scalar_lea.vmem [#allocation5], 168
      %v1663 = vld [vmem:[%s1662] sm:$0xff]
      %v1664 = vld [vmem:[%s1662 + $0x8] sm:$0xf]
      %v1665 = vld [vmem:[%s1662 + $0xc] sm:$0xff]
      %v1666 = vld [vmem:[%s1662 + $0x14] sm:$0xf]
      %v1667 = vunpack.c.l.bf16 %v1663
      %v1668 = vunpack.c.h.bf16 %v1663
      %v1669 = vunpack.c.l.bf16 %v1664
      %v1670 = vunpack.c.l.bf16 %v1665
      %v1671 = vunpack.c.h.bf16 %v1665
      %v1672 = vunpack.c.l.bf16 %v1666
      %v1673 = vpack.c.bf16 %v1566, %v1566
      %1674 = vmatpush.bf16.msra.mxu0 %v240
      %1675 = vmatpush.bf16.msra.mxu0 %v237
      %1676 = vmatpush.bf16.msra.mxu0 %v234
      %1677 = vmatpush.bf16.msra.mxu0 %v231
      %1678 = vmatpush.bf16.msra.mxu0 %v228
      %1679 = vmatpush.bf16.msra.mxu0 %v225
      %1680 = vmatpush.bf16.msra.mxu0 %v222
      %1681 = vmatpush.bf16.msra.mxu0 %v219
      %1682 = vmatmul.bf16.gmra.mxu0 %v1673
      %v1683 = vpop.f32.mrf.mxu0
      %v1684 = vadd.f32 0.0, %v1683
      %v1685 = vpop.f32.mrf.mxu0
      %1686 = vdwg.mxu0
      %1687 = vmatpush.bf16.msra.mxu0 %v241
      %1688 = vmatpush.bf16.msra.mxu0 %v238
      %1689 = vmatpush.bf16.msra.mxu0 %v235
      %1690 = vmatpush.bf16.msra.mxu0 %v232
      %1691 = vmatpush.bf16.msra.mxu0 %v229
      %1692 = vmatpush.bf16.msra.mxu0 %v226
      %1693 = vmatpush.bf16.msra.mxu0 %v223
      %1694 = vmatpush.bf16.msra.mxu0 %v220
      %1695 = vmatmul.bf16.gmra.mxu0 %v1673
      %v1696 = vpop.f32.mrf.mxu0
      %v1697 = vadd.f32 0.0, %v1696
      %v1698 = vpop.f32.mrf.mxu0
      %1699 = vdwg.mxu0
      %1700 = vmatpush.bf16.msra.mxu0 %v242
      %1701 = vmatpush.bf16.msra.mxu0 %v239
      %1702 = vmatpush.bf16.msra.mxu0 %v236
      %1703 = vmatpush.bf16.msra.mxu0 %v233
      %1704 = vmatpush.bf16.msra.mxu0 %v230
      %1705 = vmatpush.bf16.msra.mxu0 %v227
      %1706 = vmatpush.bf16.msra.mxu0 %v224
      %1707 = vmatpush.bf16.msra.mxu0 %v221
      %1708 = vmatmul.bf16.gmra.mxu0 %v1673
      %v1709 = vpop.f32.mrf.mxu0
      %v1710 = vadd.f32 0.0, %v1709
      %v1711 = vpop.f32.mrf.mxu0
      %1712 = vdwg.mxu0
      %v1713 = vadd.f32 %v1667, %v1684
      %v1714 = vxor.u32 %v1713, 2147483648
      %v1715 = vmul.f32 %v1714, 1.442695
      %v1716 = vpow.pop %v1715
      %v1717 = vadd.f32 %v1716, 1.0
      %v1718 = vrcp.pop %v1717
      %v1719 = vmul.f32 %v1717, %v1718
      %v1720 = vsub.f32 1.0, %v1719
      %v1721 = vmul.f32 %v1718, %v1720
      %v1722 = vadd.f32 %v1718, %v1721
      %vm1723 = vweird.f32 %v1717
      %vm1724 = vweird.f32 %v1718
      %vm1725 = vmor %vm1723, %vm1724
      %v1726 = vsel %vm1725, %v1718, %v1722
      %v1727 = vand.u32 2147483647, %v1717
      %vm1728 = vcmp.eq.f32.partialorder %v1727, 8.507059e+37
      %v1729 = vand.u32 %v1717, 2147483648
      %v1730 = vor.u32 1.1754944e-38, %v1729
      %v1731 = vsel %vm1728, %v1730, %v1726
      %v1732 = vmul.f32 1.0, %v1731
      %v1733 = vadd.f32 %v1668, %v1697
      %v1734 = vxor.u32 %v1733, 2147483648
      %v1735 = vmul.f32 %v1734, 1.442695
      %v1736 = vpow.pop %v1735
      %v1737 = vadd.f32 %v1736, 1.0
      %v1738 = vrcp.pop %v1737
      %v1739 = vmul.f32 %v1737, %v1738
      %v1740 = vsub.f32 1.0, %v1739
      %v1741 = vmul.f32 %v1738, %v1740
      %v1742 = vadd.f32 %v1738, %v1741
      %vm1743 = vweird.f32 %v1737
      %vm1744 = vweird.f32 %v1738
      %vm1745 = vmor %vm1743, %vm1744
      %v1746 = vsel %vm1745, %v1738, %v1742
      %v1747 = vand.u32 2147483647, %v1737
      %vm1748 = vcmp.eq.f32.partialorder %v1747, 8.507059e+37
      %v1749 = vand.u32 %v1737, 2147483648
      %v1750 = vor.u32 1.1754944e-38, %v1749
      %v1751 = vsel %vm1748, %v1750, %v1746
      %v1752 = vmul.f32 1.0, %v1751
      %v1753 = vadd.f32 %v1710, %v119
      %v1754 = vmul.f32 %v1732, %v1753
      %v1755 = vadd.f32 %v1669, %v1754
      %v1756 = vtanh.pop %v1755
      %v1757 = vsub.f32 1.0, %v1752
      %v1758 = vmul.f32 %v1757, %v1756
      %v1759 = vmul.f32 %v1752, %v1566
      %v1760 = vadd.f32 %v1758, %v1759
      %vm1761 = vcmp.gt.s32.totalorder %v124, 7
      %v1762 = vsel %vm1761, 1, 0
      %1763 = vset.pattern.permute.xlu0 0
      %1764 = vperm.xlu0 %1763, %v1762
      %v1765 = vpop.permute.xlu0 %1764
      %vm1766 = vcmp.eq.s32.totalorder %v1765, 1
      %v1767 = vsel %vm1766, %v1760, %v1566
      %v1768 = vpack.c.bf16 %v1661, %v1661
      %1769 = vmatpush.bf16.msra.mxu0 %v240
      %1770 = vmatpush.bf16.msra.mxu0 %v237
      %1771 = vmatpush.bf16.msra.mxu0 %v234
      %1772 = vmatpush.bf16.msra.mxu0 %v231
      %1773 = vmatpush.bf16.msra.mxu0 %v228
      %1774 = vmatpush.bf16.msra.mxu0 %v225
      %1775 = vmatpush.bf16.msra.mxu0 %v222
      %1776 = vmatpush.bf16.msra.mxu0 %v219
      %1777 = vmatmul.bf16.gmra.mxu0 %v1768
      %v1778 = vpop.f32.mrf.mxu0
      %v1779 = vadd.f32 0.0, %v1778
      %v1780 = vpop.f32.mrf.mxu0
      %1781 = vdwg.mxu0
      %1782 = vmatpush.bf16.msra.mxu0 %v241
      %1783 = vmatpush.bf16.msra.mxu0 %v238
      %1784 = vmatpush.bf16.msra.mxu0 %v235
      %1785 = vmatpush.bf16.msra.mxu0 %v232
      %1786 = vmatpush.bf16.msra.mxu0 %v229
      %1787 = vmatpush.bf16.msra.mxu0 %v226
      %1788 = vmatpush.bf16.msra.mxu0 %v223
      %1789 = vmatpush.bf16.msra.mxu0 %v220
      %1790 = vmatmul.bf16.gmra.mxu0 %v1768
      %v1791 = vpop.f32.mrf.mxu0
      %v1792 = vadd.f32 0.0, %v1791
      %v1793 = vpop.f32.mrf.mxu0
      %1794 = vdwg.mxu0
      %1795 = vmatpush.bf16.msra.mxu0 %v242
      %1796 = vmatpush.bf16.msra.mxu0 %v239
      %1797 = vmatpush.bf16.msra.mxu0 %v236
      %1798 = vmatpush.bf16.msra.mxu0 %v233
      %1799 = vmatpush.bf16.msra.mxu0 %v230
      %1800 = vmatpush.bf16.msra.mxu0 %v227
      %1801 = vmatpush.bf16.msra.mxu0 %v224
      %1802 = vmatpush.bf16.msra.mxu0 %v221
      %1803 = vmatmul.bf16.gmra.mxu0 %v1768
      %v1804 = vpop.f32.mrf.mxu0
      %v1805 = vadd.f32 0.0, %v1804
      %v1806 = vpop.f32.mrf.mxu0
      %1807 = vdwg.mxu0
      %v1808 = vadd.f32 %v1670, %v1779
      %v1809 = vxor.u32 %v1808, 2147483648
      %v1810 = vmul.f32 %v1809, 1.442695
      %v1811 = vpow.pop %v1810
      %v1812 = vadd.f32 %v1811, 1.0
      %v1813 = vrcp.pop %v1812
      %v1814 = vmul.f32 %v1812, %v1813
      %v1815 = vsub.f32 1.0, %v1814
      %v1816 = vmul.f32 %v1813, %v1815
      %v1817 = vadd.f32 %v1813, %v1816
      %vm1818 = vweird.f32 %v1812
      %vm1819 = vweird.f32 %v1813
      %vm1820 = vmor %vm1818, %vm1819
      %v1821 = vsel %vm1820, %v1813, %v1817
      %v1822 = vand.u32 2147483647, %v1812
      %vm1823 = vcmp.eq.f32.partialorder %v1822, 8.507059e+37
      %v1824 = vand.u32 %v1812, 2147483648
      %v1825 = vor.u32 1.1754944e-38, %v1824
      %v1826 = vsel %vm1823, %v1825, %v1821
      %v1827 = vmul.f32 1.0, %v1826
      %v1828 = vadd.f32 %v1671, %v1792
      %v1829 = vxor.u32 %v1828, 2147483648
      %v1830 = vmul.f32 %v1829, 1.442695
      %v1831 = vpow.pop %v1830
      %v1832 = vadd.f32 %v1831, 1.0
      %v1833 = vrcp.pop %v1832
      %v1834 = vmul.f32 %v1832, %v1833
      %v1835 = vsub.f32 1.0, %v1834
      %v1836 = vmul.f32 %v1833, %v1835
      %v1837 = vadd.f32 %v1833, %v1836
      %vm1838 = vweird.f32 %v1832
      %vm1839 = vweird.f32 %v1833
      %vm1840 = vmor %vm1838, %vm1839
      %v1841 = vsel %vm1840, %v1833, %v1837
      %v1842 = vand.u32 2147483647, %v1832
      %vm1843 = vcmp.eq.f32.partialorder %v1842, 8.507059e+37
      %v1844 = vand.u32 %v1832, 2147483648
      %v1845 = vor.u32 1.1754944e-38, %v1844
      %v1846 = vsel %vm1843, %v1845, %v1841
      %v1847 = vmul.f32 1.0, %v1846
      %v1848 = vadd.f32 %v1805, %v119
      %v1849 = vmul.f32 %v1827, %v1848
      %v1850 = vadd.f32 %v1672, %v1849
      %v1851 = vtanh.pop %v1850
      %v1852 = vsub.f32 1.0, %v1847
      %v1853 = vmul.f32 %v1852, %v1851
      %v1854 = vmul.f32 %v1847, %v1661
      %v1855 = vadd.f32 %v1853, %v1854
      %vm1856 = vcmp.gt.s32.totalorder %v125, 7
      %v1857 = vsel %vm1856, 1, 0
      %1858 = vset.pattern.permute.xlu0 0
      %1859 = vperm.xlu0 %1858, %v1857
      %v1860 = vpop.permute.xlu0 %1859
      %vm1861 = vcmp.eq.s32.totalorder %v1860, 1
      %v1862 = vsel %vm1861, %v1855, %v1661
      %1863 = vst [vmem:[#allocation2] sm:$0xff] %v1767
      %1864 = vst [vmem:[#allocation2 + $0x8] sm:$0xff] %v1862
    $region45: #{tpu_custom_call.1} parent=1 // pred_fallthru
      _
    // Predicated region
    $region46: #{tpu_custom_call.1} parent=1 // pred_check
      %p1865 = pneg %p73
    $region47: #{tpu_custom_call.1} parent=1 // pred_check_branch
      %1867 = sbr.rel (%p1865) target = $region49
    $region48: #{tpu_custom_call.1} parent=1 // pred_region
      %v1868 = vld [vmem:[#allocation2] sm:$0xff]
      %v1869 = vld [vmem:[#allocation2 + $0x8] sm:$0xff]
      %v1870 = vpack.c.bf16 %v1869, %v1868
      %v1871 = vld [vmem:[#allocation10] sm:$0xf]
      %v1872 = vld [vmem:[#allocation10 + $0x4] sm:$0xf]
      %v1873 = vld [vmem:[#allocation10 + $0x8] sm:$0xf]
      %v1874 = vld [vmem:[#allocation10 + $0xc] sm:$0xf]
      %v1875 = vld [vmem:[#allocation10 + $0x10] sm:$0xf]
      %v1876 = vld [vmem:[#allocation10 + $0x14] sm:$0xf]
      %v1877 = vld [vmem:[#allocation10 + $0x18] sm:$0xf]
      %v1878 = vld [vmem:[#allocation10 + $0x1c] sm:$0xf]
      %v1879 = vld [vmem:[#allocation10 + $0x20] sm:$0xf]
      %v1880 = vld [vmem:[#allocation10 + $0x24] sm:$0xf]
      %v1881 = vld [vmem:[#allocation10 + $0x28] sm:$0xf]
      %v1882 = vld [vmem:[#allocation10 + $0x2c] sm:$0xf]
      %v1883 = vld [vmem:[#allocation10 + $0x30] sm:$0xf]
      %v1884 = vld [vmem:[#allocation10 + $0x34] sm:$0xf]
      %v1885 = vld [vmem:[#allocation10 + $0x38] sm:$0xf]
      %v1886 = vld [vmem:[#allocation10 + $0x3c] sm:$0xf]
      %v1887 = vld [vmem:[%s6] sm:$0x1]
      %v1889 = vperm.slane %v1887, 0
      %v1907 = vunpack.c.l.b16 %v1871
      %v1908 = vunpack.c.l.b16 %v1872
      %v1909 = vunpack.c.l.b16 %v1873
      %v1910 = vunpack.c.l.b16 %v1874
      %v1911 = vunpack.c.l.b16 %v1875
      %v1912 = vunpack.c.l.b16 %v1876
      %v1913 = vunpack.c.l.b16 %v1877
      %v1914 = vunpack.c.l.b16 %v1878
      %v1915 = vunpack.c.l.b16 %v1879
      %v1916 = vunpack.c.l.b16 %v1880
      %v1917 = vunpack.c.l.b16 %v1881
      %v1918 = vunpack.c.l.b16 %v1882
      %v1919 = vunpack.c.l.b16 %v1883
      %v1920 = vunpack.c.l.b16 %v1884
      %v1921 = vunpack.c.l.b16 %v1885
      %v1922 = vunpack.c.l.b16 %v1886
      %v1923 = vpack.c.b16 %v1908, %v1907
      %v1924 = vpack.c.b16 %v1910, %v1909
      %v1925 = vpack.c.b16 %v1912, %v1911
      %v1926 = vpack.c.b16 %v1914, %v1913
      %v1927 = vpack.c.b16 %v1916, %v1915
      %v1928 = vpack.c.b16 %v1918, %v1917
      %v1929 = vpack.c.b16 %v1920, %v1919
      %v1930 = vpack.c.b16 %v1922, %v1921
      %1939 = vmatpush.bf16.msra.mxu0 %v1930
      %1940 = vmatpush.bf16.msra.mxu0 %v1929
      %1941 = vmatpush.bf16.msra.mxu0 %v1928
      %1942 = vmatpush.bf16.msra.mxu0 %v1927
      %1943 = vmatpush.bf16.msra.mxu0 %v1926
      %1944 = vmatpush.bf16.msra.mxu0 %v1925
      %1945 = vmatpush.bf16.msra.mxu0 %v1924
      %1946 = vmatpush.bf16.msra.mxu0 %v1923
      %1947 = vmatmul.bf16.gmra.mxu0 %v1870
      %v1948 = vpop.f32.mrf.mxu0
      %v1949 = vadd.f32 %v1889, %v1948
      %v1950 = vpop.f32.mrf.mxu0
      %v1951 = vadd.f32 %v1889, %v1950
      %1952 = vdwg.mxu0
      %v1953 = vlaneseq
      %v1954 = vand.u32 %v1953, 127
      %vm1955 = vcmp.lt.s32.totalorder %v1954, 8
      %v1956 = vsel %vm1955, %v1949, -1e+30
      %v1957 = vsel %vm1955, %v1951, -1e+30
      %1958 = vmax.xlane.f32.xlu0 %v1956
      %v1959 = vpop.xlane.xlu0 %1958
      %1960 = vmax.xlane.f32.xlu0 %v1957
      %v1961 = vpop.xlane.xlu0 %1960
      %v1962 = vsub.f32 %v1956, %v1959
      %v1963 = vsub.f32 %v1957, %v1961
      %v1964 = vmul.f32 %v1962, 1.442695
      %v1965 = vpow.pop %v1964
      %v1966 = vmul.f32 %v1963, 1.442695
      %v1967 = vpow.pop %v1966
      %1968 = vadd.xlane.f32.xlu0 %v1965
      %v1969 = vpop.xlane.xlu0 %1968
      %1970 = vadd.xlane.f32.xlu0 %v1967
      %v1971 = vpop.xlane.xlu0 %1970
      %v1972 = vlog2.pop %v1969
      %v1973 = vmul.f32 %v1972, 0.6931472
      %v1974 = vlog2.pop %v1971
      %v1975 = vmul.f32 %v1974, 0.6931472
      %v1976 = vsub.f32 %v1962, %v1973
      %v1977 = vsub.f32 %v1963, %v1975
      %1978 = vst [vmem:[#allocation11] sm:$0xff] %v1976
      %1979 = vst [vmem:[#allocation11 + $0x8] sm:$0xff] %v1977
    $region49: #{tpu_custom_call.1} parent=1 // pred_fallthru
      _
    // Predicated region
    $region50: #{tpu_custom_call.1} parent=1 // pred_check
      _
    $region51: #{tpu_custom_call.1} parent=1 // pred_check_branch
      %1981 = sbr.rel (0) target = $region53
    $region52: #{tpu_custom_call.1} parent=1 // pred_region
      %1983 = vsyncadd [#allocation7], 0
      %s1984 = sshll.u32 [#allocation11], 4
      %s1985 = int_to_ptr.vmem [resolvable:$true] %s1984
      %s1986 = sshll.u32 %s7, 4
      %s1987 = int_to_ptr.hbm [resolvable:$true] %s1986
      %1992 = dma.vmem_to_hbm [thread:$0]  %s1985, 256, %s1987, [#allocation7], 128, 128, 8
    $region53: #{tpu_custom_call.1} parent=1 // pred_fallthru
      _
    // Predicated region
    $region54: #{tpu_custom_call.1} parent=1 // pred_check
      _
    $region55: #{tpu_custom_call.1} parent=1 // pred_check_branch
      %1994 = sbr.rel (0) target = $region57
    $region56: #{tpu_custom_call.1} parent=1 // pred_region
      %1996 = dma.done [#allocation7], 256
    $region57: #{tpu_custom_call.1} parent=1 // pred_fallthru
      _
    %1997 = vsyncpa [#allocation6], 1
    %1998 = vsyncpa [#allocation9], 1
    %1999 = vsyncpa [#allocation7], 1

// kernel: tpu_custom_call.1
$region0: #{tpu_custom_call.1}
  #allocation0 [shape = 'u32[]', space=smem, size = 0x4, offset = 0x4, fixed_abs, tag = 'smem constant byte address 0x4 - core index']
  #allocation1 [shape = 'u32[72,128]{1,0:T(1,128)}', space=vmem, size = 0x9000, scoped, tag = 'internal scratch']
  #allocation2 [shape = 'f32[16,128]{1,0:T(8,128)}', space=vmem, size = 0x2000, scoped, tag = 'scratch operand']
  #allocation3 [shape = 's32[1]{0}', space=sflag, size = 0x4, scoped, tag = 'scoped memory for tpu_custom_call.1']
  #allocation4 [shape = 's32[1]{0:T(128)S(6)}', space=smem, size = 0x200, scoped, tag = 'prefetched SMEM operand 0']
  %s0 = inlined_call_operand.<no memory space> [shape: s32[1], index: 0, kind: input, shape index: {}]
  %s1 = inlined_call_operand.hbm [shape: bf16[8,16,384], index: 1, kind: input, shape index: {}]
  %s2 = inlined_call_operand.vmem [shape: s32[16,1], index: 2, kind: input, shape index: {}]
  %s3 = inlined_call_operand.hbm [shape: bf16[128,384], index: 3, kind: input, shape index: {}]
  %s4 = inlined_call_operand.vmem [shape: f32[1,128], index: 4, kind: input, shape index: {}]
  %s5 = inlined_call_operand.hbm [shape: bf16[128,128], index: 5, kind: input, shape index: {}]
  %s6 = inlined_call_operand.vmem [shape: f32[1,128], index: 6, kind: input, shape index: {}]
  %s7 = inlined_call_operand.hbm [shape: f32[16,128], index: 7, kind: output, shape index: {}]
  %s8 = sld [smem:[#allocation0]]
  $region58: #{tpu_custom_call.1} parent=0
    _
  %s10 = ssub.s32 1, %s8
  %s11 = scalar_select 0, %s10, %s8
  %12 = sst [smem:[#allocation4]] %s0
  $region1: #{tpu_custom_call.1} parent=0
    #allocation5 [shape = 'u8[98304]{0}', space=vmem, size = 0x18000, scoped, tag = 'input window, operand 1, single buffered']
    #allocation6 [shape = 's32[1]{0}', space=sflag, size = 0x4, scoped, tag = 'scoped memory for tpu_custom_call.1']
    #allocation7 [shape = 's32[1]{0}', space=sflag, size = 0x4, scoped, tag = 'scoped memory for tpu_custom_call.1']
    #allocation8 [shape = 'u8[98304]{0}', space=vmem, size = 0x18000, scoped, tag = 'input window, operand 3, single buffered']
    #allocation9 [shape = 's32[1]{0}', space=sflag, size = 0x4, scoped, tag = 'scoped memory for tpu_custom_call.1']
    #allocation10 [shape = 'u8[32768]{0}', space=vmem, size = 0x8000, scoped, tag = 'input window, operand 5, single buffered']
    #allocation11 [shape = 'u8[8192]{0}', space=vmem, size = 0x2000, scoped, tag = 'output window, operand 0, single buffered']
    %13 = vsyncpa [#allocation6], 0
    %14 = vsyncpa [#allocation9], 0
    %15 = vsyncpa [#allocation7], 0
    // Predicated region
    $region2: #{tpu_custom_call.1} parent=1 // pred_check
      _
    $region3: #{tpu_custom_call.1} parent=1 // pred_check_branch
      %17 = sbr.rel (0) target = $region5
    $region4: #{tpu_custom_call.1} parent=1 // pred_region
      %19 = vsyncadd [#allocation6], 0
      %s20 = sshll.u32 %s1, 4
      %s21 = int_to_ptr.hbm [resolvable:$true] %s20
      %s22 = sshll.u32 [#allocation5], 4
      %s23 = int_to_ptr.vmem [resolvable:$true] %s22
      %28 = dma.hbm_to_vmem [thread:$0]  %s21, 3072, %s23, [#allocation6], 192, 192, 12
    $region5: #{tpu_custom_call.1} parent=1 // pred_fallthru
      _
    // Predicated region
    $region6: #{tpu_custom_call.1} parent=1 // pred_check
      _
    $region7: #{tpu_custom_call.1} parent=1 // pred_check_branch
      %30 = sbr.rel (0) target = $region9
    $region8: #{tpu_custom_call.1} parent=1 // pred_region
      _
    $region9: #{tpu_custom_call.1} parent=1 // pred_fallthru
      _
    // Predicated region
    $region10: #{tpu_custom_call.1} parent=1 // pred_check
      _
    $region11: #{tpu_custom_call.1} parent=1 // pred_check_branch
      %32 = sbr.rel (0) target = $region13
    $region12: #{tpu_custom_call.1} parent=1 // pred_region
      %34 = vsyncadd [#allocation9], 0
      %s35 = sshll.u32 %s3, 4
      %s36 = int_to_ptr.hbm [resolvable:$true] %s35
      %s37 = sshll.u32 [#allocation8], 4
      %s38 = int_to_ptr.vmem [resolvable:$true] %s37
      %43 = dma.hbm_to_vmem [thread:$0]  %s36, 3072, %s38, [#allocation9], 192, 192, 12
    $region13: #{tpu_custom_call.1} parent=1 // pred_fallthru
      _
    // Predicated region
    $region14: #{tpu_custom_call.1} parent=1 // pred_check
      _
    $region15: #{tpu_custom_call.1} parent=1 // pred_check_branch
      %45 = sbr.rel (0) target = $region17
    $region16: #{tpu_custom_call.1} parent=1 // pred_region
      _
    $region17: #{tpu_custom_call.1} parent=1 // pred_fallthru
      _
    // Predicated region
    $region18: #{tpu_custom_call.1} parent=1 // pred_check
      _
    $region19: #{tpu_custom_call.1} parent=1 // pred_check_branch
      %47 = sbr.rel (0) target = $region21
    $region20: #{tpu_custom_call.1} parent=1 // pred_region
      %49 = vsyncadd [#allocation9], 0
      %s50 = sshll.u32 %s5, 4
      %s51 = int_to_ptr.hbm [resolvable:$true] %s50
      %s52 = sshll.u32 [#allocation10], 4
      %s53 = int_to_ptr.vmem [resolvable:$true] %s52
      %58 = dma.hbm_to_vmem [thread:$0]  %s51, 1024, %s53, [#allocation9], 64, 64, 4
    $region21: #{tpu_custom_call.1} parent=1 // pred_fallthru
      _
    // Predicated region
    $region22: #{tpu_custom_call.1} parent=1 // pred_check
      _
    $region23: #{tpu_custom_call.1} parent=1 // pred_check_branch
      %60 = sbr.rel (0) target = $region25
    $region24: #{tpu_custom_call.1} parent=1 // pred_region
      _
    $region25: #{tpu_custom_call.1} parent=1 // pred_fallthru
      _
    // Predicated region
    $region26: #{tpu_custom_call.1} parent=1 // pred_check
      _
    $region27: #{tpu_custom_call.1} parent=1 // pred_check_branch
      %62 = sbr.rel (0) target = $region29
    $region28: #{tpu_custom_call.1} parent=1 // pred_region
      %64 = dma.done [#allocation6], 3072
    $region29: #{tpu_custom_call.1} parent=1 // pred_fallthru
      _
    // Predicated region
    $region30: #{tpu_custom_call.1} parent=1 // pred_check
      _
    $region31: #{tpu_custom_call.1} parent=1 // pred_check_branch
      %66 = sbr.rel (0) target = $region33
    $region32: #{tpu_custom_call.1} parent=1 // pred_region
      %68 = dma.done [#allocation9], 3072
    $region33: #{tpu_custom_call.1} parent=1 // pred_fallthru
      _
    // Predicated region
    $region34: #{tpu_custom_call.1} parent=1 // pred_check
      _
    $region35: #{tpu_custom_call.1} parent=1 // pred_check_branch
      %70 = sbr.rel (0) target = $region37
    $region36: #{tpu_custom_call.1} parent=1 // pred_region
      %72 = dma.done [#allocation9], 1024
    $region37: #{tpu_custom_call.1} parent=1 // pred_fallthru
      _
    %p73 = scmp.eq.s32.totalorder 0, 0
    // Predicated region
    $region38: #{tpu_custom_call.1} parent=1 // pred_check
      %p74 = pneg %p73
    $region39: #{tpu_custom_call.1} parent=1 // pred_check_branch
      %76 = sbr.rel (%p74) target = $region41
    $region40: #{tpu_custom_call.1} parent=1 // pred_region
      %77 = vst [vmem:[#allocation2] sm:$0xff] 0.0
      %78 = vst [vmem:[#allocation2 + $0x8] sm:$0xff] 0.0
    $region41: #{tpu_custom_call.1} parent=1 // pred_fallthru
      _
    %s79 = smul.u32 0, 8
    %s80 = sld [smem:[#allocation4]]
    %p81 = scmp.lt.s32.totalorder %s79, %s80
    // Predicated region
    $region42: #{tpu_custom_call.1} parent=1 // pred_check
      %p82 = pneg %p81
    $region43: #{tpu_custom_call.1} parent=1 // pred_check_branch
      %84 = sbr.rel (%p82) target = $region45
    $region44: #{tpu_custom_call.1} parent=1 // pred_region
      %v85 = vld [vmem:[#allocation8] sm:$0xff]
      %v86 = vld [vmem:[#allocation8 + $0x8] sm:$0xf]
      %v87 = vld [vmem:[#allocation8 + $0xc] sm:$0xff]
      %v88 = vld [vmem:[#allocation8 + $0x14] sm:$0xf]
      %v89 = vld [vmem:[#allocation8 + $0x18] sm:$0xff]
      %v90 = vld [vmem:[#allocation8 + $0x20] sm:$0xf]
      %v91 = vld [vmem:[#allocation8 + $0x24] sm:$0xff]
      %v92 = vld [vmem:[#allocation8 + $0x2c] sm:$0xf]
      %v93 = vld [vmem:[#allocation8 + $0x30] sm:$0xff]
      %v94 = vld [vmem:[#allocation8 + $0x38] sm:$0xf]
      %v95 = vld [vmem:[#allocation8 + $0x3c] sm:$0xff]
      %v96 = vld [vmem:[#allocation8 + $0x44] sm:$0xf]
      %v97 = vld [vmem:[#allocation8 + $0x48] sm:$0xff]
      %v98 = vld [vmem:[#allocation8 + $0x50] sm:$0xf]
      %v99 = vld [vmem:[#allocation8 + $0x54] sm:$0xff]
      %v100 = vld [vmem:[#allocation8 + $0x5c] sm:$0xf]
      %v101 = vld [vmem:[#allocation8 + $0x60] sm:$0xff]
      %v102 = vld [vmem:[#allocation8 + $0x68] sm:$0xf]
      %v103 = vld [vmem:[#allocation8 + $0x6c] sm:$0xff]
      %v104 = vld [vmem:[#allocation8 + $0x74] sm:$0xf]
      %v105 = vld [vmem:[#allocation8 + $0x78] sm:$0xff]
      %v106 = vld [vmem:[#allocation8 + $0x80] sm:$0xf]
      %v107 = vld [vmem:[#allocation8 + $0x84] sm:$0xff]
      %v108 = vld [vmem:[#allocation8 + $0x8c] sm:$0xf]
      %v109 = vld [vmem:[#allocation8 + $0x90] sm:$0xff]
      %v110 = vld [vmem:[#allocation8 + $0x98] sm:$0xf]
      %v111 = vld [vmem:[#allocation8 + $0x9c] sm:$0xff]
      %v112 = vld [vmem:[#allocation8 + $0xa4] sm:$0xf]
      %v113 = vld [vmem:[#allocation8 + $0xa8] sm:$0xff]
      %v114 = vld [vmem:[#allocation8 + $0xb0] sm:$0xf]
      %v115 = vld [vmem:[#allocation8 + $0xb4] sm:$0xff]
      %v116 = vld [vmem:[#allocation8 + $0xbc] sm:$0xf]
      %v117 = vld [vmem:[%s4] sm:$0x1]
      %v119 = vperm.slane %v117, 0
      %v121 = vld [vmem:[%s2] sm:$0xff]
      %v122 = vld [vmem:[%s2 + $0x8] sm:$0xff]
      %v123 = vstv %s79
      %v124 = vsub.s32 %v121, %v123
      %v125 = vsub.s32 %v122, %v123
      %v126 = vld [vmem:[#allocation2] sm:$0xff]
      %v127 = vld [vmem:[#allocation2 + $0x8] sm:$0xff]
      %v128 = vld [vmem:[#allocation5] sm:$0xff]
      %v129 = vld [vmem:[#allocation5 + $0x8] sm:$0xf]
      %v130 = vld [vmem:[#allocation5 + $0xc] sm:$0xff]
      %v131 = vld [vmem:[#allocation5 + $0x14] sm:$0xf]
      %v132 = vunpack.c.l.bf16 %v128
      %v133 = vunpack.c.h.bf16 %v128
      %v134 = vunpack.c.l.bf16 %v129
      %v135 = vunpack.c.l.bf16 %v130
      %v136 = vunpack.c.h.bf16 %v130
      %v137 = vunpack.c.l.bf16 %v131
      %v138 = vpack.c.bf16 %v126, %v126
      %v171 = vunpack.c.l.b16 %v85
      %v172 = vunpack.c.h.b16 %v85
      %v173 = vunpack.c.l.b16 %v86
      %v174 = vunpack.c.l.b16 %v87
      %v175 = vunpack.c.h.b16 %v87
      %v176 = vunpack.c.l.b16 %v88
      %v177 = vunpack.c.l.b16 %v89
      %v178 = vunpack.c.h.b16 %v89
      %v179 = vunpack.c.l.b16 %v90
      %v180 = vunpack.c.l.b16 %v91
      %v181 = vunpack.c.h.b16 %v91
      %v182 = vunpack.c.l.b16 %v92
      %v183 = vunpack.c.l.b16 %v93
      %v184 = vunpack.c.h.b16 %v93
      %v185 = vunpack.c.l.b16 %v94
      %v186 = vunpack.c.l.b16 %v95
      %v187 = vunpack.c.h.b16 %v95
      %v188 = vunpack.c.l.b16 %v96
      %v189 = vunpack.c.l.b16 %v97
      %v190 = vunpack.c.h.b16 %v97
      %v191 = vunpack.c.l.b16 %v98
      %v192 = vunpack.c.l.b16 %v99
      %v193 = vunpack.c.h.b16 %v99
      %v194 = vunpack.c.l.b16 %v100
      %v195 = vunpack.c.l.b16 %v101
      %v196 = vunpack.c.h.b16 %v101
      %v197 = vunpack.c.l.b16 %v102
      %v198 = vunpack.c.l.b16 %v103
      %v199 = vunpack.c.h.b16 %v103
      %v200 = vunpack.c.l.b16 %v104
      %v201 = vunpack.c.l.b16 %v105
      %v202 = vunpack.c.h.b16 %v105
      %v203 = vunpack.c.l.b16 %v106
      %v204 = vunpack.c.l.b16 %v107
      %v205 = vunpack.c.h.b16 %v107
      %v206 = vunpack.c.l.b16 %v108
      %v207 = vunpack.c.l.b16 %v109
      %v208 = vunpack.c.h.b16 %v109
      %v209 = vunpack.c.l.b16 %v110
      %v210 = vunpack.c.l.b16 %v111
      %v211 = vunpack.c.h.b16 %v111
      %v212 = vunpack.c.l.b16 %v112
      %v213 = vunpack.c.l.b16 %v113
      %v214 = vunpack.c.h.b16 %v113
      %v215 = vunpack.c.l.b16 %v114
      %v216 = vunpack.c.l.b16 %v115
      %v217 = vunpack.c.h.b16 %v115
      %v218 = vunpack.c.l.b16 %v116
      %v219 = vpack.c.b16 %v174, %v171
      %v220 = vpack.c.b16 %v175, %v172
      %v221 = vpack.c.b16 %v176, %v173
      %v222 = vpack.c.b16 %v180, %v177
      %v223 = vpack.c.b16 %v181, %v178
      %v224 = vpack.c.b16 %v182, %v179
      %v225 = vpack.c.b16 %v186, %v183
      %v226 = vpack.c.b16 %v187, %v184
      %v227 = vpack.c.b16 %v188, %v185
      %v228 = vpack.c.b16 %v192, %v189
      %v229 = vpack.c.b16 %v193, %v190
      %v230 = vpack.c.b16 %v194, %v191
      %v231 = vpack.c.b16 %v198, %v195
      %v232 = vpack.c.b16 %v199, %v196
      %v233 = vpack.c.b16 %v200, %v197
      %v234 = vpack.c.b16 %v204, %v201
      %v235 = vpack.c.b16 %v205, %v202
      %v236 = vpack.c.b16 %v206, %v203
      %v237 = vpack.c.b16 %v210, %v207
      %v238 = vpack.c.b16 %v211, %v208
      %v239 = vpack.c.b16 %v212, %v209
      %v240 = vpack.c.b16 %v216, %v213
      %v241 = vpack.c.b16 %v217, %v214
      %v242 = vpack.c.b16 %v218, %v215
      %267 = vmatpush.bf16.msra.mxu0 %v240
      %268 = vmatpush.bf16.msra.mxu0 %v237
      %269 = vmatpush.bf16.msra.mxu0 %v234
      %270 = vmatpush.bf16.msra.mxu0 %v231
      %271 = vmatpush.bf16.msra.mxu0 %v228
      %272 = vmatpush.bf16.msra.mxu0 %v225
      %273 = vmatpush.bf16.msra.mxu0 %v222
      %274 = vmatpush.bf16.msra.mxu0 %v219
      %275 = vmatmul.bf16.gmra.mxu0 %v138
      %v276 = vpop.f32.mrf.mxu0
      %v277 = vadd.f32 0.0, %v276
      %v278 = vpop.f32.mrf.mxu0
      %279 = vdwg.mxu0
      %280 = vmatpush.bf16.msra.mxu0 %v241
      %281 = vmatpush.bf16.msra.mxu0 %v238
      %282 = vmatpush.bf16.msra.mxu0 %v235
      %283 = vmatpush.bf16.msra.mxu0 %v232
      %284 = vmatpush.bf16.msra.mxu0 %v229
      %285 = vmatpush.bf16.msra.mxu0 %v226
      %286 = vmatpush.bf16.msra.mxu0 %v223
      %287 = vmatpush.bf16.msra.mxu0 %v220
      %288 = vmatmul.bf16.gmra.mxu0 %v138
      %v289 = vpop.f32.mrf.mxu0
      %v290 = vadd.f32 0.0, %v289
      %v291 = vpop.f32.mrf.mxu0
      %292 = vdwg.mxu0
      %293 = vmatpush.bf16.msra.mxu0 %v242
      %294 = vmatpush.bf16.msra.mxu0 %v239
      %295 = vmatpush.bf16.msra.mxu0 %v236
      %296 = vmatpush.bf16.msra.mxu0 %v233
      %297 = vmatpush.bf16.msra.mxu0 %v230
      %298 = vmatpush.bf16.msra.mxu0 %v227
      %299 = vmatpush.bf16.msra.mxu0 %v224
      %300 = vmatpush.bf16.msra.mxu0 %v221
      %301 = vmatmul.bf16.gmra.mxu0 %v138
      %v302 = vpop.f32.mrf.mxu0
      %v303 = vadd.f32 0.0, %v302
      %v304 = vpop.f32.mrf.mxu0
      %305 = vdwg.mxu0
      %v306 = vadd.f32 %v132, %v277
      %v307 = vxor.u32 %v306, 2147483648
      %v308 = vmul.f32 %v307, 1.442695
      %v309 = vpow.pop %v308
      %v310 = vadd.f32 %v309, 1.0
      %v311 = vrcp.pop %v310
      %v312 = vmul.f32 %v310, %v311
      %v313 = vsub.f32 1.0, %v312
      %v314 = vmul.f32 %v311, %v313
      %v315 = vadd.f32 %v311, %v314
      %vm316 = vweird.f32 %v310
      %vm317 = vweird.f32 %v311
      %vm318 = vmor %vm316, %vm317
      %v319 = vsel %vm318, %v311, %v315
      %v320 = vand.u32 2147483647, %v310
      %vm321 = vcmp.eq.f32.partialorder %v320, 8.507059e+37
      %v322 = vand.u32 %v310, 2147483648
      %v323 = vor.u32 1.1754944e-38, %v322
      %v324 = vsel %vm321, %v323, %v319
      %v325 = vmul.f32 1.0, %v324
      %v326 = vadd.f32 %v133, %v290
      %v327 = vxor.u32 %v326, 2147483648
      %v328 = vmul.f32 %v327, 1.442695
      %v329 = vpow.pop %v328
      %v330 = vadd.f32 %v329, 1.0
      %v331 = vrcp.pop %v330
      %v332 = vmul.f32 %v330, %v331
      %v333 = vsub.f32 1.0, %v332
      %v334 = vmul.f32 %v331, %v333
      %v335 = vadd.f32 %v331, %v334
      %vm336 = vweird.f32 %v330
      %vm337 = vweird.f32 %v331
      %vm338 = vmor %vm336, %vm337
      %v339 = vsel %vm338, %v331, %v335
      %v340 = vand.u32 2147483647, %v330
      %vm341 = vcmp.eq.f32.partialorder %v340, 8.507059e+37
      %v342 = vand.u32 %v330, 2147483648
      %v343 = vor.u32 1.1754944e-38, %v342
      %v344 = vsel %vm341, %v343, %v339
      %v345 = vmul.f32 1.0, %v344
      %v346 = vadd.f32 %v303, %v119
      %v347 = vmul.f32 %v325, %v346
      %v348 = vadd.f32 %v134, %v347
      %v349 = vtanh.pop %v348
      %v350 = vsub.f32 1.0, %v345
      %v351 = vmul.f32 %v350, %v349
      %v352 = vmul.f32 %v345, %v126
      %v353 = vadd.f32 %v351, %v352
      %vm354 = vcmp.gt.s32.totalorder %v124, 0
      %v355 = vsel %vm354, 1, 0
      %356 = vset.pattern.permute.xlu0 0
      %357 = vperm.xlu0 %356, %v355
      %v358 = vpop.permute.xlu0 %357
      %vm359 = vcmp.eq.s32.totalorder %v358, 1
      %v360 = vsel %vm359, %v353, %v126
      %v361 = vpack.c.bf16 %v127, %v127
      %362 = vmatpush.bf16.msra.mxu0 %v240
      %363 = vmatpush.bf16.msra.mxu0 %v237
      %364 = vmatpush.bf16.msra.mxu0 %v234
      %365 = vmatpush.bf16.msra.mxu0 %v231
      %366 = vmatpush.bf16.msra.mxu0 %v228
      %367 = vmatpush.bf16.msra.mxu0 %v225
      %368 = vmatpush.bf16.msra.mxu0 %v222
      %369 = vmatpush.bf16.msra.mxu0 %v219
      %370 = vmatmul.bf16.gmra.mxu0 %v361
      %v371 = vpop.f32.mrf.mxu0
      %v372 = vadd.f32 0.0, %v371
      %v373 = vpop.f32.mrf.mxu0
      %374 = vdwg.mxu0
      %375 = vmatpush.bf16.msra.mxu0 %v241
      %376 = vmatpush.bf16.msra.mxu0 %v238
      %377 = vmatpush.bf16.msra.mxu0 %v235
      %378 = vmatpush.bf16.msra.mxu0 %v232
      %379 = vmatpush.bf16.msra.mxu0 %v229
      %380 = vmatpush.bf16.msra.mxu0 %v226
      %381 = vmatpush.bf16.msra.mxu0 %v223
      %382 = vmatpush.bf16.msra.mxu0 %v220
      %383 = vmatmul.bf16.gmra.mxu0 %v361
      %v384 = vpop.f32.mrf.mxu0
      %v385 = vadd.f32 0.0, %v384
      %v386 = vpop.f32.mrf.mxu0
      %387 = vdwg.mxu0
      %388 = vmatpush.bf16.msra.mxu0 %v242
      %389 = vmatpush.bf16.msra.mxu0 %v239
      %390 = vmatpush.bf16.msra.mxu0 %v236
      %391 = vmatpush.bf16.msra.mxu0 %v233
      %392 = vmatpush.bf16.msra.mxu0 %v230
      %393 = vmatpush.bf16.msra.mxu0 %v227
      %394 = vmatpush.bf16.msra.mxu0 %v224
      %395 = vmatpush.bf16.msra.mxu0 %v221
      %396 = vmatmul.bf16.gmra.mxu0 %v361
      %v397 = vpop.f32.mrf.mxu0
      %v398 = vadd.f32 0.0, %v397
      %v399 = vpop.f32.mrf.mxu0
      %400 = vdwg.mxu0
      %v401 = vadd.f32 %v135, %v372
      %v402 = vxor.u32 %v401, 2147483648
      %v403 = vmul.f32 %v402, 1.442695
      %v404 = vpow.pop %v403
      %v405 = vadd.f32 %v404, 1.0
      %v406 = vrcp.pop %v405
      %v407 = vmul.f32 %v405, %v406
      %v408 = vsub.f32 1.0, %v407
      %v409 = vmul.f32 %v406, %v408
      %v410 = vadd.f32 %v406, %v409
      %vm411 = vweird.f32 %v405
      %vm412 = vweird.f32 %v406
      %vm413 = vmor %vm411, %vm412
      %v414 = vsel %vm413, %v406, %v410
      %v415 = vand.u32 2147483647, %v405
      %vm416 = vcmp.eq.f32.partialorder %v415, 8.507059e+37
      %v417 = vand.u32 %v405, 2147483648
      %v418 = vor.u32 1.1754944e-38, %v417
      %v419 = vsel %vm416, %v418, %v414
      %v420 = vmul.f32 1.0, %v419
      %v421 = vadd.f32 %v136, %v385
      %v422 = vxor.u32 %v421, 2147483648
      %v423 = vmul.f32 %v422, 1.442695
      %v424 = vpow.pop %v423
      %v425 = vadd.f32 %v424, 1.0
      %v426 = vrcp.pop %v425
      %v427 = vmul.f32 %v425, %v426
      %v428 = vsub.f32 1.0, %v427
      %v429 = vmul.f32 %v426, %v428
      %v430 = vadd.f32 %v426, %v429
      %vm431 = vweird.f32 %v425
      %vm432 = vweird.f32 %v426
      %vm433 = vmor %vm431, %vm432
      %v434 = vsel %vm433, %v426, %v430
      %v435 = vand.u32 2147483647, %v425
      %vm436 = vcmp.eq.f32.partialorder %v435, 8.507059e+37
      %v437 = vand.u32 %v425, 2147483648
      %v438 = vor.u32 1.1754944e-38, %v437
      %v439 = vsel %vm436, %v438, %v434
      %v440 = vmul.f32 1.0, %v439
      %v441 = vadd.f32 %v398, %v119
      %v442 = vmul.f32 %v420, %v441
      %v443 = vadd.f32 %v137, %v442
      %v444 = vtanh.pop %v443
      %v445 = vsub.f32 1.0, %v440
      %v446 = vmul.f32 %v445, %v444
      %v447 = vmul.f32 %v440, %v127
      %v448 = vadd.f32 %v446, %v447
      %vm449 = vcmp.gt.s32.totalorder %v125, 0
      %v450 = vsel %vm449, 1, 0
      %451 = vset.pattern.permute.xlu0 0
      %452 = vperm.xlu0 %451, %v450
      %v453 = vpop.permute.xlu0 %452
      %vm454 = vcmp.eq.s32.totalorder %v453, 1
      %v455 = vsel %vm454, %v448, %v127
      %s456 = scalar_lea.vmem [#allocation5], 24
      %v457 = vld [vmem:[%s456] sm:$0xff]
      %v458 = vld [vmem:[%s456 + $0x8] sm:$0xf]
      %v459 = vld [vmem:[%s456 + $0xc] sm:$0xff]
      %v460 = vld [vmem:[%s456 + $0x14] sm:$0xf]
      %v461 = vunpack.c.l.bf16 %v457
      %v462 = vunpack.c.h.bf16 %v457
      %v463 = vunpack.c.l.bf16 %v458
      %v464 = vunpack.c.l.bf16 %v459
      %v465 = vunpack.c.h.bf16 %v459
      %v466 = vunpack.c.l.bf16 %v460
      %v467 = vpack.c.bf16 %v360, %v360
      %468 = vmatpush.bf16.msra.mxu0 %v240
      %469 = vmatpush.bf16.msra.mxu0 %v237
      %470 = vmatpush.bf16.msra.mxu0 %v234
      %471 = vmatpush.bf16.msra.mxu0 %v231
      %472 = vmatpush.bf16.msra.mxu0 %v228
      %473 = vmatpush.bf16.msra.mxu0 %v225
      %474 = vmatpush.bf16.msra.mxu0 %v222
      %475 = vmatpush.bf16.msra.mxu0 %v219
      %476 = vmatmul.bf16.gmra.mxu0 %v467
      %v477 = vpop.f32.mrf.mxu0
      %v478 = vadd.f32 0.0, %v477
      %v479 = vpop.f32.mrf.mxu0
      %480 = vdwg.mxu0
      %481 = vmatpush.bf16.msra.mxu0 %v241
      %482 = vmatpush.bf16.msra.mxu0 %v238
      %483 = vmatpush.bf16.msra.mxu0 %v235
      %484 = vmatpush.bf16.msra.mxu0 %v232
      %485 = vmatpush.bf16.msra.mxu0 %v229
      %486 = vmatpush.bf16.msra.mxu0 %v226
      %487 = vmatpush.bf16.msra.mxu0 %v223
      %488 = vmatpush.bf16.msra.mxu0 %v220
      %489 = vmatmul.bf16.gmra.mxu0 %v467
      %v490 = vpop.f32.mrf.mxu0
      %v491 = vadd.f32 0.0, %v490
      %v492 = vpop.f32.mrf.mxu0
      %493 = vdwg.mxu0
      %494 = vmatpush.bf16.msra.mxu0 %v242
      %495 = vmatpush.bf16.msra.mxu0 %v239
      %496 = vmatpush.bf16.msra.mxu0 %v236
      %497 = vmatpush.bf16.msra.mxu0 %v233
      %498 = vmatpush.bf16.msra.mxu0 %v230
      %499 = vmatpush.bf16.msra.mxu0 %v227
      %500 = vmatpush.bf16.msra.mxu0 %v224
      %501 = vmatpush.bf16.msra.mxu0 %v221
      %502 = vmatmul.bf16.gmra.mxu0 %v467
      %v503 = vpop.f32.mrf.mxu0
      %v504 = vadd.f32 0.0, %v503
      %v505 = vpop.f32.mrf.mxu0
      %506 = vdwg.mxu0
      %v507 = vadd.f32 %v461, %v478
      %v508 = vxor.u32 %v507, 2147483648
      %v509 = vmul.f32 %v508, 1.442695
      %v510 = vpow.pop %v509
      %v511 = vadd.f32 %v510, 1.0
      %v512 = vrcp.pop %v511
      %v513 = vmul.f32 %v511, %v512
      %v514 = vsub.f32 1.0, %v513
      %v515 = vmul.f32 %v512, %v514
      %v516 = vadd.f32 %v512, %v515
      %vm517 = vweird.f32 %v511
      %vm518 = vweird.f32 %v512
      %vm519 = vmor %vm517, %vm518
      %v520 = vsel %vm519, %v512, %v516
      %v521 = vand.u32 2147483647, %v511
      %vm522 = vcmp.eq.f32.partialorder %v521, 8.507059e+37
      %v523 = vand.u32 %v511, 2147483648
      %v524 = vor.u32 1.1754944e-38, %v523
      %v525 = vsel %vm522, %v524, %v520
      %v526 = vmul.f32 1.0, %v525
      %v527 = vadd.f32 %v462, %v491
      %v528 = vxor.u32 %v527, 2147483648
      %v529 = vmul.f32 %v528, 1.442695
      %v530 = vpow.pop %v529
      %v531 = vadd.f32 %v530, 1.0
      %v532 = vrcp.pop %v531
      %v533 = vmul.f32 %v531, %v532
      %v534 = vsub.f32 1.0, %v533
      %v535 = vmul.f32 %v532, %v534
      %v536 = vadd.f32 %v532, %v535
      %vm537 = vweird.f32 %v531
      %vm538 = vweird.f32 %v532
      %vm539 = vmor %vm537, %vm538
      %v540 = vsel %vm539, %v532, %v536
      %v541 = vand.u32 2147483647, %v531
      %vm542 = vcmp.eq.f32.partialorder %v541, 8.507059e+37
      %v543 = vand.u32 %v531, 2147483648
      %v544 = vor.u32 1.1754944e-38, %v543
      %v545 = vsel %vm542, %v544, %v540
      %v546 = vmul.f32 1.0, %v545
      %v547 = vadd.f32 %v504, %v119
      %v548 = vmul.f32 %v526, %v547
      %v549 = vadd.f32 %v463, %v548
      %v550 = vtanh.pop %v549
      %v551 = vsub.f32 1.0, %v546
      %v552 = vmul.f32 %v551, %v550
      %v553 = vmul.f32 %v546, %v360
      %v554 = vadd.f32 %v552, %v553
      %vm555 = vcmp.gt.s32.totalorder %v124, 1
      %v556 = vsel %vm555, 1, 0
      %557 = vset.pattern.permute.xlu0 0
      %558 = vperm.xlu0 %557, %v556
      %v559 = vpop.permute.xlu0 %558
      %vm560 = vcmp.eq.s32.totalorder %v559, 1
      %v561 = vsel %vm560, %v554, %v360
      %v562 = vpack.c.bf16 %v455, %v455
      %563 = vmatpush.bf16.msra.mxu0 %v240
      %564 = vmatpush.bf16.msra.mxu0 %v237
      %565 = vmatpush.bf16.msra.mxu0 %v234
      %566 = vmatpush.bf16.msra.mxu0 %v231
      %567 = vmatpush.bf16.msra.mxu0 %v228
      %568 = vmatpush.bf16.msra.mxu0 %v225
      %569 = vmatpush.bf16.msra.mxu0 %v222
      %570 = vmatpush.bf16.msra.mxu0 %v219
      %571 = vmatmul.bf16.gmra.mxu0 %v562
      %v572 = vpop.f32.mrf.mxu0
      %v573 = vadd.f32 0.0, %v572
      %v574 = vpop.f32.mrf.mxu0
      %575 = vdwg.mxu0
      %576 = vmatpush.bf16.msra.mxu0 %v241
      %577 = vmatpush.bf16.msra.mxu0 %v238
      %578 = vmatpush.bf16.msra.mxu0 %v235
      %579 = vmatpush.bf16.msra.mxu0 %v232
      %580 = vmatpush.bf16.msra.mxu0 %v229
      %581 = vmatpush.bf16.msra.mxu0 %v226
      %582 = vmatpush.bf16.msra.mxu0 %v223
      %583 = vmatpush.bf16.msra.mxu0 %v220
      %584 = vmatmul.bf16.gmra.mxu0 %v562
      %v585 = vpop.f32.mrf.mxu0
      %v586 = vadd.f32 0.0, %v585
      %v587 = vpop.f32.mrf.mxu0
      %588 = vdwg.mxu0
      %589 = vmatpush.bf16.msra.mxu0 %v242
      %590 = vmatpush.bf16.msra.mxu0 %v239
      %591 = vmatpush.bf16.msra.mxu0 %v236
      %592 = vmatpush.bf16.msra.mxu0 %v233
      %593 = vmatpush.bf16.msra.mxu0 %v230
      %594 = vmatpush.bf16.msra.mxu0 %v227
      %595 = vmatpush.bf16.msra.mxu0 %v224
      %596 = vmatpush.bf16.msra.mxu0 %v221
      %597 = vmatmul.bf16.gmra.mxu0 %v562
      %v598 = vpop.f32.mrf.mxu0
      %v599 = vadd.f32 0.0, %v598
      %v600 = vpop.f32.mrf.mxu0
      %601 = vdwg.mxu0
      %v602 = vadd.f32 %v464, %v573
      %v603 = vxor.u32 %v602, 2147483648
      %v604 = vmul.f32 %v603, 1.442695
      %v605 = vpow.pop %v604
      %v606 = vadd.f32 %v605, 1.0
      %v607 = vrcp.pop %v606
      %v608 = vmul.f32 %v606, %v607
      %v609 = vsub.f32 1.0, %v608
      %v610 = vmul.f32 %v607, %v609
      %v611 = vadd.f32 %v607, %v610
      %vm612 = vweird.f32 %v606
      %vm613 = vweird.f32 %v607
      %vm614 = vmor %vm612, %vm613
      %v615 = vsel %vm614, %v607, %v611
      %v616 = vand.u32 2147483647, %v606
      %vm617 = vcmp.eq.f32.partialorder %v616, 8.507059e+37
      %v618 = vand.u32 %v606, 2147483648
      %v619 = vor.u32 1.1754944e-38, %v618
      %v620 = vsel %vm617, %v619, %v615
      %v621 = vmul.f32 1.0, %v620
      %v622 = vadd.f32 %v465, %v586
      %v623 = vxor.u32 %v622, 2147483648
      %v624 = vmul.f32 %v623, 1.442695
      %v625 = vpow.pop %v624
      %v626 = vadd.f32 %v625, 1.0
      %v627 = vrcp.pop %v626
      %v628 = vmul.f32 %v626, %v627
      %v629 = vsub.f32 1.0, %v628
      %v630 = vmul.f32 %v627, %v629
      %v631 = vadd.f32 %v627, %v630
      %vm632 = vweird.f32 %v626
      %vm633 = vweird.f32 %v627
      %vm634 = vmor %vm632, %vm633
      %v635 = vsel %vm634, %v627, %v631
      %v636 = vand.u32 2147483647, %v626
      %vm637 = vcmp.eq.f32.partialorder %v636, 8.507059e+37
      %v638 = vand.u32 %v626, 2147483648
      %v639 = vor.u32 1.1754944e-38, %v638
      %v640 = vsel %vm637, %v639, %v635
      %v641 = vmul.f32 1.0, %v640
      %v642 = vadd.f32 %v599, %v119
      %v643 = vmul.f32 %v621, %v642
      %v644 = vadd.f32 %v466, %v643
      %v645 = vtanh.pop %v644
      %v646 = vsub.f32 1.0, %v641
      %v647 = vmul.f32 %v646, %v645
      %v648 = vmul.f32 %v641, %v455
      %v649 = vadd.f32 %v647, %v648
      %vm650 = vcmp.gt.s32.totalorder %v125, 1
      %v651 = vsel %vm650, 1, 0
      %652 = vset.pattern.permute.xlu0 0
      %653 = vperm.xlu0 %652, %v651
      %v654 = vpop.permute.xlu0 %653
      %vm655 = vcmp.eq.s32.totalorder %v654, 1
      %v656 = vsel %vm655, %v649, %v455
      %s657 = scalar_lea.vmem [#allocation5], 48
      %v658 = vld [vmem:[%s657] sm:$0xff]
      %v659 = vld [vmem:[%s657 + $0x8] sm:$0xf]
      %v660 = vld [vmem:[%s657 + $0xc] sm:$0xff]
      %v661 = vld [vmem:[%s657 + $0x14] sm:$0xf]
      %v662 = vunpack.c.l.bf16 %v658
      %v663 = vunpack.c.h.bf16 %v658
      %v664 = vunpack.c.l.bf16 %v659
      %v665 = vunpack.c.l.bf16 %v660
      %v666 = vunpack.c.h.bf16 %v660
      %v667 = vunpack.c.l.bf16 %v661
      %v668 = vpack.c.bf16 %v561, %v561
      %669 = vmatpush.bf16.msra.mxu0 %v240
      %670 = vmatpush.bf16.msra.mxu0 %v237
      %671 = vmatpush.bf16.msra.mxu0 %v234
      %672 = vmatpush.bf16.msra.mxu0 %v231
      %673 = vmatpush.bf16.msra.mxu0 %v228
      %674 = vmatpush.bf16.msra.mxu0 %v225
      %675 = vmatpush.bf16.msra.mxu0 %v222
      %676 = vmatpush.bf16.msra.mxu0 %v219
      %677 = vmatmul.bf16.gmra.mxu0 %v668
      %v678 = vpop.f32.mrf.mxu0
      %v679 = vadd.f32 0.0, %v678
      %v680 = vpop.f32.mrf.mxu0
      %681 = vdwg.mxu0
      %682 = vmatpush.bf16.msra.mxu0 %v241
      %683 = vmatpush.bf16.msra.mxu0 %v238
      %684 = vmatpush.bf16.msra.mxu0 %v235
      %685 = vmatpush.bf16.msra.mxu0 %v232
      %686 = vmatpush.bf16.msra.mxu0 %v229
      %687 = vmatpush.bf16.msra.mxu0 %v226
      %688 = vmatpush.bf16.msra.mxu0 %v223
      %689 = vmatpush.bf16.msra.mxu0 %v220
      %690 = vmatmul.bf16.gmra.mxu0 %v668
      %v691 = vpop.f32.mrf.mxu0
      %v692 = vadd.f32 0.0, %v691
      %v693 = vpop.f32.mrf.mxu0
      %694 = vdwg.mxu0
      %695 = vmatpush.bf16.msra.mxu0 %v242
      %696 = vmatpush.bf16.msra.mxu0 %v239
      %697 = vmatpush.bf16.msra.mxu0 %v236
      %698 = vmatpush.bf16.msra.mxu0 %v233
      %699 = vmatpush.bf16.msra.mxu0 %v230
      %700 = vmatpush.bf16.msra.mxu0 %v227
      %701 = vmatpush.bf16.msra.mxu0 %v224
      %702 = vmatpush.bf16.msra.mxu0 %v221
      %703 = vmatmul.bf16.gmra.mxu0 %v668
      %v704 = vpop.f32.mrf.mxu0
      %v705 = vadd.f32 0.0, %v704
      %v706 = vpop.f32.mrf.mxu0
      %707 = vdwg.mxu0
      %v708 = vadd.f32 %v662, %v679
      %v709 = vxor.u32 %v708, 2147483648
      %v710 = vmul.f32 %v709, 1.442695
      %v711 = vpow.pop %v710
      %v712 = vadd.f32 %v711, 1.0
      %v713 = vrcp.pop %v712
      %v714 = vmul.f32 %v712, %v713
      %v715 = vsub.f32 1.0, %v714
      %v716 = vmul.f32 %v713, %v715
      %v717 = vadd.f32 %v713, %v716
      %vm718 = vweird.f32 %v712
      %vm719 = vweird.f32 %v713
      %vm720 = vmor %vm718, %vm719
      %v721 = vsel %vm720, %v713, %v717
      %v722 = vand.u32 2147483647, %v712
      %vm723 = vcmp.eq.f32.partialorder %v722, 8.507059e+37
      %v724 = vand.u32 %v712, 2147483648
      %v725 = vor.u32 1.1754944e-38, %v724
      %v726 = vsel %vm723, %v725, %v721
      %v727 = vmul.f32 1.0, %v726
      %v728 = vadd.f32 %v663, %v692
      %v729 = vxor.u32 %v728, 2147483648
      %v730 = vmul.f32 %v729, 1.442695
      %v731 = vpow.pop %v730
      %v732 = vadd.f32 %v731, 1.0
      %v733 = vrcp.pop %v732
      %v734 = vmul.f32 %v732, %v733
      %v735 = vsub.f32 1.0, %v734
      %v736 = vmul.f32 %v733, %v735
      %v737 = vadd.f32 %v733, %v736
      %vm738 = vweird.f32 %v732
      %vm739 = vweird.f32 %v733
      %vm740 = vmor %vm738, %vm739
      %v741 = vsel %vm740, %v733, %v737
      %v742 = vand.u32 2147483647, %v732
      %vm743 = vcmp.eq.f32.partialorder %v742, 8.507059e+37
      %v744 = vand.u32 %v732, 2147483648
      %v745 = vor.u32 1.1754944e-38, %v744
      %v746 = vsel %vm743, %v745, %v741
      %v747 = vmul.f32 1.0, %v746
      %v748 = vadd.f32 %v705, %v119
      %v749 = vmul.f32 %v727, %v748
      %v750 = vadd.f32 %v664, %v749
      %v751 = vtanh.pop %v750
      %v752 = vsub.f32 1.0, %v747
      %v753 = vmul.f32 %v752, %v751
      %v754 = vmul.f32 %v747, %v561
      %v755 = vadd.f32 %v753, %v754
      %vm756 = vcmp.gt.s32.totalorder %v124, 2
      %v757 = vsel %vm756, 1, 0
      %758 = vset.pattern.permute.xlu0 0
      %759 = vperm.xlu0 %758, %v757
      %v760 = vpop.permute.xlu0 %759
      %vm761 = vcmp.eq.s32.totalorder %v760, 1
      %v762 = vsel %vm761, %v755, %v561
      %v763 = vpack.c.bf16 %v656, %v656
      %764 = vmatpush.bf16.msra.mxu0 %v240
      %765 = vmatpush.bf16.msra.mxu0 %v237
      %766 = vmatpush.bf16.msra.mxu0 %v234
      %767 = vmatpush.bf16.msra.mxu0 %v231
      %768 = vmatpush.bf16.msra.mxu0 %v228
      %769 = vmatpush.bf16.msra.mxu0 %v225
      %770 = vmatpush.bf16.msra.mxu0 %v222
      %771 = vmatpush.bf16.msra.mxu0 %v219
      %772 = vmatmul.bf16.gmra.mxu0 %v763
      %v773 = vpop.f32.mrf.mxu0
      %v774 = vadd.f32 0.0, %v773
      %v775 = vpop.f32.mrf.mxu0
      %776 = vdwg.mxu0
      %777 = vmatpush.bf16.msra.mxu0 %v241
      %778 = vmatpush.bf16.msra.mxu0 %v238
      %779 = vmatpush.bf16.msra.mxu0 %v235
      %780 = vmatpush.bf16.msra.mxu0 %v232
      %781 = vmatpush.bf16.msra.mxu0 %v229
      %782 = vmatpush.bf16.msra.mxu0 %v226
      %783 = vmatpush.bf16.msra.mxu0 %v223
      %784 = vmatpush.bf16.msra.mxu0 %v220
      %785 = vmatmul.bf16.gmra.mxu0 %v763
      %v786 = vpop.f32.mrf.mxu0
      %v787 = vadd.f32 0.0, %v786
      %v788 = vpop.f32.mrf.mxu0
      %789 = vdwg.mxu0
      %790 = vmatpush.bf16.msra.mxu0 %v242
      %791 = vmatpush.bf16.msra.mxu0 %v239
      %792 = vmatpush.bf16.msra.mxu0 %v236
      %793 = vmatpush.bf16.msra.mxu0 %v233
      %794 = vmatpush.bf16.msra.mxu0 %v230
      %795 = vmatpush.bf16.msra.mxu0 %v227
      %796 = vmatpush.bf16.msra.mxu0 %v224
      %797 = vmatpush.bf16.msra.mxu0 %v221
      %798 = vmatmul.bf16.gmra.mxu0 %v763
      %v799 = vpop.f32.mrf.mxu0
      %v800 = vadd.f32 0.0, %v799
      %v801 = vpop.f32.mrf.mxu0
      %802 = vdwg.mxu0
      %v803 = vadd.f32 %v665, %v774
      %v804 = vxor.u32 %v803, 2147483648
      %v805 = vmul.f32 %v804, 1.442695
      %v806 = vpow.pop %v805
      %v807 = vadd.f32 %v806, 1.0
      %v808 = vrcp.pop %v807
      %v809 = vmul.f32 %v807, %v808
      %v810 = vsub.f32 1.0, %v809
      %v811 = vmul.f32 %v808, %v810
      %v812 = vadd.f32 %v808, %v811
      %vm813 = vweird.f32 %v807
      %vm814 = vweird.f32 %v808
      %vm815 = vmor %vm813, %vm814
      %v816 = vsel %vm815, %v808, %v812
      %v817 = vand.u32 2147483647, %v807
      %vm818 = vcmp.eq.f32.partialorder %v817, 8.507059e+37
      %v819 = vand.u32 %v807, 2147483648
      %v820 = vor.u32 1.1754944e-38, %v819
      %v821 = vsel %vm818, %v820, %v816
      %v822 = vmul.f32 1.0, %v821
      %v823 = vadd.f32 %v666, %v787
      %v824 = vxor.u32 %v823, 2147483648
      %v825 = vmul.f32 %v824, 1.442695
      %v826 = vpow.pop %v825
      %v827 = vadd.f32 %v826, 1.0
      %v828 = vrcp.pop %v827
      %v829 = vmul.f32 %v827, %v828
      %v830 = vsub.f32 1.0, %v829
      %v831 = vmul.f32 %v828, %v830
      %v832 = vadd.f32 %v828, %v831
      %vm833 = vweird.f32 %v827
      %vm834 = vweird.f32 %v828
      %vm835 = vmor %vm833, %vm834
      %v836 = vsel %vm835, %v828, %v832
      %v837 = vand.u32 2147483647, %v827
      %vm838 = vcmp.eq.f32.partialorder %v837, 8.507059e+37
      %v839 = vand.u32 %v827, 2147483648
      %v840 = vor.u32 1.1754944e-38, %v839
      %v841 = vsel %vm838, %v840, %v836
      %v842 = vmul.f32 1.0, %v841
      %v843 = vadd.f32 %v800, %v119
      %v844 = vmul.f32 %v822, %v843
      %v845 = vadd.f32 %v667, %v844
      %v846 = vtanh.pop %v845
      %v847 = vsub.f32 1.0, %v842
      %v848 = vmul.f32 %v847, %v846
      %v849 = vmul.f32 %v842, %v656
      %v850 = vadd.f32 %v848, %v849
      %vm851 = vcmp.gt.s32.totalorder %v125, 2
      %v852 = vsel %vm851, 1, 0
      %853 = vset.pattern.permute.xlu0 0
      %854 = vperm.xlu0 %853, %v852
      %v855 = vpop.permute.xlu0 %854
      %vm856 = vcmp.eq.s32.totalorder %v855, 1
      %v857 = vsel %vm856, %v850, %v656
      %s858 = scalar_lea.vmem [#allocation5], 72
      %v859 = vld [vmem:[%s858] sm:$0xff]
      %v860 = vld [vmem:[%s858 + $0x8] sm:$0xf]
      %v861 = vld [vmem:[%s858 + $0xc] sm:$0xff]
      %v862 = vld [vmem:[%s858 + $0x14] sm:$0xf]
      %v863 = vunpack.c.l.bf16 %v859
      %v864 = vunpack.c.h.bf16 %v859
      %v865 = vunpack.c.l.bf16 %v860
      %v866 = vunpack.c.l.bf16 %v861
      %v867 = vunpack.c.h.bf16 %v861
      %v868 = vunpack.c.l.bf16 %v862
      %v869 = vpack.c.bf16 %v762, %v762
      %870 = vmatpush.bf16.msra.mxu0 %v240
      %871 = vmatpush.bf16.msra.mxu0 %v237
      %872 = vmatpush.bf16.msra.mxu0 %v234
      %873 = vmatpush.bf16.msra.mxu0 %v231
      %874 = vmatpush.bf16.msra.mxu0 %v228
      %875 = vmatpush.bf16.msra.mxu0 %v225
      %876 = vmatpush.bf16.msra.mxu0 %v222
      %877 = vmatpush.bf16.msra.mxu0 %v219
      %878 = vmatmul.bf16.gmra.mxu0 %v869
      %v879 = vpop.f32.mrf.mxu0
      %v880 = vadd.f32 0.0, %v879
      %v881 = vpop.f32.mrf.mxu0
      %882 = vdwg.mxu0
      %883 = vmatpush.bf16.msra.mxu0 %v241
      %884 = vmatpush.bf16.msra.mxu0 %v238
      %885 = vmatpush.bf16.msra.mxu0 %v235
      %886 = vmatpush.bf16.msra.mxu0 %v232
      %887 = vmatpush.bf16.msra.mxu0 %v229
      %888 = vmatpush.bf16.msra.mxu0 %v226
      %889 = vmatpush.bf16.msra.mxu0 %v223
      %890 = vmatpush.bf16.msra.mxu0 %v220
      %891 = vmatmul.bf16.gmra.mxu0 %v869
      %v892 = vpop.f32.mrf.mxu0
      %v893 = vadd.f32 0.0, %v892
      %v894 = vpop.f32.mrf.mxu0
      %895 = vdwg.mxu0
      %896 = vmatpush.bf16.msra.mxu0 %v242
      %897 = vmatpush.bf16.msra.mxu0 %v239
      %898 = vmatpush.bf16.msra.mxu0 %v236
      %899 = vmatpush.bf16.msra.mxu0 %v233
      %900 = vmatpush.bf16.msra.mxu0 %v230
      %901 = vmatpush.bf16.msra.mxu0 %v227
      %902 = vmatpush.bf16.msra.mxu0 %v224
      %903 = vmatpush.bf16.msra.mxu0 %v221
      %904 = vmatmul.bf16.gmra.mxu0 %v869
      %v905 = vpop.f32.mrf.mxu0
      %v906 = vadd.f32 0.0, %v905
      %v907 = vpop.f32.mrf.mxu0
      %908 = vdwg.mxu0
      %v909 = vadd.f32 %v863, %v880
      %v910 = vxor.u32 %v909, 2147483648
      %v911 = vmul.f32 %v910, 1.442695
      %v912 = vpow.pop %v911
      %v913 = vadd.f32 %v912, 1.0
      %v914 = vrcp.pop %v913
      %v915 = vmul.f32 %v913, %v914
      %v916 = vsub.f32 1.0, %v915
      %v917 = vmul.f32 %v914, %v916
      %v918 = vadd.f32 %v914, %v917
      %vm919 = vweird.f32 %v913
      %vm920 = vweird.f32 %v914
      %vm921 = vmor %vm919, %vm920
      %v922 = vsel %vm921, %v914, %v918
      %v923 = vand.u32 2147483647, %v913
      %vm924 = vcmp.eq.f32.partialorder %v923, 8.507059e+37
      %v925 = vand.u32 %v913, 2147483648
      %v926 = vor.u32 1.1754944e-38, %v925
      %v927 = vsel %vm924, %v926, %v922
      %v928 = vmul.f32 1.0, %v927
      %v929 = vadd.f32 %v864, %v893
      %v930 = vxor.u32 %v929, 2147483648
      %v931 = vmul.f32 %v930, 1.442695
      %v932 = vpow.pop %v931
      %v933 = vadd.f32 %v932, 1.0
      %v934 = vrcp.pop %v933
      %v935 = vmul.f32 %v933, %v934
      %v936 = vsub.f32 1.0, %v935
      %v937 = vmul.f32 %v934, %v936
      %v938 = vadd.f32 %v934, %v937
      %vm939 = vweird.f32 %v933
      %vm940 = vweird.f32 %v934
      %vm941 = vmor %vm939, %vm940
      %v942 = vsel %vm941, %v934, %v938
      %v943 = vand.u32 2147483647, %v933
      %vm944 = vcmp.eq.f32.partialorder %v943, 8.507059e+37
      %v945 = vand.u32 %v933, 2147483648
      %v946 = vor.u32 1.1754944e-38, %v945
      %v947 = vsel %vm944, %v946, %v942
      %v948 = vmul.f32 1.0, %v947
      %v949 = vadd.f32 %v906, %v119
      %v950 = vmul.f32 %v928, %v949
      %v951 = vadd.f32 %v865, %v950
      %v952 = vtanh.pop %v951
      %v953 = vsub.f32 1.0, %v948
      %v954 = vmul.f32 %v953, %v952
      %v955 = vmul.f32 %v948, %v762
      %v956 = vadd.f32 %v954, %v955
      %vm957 = vcmp.gt.s32.totalorder %v124, 3
      %v958 = vsel %vm957, 1, 0
      %959 = vset.pattern.permute.xlu0 0
      %960 = vperm.xlu0 %959, %v958
      %v961 = vpop.permute.xlu0 %960
      %vm962 = vcmp.eq.s32.totalorder %v961, 1
      %v963 = vsel %vm962, %v956, %v762
      %v964 = vpack.c.bf16 %v857, %v857
      %965 = vmatpush.bf16.msra.mxu0 %v240
      %966 = vmatpush.bf16.msra.mxu0 %v237
      %967 = vmatpush.bf16.msra.mxu0 %v234
      %968 = vmatpush.bf16.msra.mxu0 %v231
      %969 = vmatpush.bf16.msra.mxu0 %v228
      %970 = vmatpush.bf16.msra.mxu0 %v225
      %971 = vmatpush.bf16.msra.mxu0 %v222
      %972 = vmatpush.bf16.msra.mxu0 %v219
      %973 = vmatmul.bf16.gmra.mxu0 %v964
      %v974 = vpop.f32.mrf.mxu0
      %v975 = vadd.f32 0.0, %v974
      %v976 = vpop.f32.mrf.mxu0
      %977 = vdwg.mxu0
      %978 = vmatpush.bf16.msra.mxu0 %v241
      %979 = vmatpush.bf16.msra.mxu0 %v238
      %980 = vmatpush.bf16.msra.mxu0 %v235
      %981 = vmatpush.bf16.msra.mxu0 %v232
      %982 = vmatpush.bf16.msra.mxu0 %v229
      %983 = vmatpush.bf16.msra.mxu0 %v226
      %984 = vmatpush.bf16.msra.mxu0 %v223
      %985 = vmatpush.bf16.msra.mxu0 %v220
      %986 = vmatmul.bf16.gmra.mxu0 %v964
      %v987 = vpop.f32.mrf.mxu0
      %v988 = vadd.f32 0.0, %v987
      %v989 = vpop.f32.mrf.mxu0
      %990 = vdwg.mxu0
      %991 = vmatpush.bf16.msra.mxu0 %v242
      %992 = vmatpush.bf16.msra.mxu0 %v239
      %993 = vmatpush.bf16.msra.mxu0 %v236
      %994 = vmatpush.bf16.msra.mxu0 %v233
      %995 = vmatpush.bf16.msra.mxu0 %v230
      %996 = vmatpush.bf16.msra.mxu0 %v227
      %997 = vmatpush.bf16.msra.mxu0 %v224
      %998 = vmatpush.bf16.msra.mxu0 %v221
      %999 = vmatmul.bf16.gmra.mxu0 %v964
      %v1000 = vpop.f32.mrf.mxu0
      %v1001 = vadd.f32 0.0, %v1000
      %v1002 = vpop.f32.mrf.mxu0
      %1003 = vdwg.mxu0
      %v1004 = vadd.f32 %v866, %v975
      %v1005 = vxor.u32 %v1004, 2147483648
      %v1006 = vmul.f32 %v1005, 1.442695
      %v1007 = vpow.pop %v1006
      %v1008 = vadd.f32 %v1007, 1.0
      %v1009 = vrcp.pop %v1008
      %v1010 = vmul.f32 %v1008, %v1009
      %v1011 = vsub.f32 1.0, %v1010
      %v1012 = vmul.f32 %v1009, %v1011
      %v1013 = vadd.f32 %v1009, %v1012
      %vm1014 = vweird.f32 %v1008
      %vm1015 = vweird.f32 %v1009
      %vm1016 = vmor %vm1014, %vm1015
      %v1017 = vsel %vm1016, %v1009, %v1013
      %v1018 = vand.u32 2147483647, %v1008
      %vm1019 = vcmp.eq.f32.partialorder %v1018, 8.507059e+37
      %v1020 = vand.u32 %v1008, 2147483648
      %v1021 = vor.u32 1.1754944e-38, %v1020
      %v1022 = vsel %vm1019, %v1021, %v1017
      %v1023 = vmul.f32 1.0, %v1022
      %v1024 = vadd.f32 %v867, %v988
      %v1025 = vxor.u32 %v1024, 2147483648
      %v1026 = vmul.f32 %v1025, 1.442695
      %v1027 = vpow.pop %v1026
      %v1028 = vadd.f32 %v1027, 1.0
      %v1029 = vrcp.pop %v1028
      %v1030 = vmul.f32 %v1028, %v1029
      %v1031 = vsub.f32 1.0, %v1030
      %v1032 = vmul.f32 %v1029, %v1031
      %v1033 = vadd.f32 %v1029, %v1032
      %vm1034 = vweird.f32 %v1028
      %vm1035 = vweird.f32 %v1029
      %vm1036 = vmor %vm1034, %vm1035
      %v1037 = vsel %vm1036, %v1029, %v1033
      %v1038 = vand.u32 2147483647, %v1028
      %vm1039 = vcmp.eq.f32.partialorder %v1038, 8.507059e+37
      %v1040 = vand.u32 %v1028, 2147483648
      %v1041 = vor.u32 1.1754944e-38, %v1040
      %v1042 = vsel %vm1039, %v1041, %v1037
      %v1043 = vmul.f32 1.0, %v1042
      %v1044 = vadd.f32 %v1001, %v119
      %v1045 = vmul.f32 %v1023, %v1044
      %v1046 = vadd.f32 %v868, %v1045
      %v1047 = vtanh.pop %v1046
      %v1048 = vsub.f32 1.0, %v1043
      %v1049 = vmul.f32 %v1048, %v1047
      %v1050 = vmul.f32 %v1043, %v857
      %v1051 = vadd.f32 %v1049, %v1050
      %vm1052 = vcmp.gt.s32.totalorder %v125, 3
      %v1053 = vsel %vm1052, 1, 0
      %1054 = vset.pattern.permute.xlu0 0
      %1055 = vperm.xlu0 %1054, %v1053
      %v1056 = vpop.permute.xlu0 %1055
      %vm1057 = vcmp.eq.s32.totalorder %v1056, 1
      %v1058 = vsel %vm1057, %v1051, %v857
      %s1059 = scalar_lea.vmem [#allocation5], 96
      %v1060 = vld [vmem:[%s1059] sm:$0xff]
      %v1061 = vld [vmem:[%s1059 + $0x8] sm:$0xf]
      %v1062 = vld [vmem:[%s1059 + $0xc] sm:$0xff]
      %v1063 = vld [vmem:[%s1059 + $0x14] sm:$0xf]
      %v1064 = vunpack.c.l.bf16 %v1060
      %v1065 = vunpack.c.h.bf16 %v1060
      %v1066 = vunpack.c.l.bf16 %v1061
      %v1067 = vunpack.c.l.bf16 %v1062
      %v1068 = vunpack.c.h.bf16 %v1062
      %v1069 = vunpack.c.l.bf16 %v1063
      %v1070 = vpack.c.bf16 %v963, %v963
      %1071 = vmatpush.bf16.msra.mxu0 %v240
      %1072 = vmatpush.bf16.msra.mxu0 %v237
      %1073 = vmatpush.bf16.msra.mxu0 %v234
      %1074 = vmatpush.bf16.msra.mxu0 %v231
      %1075 = vmatpush.bf16.msra.mxu0 %v228
      %1076 = vmatpush.bf16.msra.mxu0 %v225
      %1077 = vmatpush.bf16.msra.mxu0 %v222
      %1078 = vmatpush.bf16.msra.mxu0 %v219
      %1079 = vmatmul.bf16.gmra.mxu0 %v1070
      %v1080 = vpop.f32.mrf.mxu0
      %v1081 = vadd.f32 0.0, %v1080
      %v1082 = vpop.f32.mrf.mxu0
      %1083 = vdwg.mxu0
      %1084 = vmatpush.bf16.msra.mxu0 %v241
      %1085 = vmatpush.bf16.msra.mxu0 %v238
      %1086 = vmatpush.bf16.msra.mxu0 %v235
      %1087 = vmatpush.bf16.msra.mxu0 %v232
      %1088 = vmatpush.bf16.msra.mxu0 %v229
      %1089 = vmatpush.bf16.msra.mxu0 %v226
      %1090 = vmatpush.bf16.msra.mxu0 %v223
      %1091 = vmatpush.bf16.msra.mxu0 %v220
      %1092 = vmatmul.bf16.gmra.mxu0 %v1070
      %v1093 = vpop.f32.mrf.mxu0
      %v1094 = vadd.f32 0.0, %v1093
      %v1095 = vpop.f32.mrf.mxu0
      %1096 = vdwg.mxu0
      %1097 = vmatpush.bf16.msra.mxu0 %v242
      %1098 = vmatpush.bf16.msra.mxu0 %v239
      %1099 = vmatpush.bf16.msra.mxu0 %v236
      %1100 = vmatpush.bf16.msra.mxu0 %v233
      %1101 = vmatpush.bf16.msra.mxu0 %v230
      %1102 = vmatpush.bf16.msra.mxu0 %v227
      %1103 = vmatpush.bf16.msra.mxu0 %v224
      %1104 = vmatpush.bf16.msra.mxu0 %v221
      %1105 = vmatmul.bf16.gmra.mxu0 %v1070
      %v1106 = vpop.f32.mrf.mxu0
      %v1107 = vadd.f32 0.0, %v1106
      %v1108 = vpop.f32.mrf.mxu0
      %1109 = vdwg.mxu0
      %v1110 = vadd.f32 %v1064, %v1081
      %v1111 = vxor.u32 %v1110, 2147483648
      %v1112 = vmul.f32 %v1111, 1.442695
      %v1113 = vpow.pop %v1112
      %v1114 = vadd.f32 %v1113, 1.0
      %v1115 = vrcp.pop %v1114
      %v1116 = vmul.f32 %v1114, %v1115
      %v1117 = vsub.f32 1.0, %v1116
      %v1118 = vmul.f32 %v1115, %v1117
      %v1119 = vadd.f32 %v1115, %v1118
      %vm1120 = vweird.f32 %v1114
      %vm1121 = vweird.f32 %v1115
      %vm1122 = vmor %vm1120, %vm1121
      %v1123 = vsel %vm1122, %v1115, %v1119
      %v1124 = vand.u32 2147483647, %v1114
      %vm1125 = vcmp.eq.f32.partialorder %v1124, 8.507059e+37
      %v1126 = vand.u32 %v1114, 2147483648
      %v1127 = vor.u32 1.1754944e-38, %v1126
      %v1128 = vsel %vm1125, %v1127, %v1123
      %v1129 = vmul.f32 1.0, %v1128
      %v1130 = vadd.f32 %v1065, %v1094
      %v1131 = vxor.u32 %v1130, 2147483648
      %v1132 = vmul.f32 %v1131, 1.442695
      %v1133 = vpow.pop %v1132
      %v1134 = vadd.f32 %v1133, 1.0
      %v1135 = vrcp.pop %v1134
      %v1136 = vmul.f32 %v1134, %v1135
      %v1137 = vsub.f32 1.0, %v1136
      %v1138 = vmul.f32 %v1135, %v1137
      %v1139 = vadd.f32 %v1135, %v1138
      %vm1140 = vweird.f32 %v1134
      %vm1141 = vweird.f32 %v1135
      %vm1142 = vmor %vm1140, %vm1141
      %v1143 = vsel %vm1142, %v1135, %v1139
      %v1144 = vand.u32 2147483647, %v1134
      %vm1145 = vcmp.eq.f32.partialorder %v1144, 8.507059e+37
      %v1146 = vand.u32 %v1134, 2147483648
      %v1147 = vor.u32 1.1754944e-38, %v1146
      %v1148 = vsel %vm1145, %v1147, %v1143
      %v1149 = vmul.f32 1.0, %v1148
      %v1150 = vadd.f32 %v1107, %v119
      %v1151 = vmul.f32 %v1129, %v1150
      %v1152 = vadd.f32 %v1066, %v1151
      %v1153 = vtanh.pop %v1152
      %v1154 = vsub.f32 1.0, %v1149
      %v1155 = vmul.f32 %v1154, %v1153
      %v1156 = vmul.f32 %v1149, %v963
      %v1157 = vadd.f32 %v1155, %v1156
      %vm1158 = vcmp.gt.s32.totalorder %v124, 4
      %v1159 = vsel %vm1158, 1, 0
      %1160 = vset.pattern.permute.xlu0 0
      %1161 = vperm.xlu0 %1160, %v1159
      %v1162 = vpop.permute.xlu0 %1161
      %vm1163 = vcmp.eq.s32.totalorder %v1162, 1
      %v1164 = vsel %vm1163, %v1157, %v963
      %v1165 = vpack.c.bf16 %v1058, %v1058
      %1166 = vmatpush.bf16.msra.mxu0 %v240
      %1167 = vmatpush.bf16.msra.mxu0 %v237
      %1168 = vmatpush.bf16.msra.mxu0 %v234
      %1169 = vmatpush.bf16.msra.mxu0 %v231
      %1170 = vmatpush.bf16.msra.mxu0 %v228
      %1171 = vmatpush.bf16.msra.mxu0 %v225
      %1172 = vmatpush.bf16.msra.mxu0 %v222
      %1173 = vmatpush.bf16.msra.mxu0 %v219
      %1174 = vmatmul.bf16.gmra.mxu0 %v1165
      %v1175 = vpop.f32.mrf.mxu0
      %v1176 = vadd.f32 0.0, %v1175
      %v1177 = vpop.f32.mrf.mxu0
      %1178 = vdwg.mxu0
      %1179 = vmatpush.bf16.msra.mxu0 %v241
      %1180 = vmatpush.bf16.msra.mxu0 %v238
      %1181 = vmatpush.bf16.msra.mxu0 %v235
      %1182 = vmatpush.bf16.msra.mxu0 %v232
      %1183 = vmatpush.bf16.msra.mxu0 %v229
      %1184 = vmatpush.bf16.msra.mxu0 %v226
      %1185 = vmatpush.bf16.msra.mxu0 %v223
      %1186 = vmatpush.bf16.msra.mxu0 %v220
      %1187 = vmatmul.bf16.gmra.mxu0 %v1165
      %v1188 = vpop.f32.mrf.mxu0
      %v1189 = vadd.f32 0.0, %v1188
      %v1190 = vpop.f32.mrf.mxu0
      %1191 = vdwg.mxu0
      %1192 = vmatpush.bf16.msra.mxu0 %v242
      %1193 = vmatpush.bf16.msra.mxu0 %v239
      %1194 = vmatpush.bf16.msra.mxu0 %v236
      %1195 = vmatpush.bf16.msra.mxu0 %v233
      %1196 = vmatpush.bf16.msra.mxu0 %v230
      %1197 = vmatpush.bf16.msra.mxu0 %v227
      %1198 = vmatpush.bf16.msra.mxu0 %v224
      %1199 = vmatpush.bf16.msra.mxu0 %v221
      %1200 = vmatmul.bf16.gmra.mxu0 %v1165
      %v1201 = vpop.f32.mrf.mxu0
      %v1202 = vadd.f32 0.0, %v1201
      %v1203 = vpop.f32.mrf.mxu0
      %1204 = vdwg.mxu0
      %v1205 = vadd.f32 %v1067, %v1176
      %v1206 = vxor.u32 %v1205, 2147483648
      %v1207 = vmul.f32 %v1206, 1.442695
      %v1208 = vpow.pop %v1207
      %v1209 = vadd.f32 %v1208, 1.0
      %v1210 = vrcp.pop %v1209
      %v1211 = vmul.f32 %v1209, %v1210
      %v1212 = vsub.f32 1.0, %v1211
      %v1213 = vmul.f32 %v1210, %v1212
      %v1214 = vadd.f32 %v1210, %v1213
      %vm1215 = vweird.f32 %v1209
      %vm1216 = vweird.f32 %v1210
      %vm1217 = vmor %vm1215, %vm1216
      %v1218 = vsel %vm1217, %v1210, %v1214
      %v1219 = vand.u32 2147483647, %v1209
      %vm1220 = vcmp.eq.f32.partialorder %v1219, 8.507059e+37
      %v1221 = vand.u32 %v1209, 2147483648
      %v1222 = vor.u32 1.1754944e-38, %v1221
      %v1223 = vsel %vm1220, %v1222, %v1218
      %v1224 = vmul.f32 1.0, %v1223
      %v1225 = vadd.f32 %v1068, %v1189
      %v1226 = vxor.u32 %v1225, 2147483648
      %v1227 = vmul.f32 %v1226, 1.442695
      %v1228 = vpow.pop %v1227
      %v1229 = vadd.f32 %v1228, 1.0
      %v1230 = vrcp.pop %v1229
      %v1231 = vmul.f32 %v1229, %v1230
      %v1232 = vsub.f32 1.0, %v1231
      %v1233 = vmul.f32 %v1230, %v1232
      %v1234 = vadd.f32 %v1230, %v1233
      %vm1235 = vweird.f32 %v1229
      %vm1236 = vweird.f32 %v1230
      %vm1237 = vmor %vm1235, %vm1236
      %v1238 = vsel %vm1237, %v1230, %v1234
      %v1239 = vand.u32 2147483647, %v1229
      %vm1240 = vcmp.eq.f32.partialorder %v1239, 8.507059e+37
      %v1241 = vand.u32 %v1229, 2147483648
      %v1242 = vor.u32 1.1754944e-38, %v1241
      %v1243 = vsel %vm1240, %v1242, %v1238
      %v1244 = vmul.f32 1.0, %v1243
      %v1245 = vadd.f32 %v1202, %v119
      %v1246 = vmul.f32 %v1224, %v1245
      %v1247 = vadd.f32 %v1069, %v1246
      %v1248 = vtanh.pop %v1247
      %v1249 = vsub.f32 1.0, %v1244
      %v1250 = vmul.f32 %v1249, %v1248
      %v1251 = vmul.f32 %v1244, %v1058
      %v1252 = vadd.f32 %v1250, %v1251
      %vm1253 = vcmp.gt.s32.totalorder %v125, 4
      %v1254 = vsel %vm1253, 1, 0
      %1255 = vset.pattern.permute.xlu0 0
      %1256 = vperm.xlu0 %1255, %v1254
      %v1257 = vpop.permute.xlu0 %1256
      %vm1258 = vcmp.eq.s32.totalorder %v1257, 1
      %v1259 = vsel %vm1258, %v1252, %v1058
      %s1260 = scalar_lea.vmem [#allocation5], 120
      %v1261 = vld [vmem:[%s1260] sm:$0xff]
      %v1262 = vld [vmem:[%s1260 + $0x8] sm:$0xf]
      %v1263 = vld [vmem:[%s1260 + $0xc] sm:$0xff]
      %v1264 = vld [vmem:[%s1260 + $0x14] sm:$0xf]
      %v1265 = vunpack.c.l.bf16 %v1261
      %v1266 = vunpack.c.h.bf16 %v1261
      %v1267 = vunpack.c.l.bf16 %v1262
      %v1268 = vunpack.c.l.bf16 %v1263
      %v1269 = vunpack.c.h.bf16 %v1263
      %v1270 = vunpack.c.l.bf16 %v1264
      %v1271 = vpack.c.bf16 %v1164, %v1164
      %1272 = vmatpush.bf16.msra.mxu0 %v240
      %1273 = vmatpush.bf16.msra.mxu0 %v237
      %1274 = vmatpush.bf16.msra.mxu0 %v234
      %1275 = vmatpush.bf16.msra.mxu0 %v231
      %1276 = vmatpush.bf16.msra.mxu0 %v228
      %1277 = vmatpush.bf16.msra.mxu0 %v225
      %1278 = vmatpush.bf16.msra.mxu0 %v222
      %1279 = vmatpush.bf16.msra.mxu0 %v219
      %1280 = vmatmul.bf16.gmra.mxu0 %v1271
      %v1281 = vpop.f32.mrf.mxu0
      %v1282 = vadd.f32 0.0, %v1281
      %v1283 = vpop.f32.mrf.mxu0
      %1284 = vdwg.mxu0
      %1285 = vmatpush.bf16.msra.mxu0 %v241
      %1286 = vmatpush.bf16.msra.mxu0 %v238
      %1287 = vmatpush.bf16.msra.mxu0 %v235
      %1288 = vmatpush.bf16.msra.mxu0 %v232
      %1289 = vmatpush.bf16.msra.mxu0 %v229
      %1290 = vmatpush.bf16.msra.mxu0 %v226
      %1291 = vmatpush.bf16.msra.mxu0 %v223
      %1292 = vmatpush.bf16.msra.mxu0 %v220
      %1293 = vmatmul.bf16.gmra.mxu0 %v1271
      %v1294 = vpop.f32.mrf.mxu0
      %v1295 = vadd.f32 0.0, %v1294
      %v1296 = vpop.f32.mrf.mxu0
      %1297 = vdwg.mxu0
      %1298 = vmatpush.bf16.msra.mxu0 %v242
      %1299 = vmatpush.bf16.msra.mxu0 %v239
      %1300 = vmatpush.bf16.msra.mxu0 %v236
      %1301 = vmatpush.bf16.msra.mxu0 %v233
      %1302 = vmatpush.bf16.msra.mxu0 %v230
      %1303 = vmatpush.bf16.msra.mxu0 %v227
      %1304 = vmatpush.bf16.msra.mxu0 %v224
      %1305 = vmatpush.bf16.msra.mxu0 %v221
      %1306 = vmatmul.bf16.gmra.mxu0 %v1271
      %v1307 = vpop.f32.mrf.mxu0
      %v1308 = vadd.f32 0.0, %v1307
      %v1309 = vpop.f32.mrf.mxu0
      %1310 = vdwg.mxu0
      %v1311 = vadd.f32 %v1265, %v1282
      %v1312 = vxor.u32 %v1311, 2147483648
      %v1313 = vmul.f32 %v1312, 1.442695
      %v1314 = vpow.pop %v1313
      %v1315 = vadd.f32 %v1314, 1.0
      %v1316 = vrcp.pop %v1315
      %v1317 = vmul.f32 %v1315, %v1316
      %v1318 = vsub.f32 1.0, %v1317
      %v1319 = vmul.f32 %v1316, %v1318
      %v1320 = vadd.f32 %v1316, %v1319
      %vm1321 = vweird.f32 %v1315
      %vm1322 = vweird.f32 %v1316
      %vm1323 = vmor %vm1321, %vm1322
      %v1324 = vsel %vm1323, %v1316, %v1320
      %v1325 = vand.u32 2147483647, %v1315
      %vm1326 = vcmp.eq.f32.partialorder %v1325, 8.507059e+37
      %v1327 = vand.u32 %v1315, 2147483648
      %v1328 = vor.u32 1.1754944e-38, %v1327
      %v1329 = vsel %vm1326, %v1328, %v1324
      %v1330 = vmul.f32 1.0, %v1329
      %v1331 = vadd.f32 %v1266, %v1295
      %v1332 = vxor.u32 %v1331, 2147483648
      %v1333 = vmul.f32 %v1332, 1.442695
      %v1334 = vpow.pop %v1333
      %v1335 = vadd.f32 %v1334, 1.0
      %v1336 = vrcp.pop %v1335
      %v1337 = vmul.f32 %v1335, %v1336
      %v1338 = vsub.f32 1.0, %v1337
      %v1339 = vmul.f32 %v1336, %v1338
      %v1340 = vadd.f32 %v1336, %v1339
      %vm1341 = vweird.f32 %v1335
      %vm1342 = vweird.f32 %v1336
      %vm1343 = vmor %vm1341, %vm1342
      %v1344 = vsel %vm1343, %v1336, %v1340
      %v1345 = vand.u32 2147483647, %v1335
      %vm1346 = vcmp.eq.f32.partialorder %v1345, 8.507059e+37
      %v1347 = vand.u32 %v1335, 2147483648
      %v1348 = vor.u32 1.1754944e-38, %v1347
      %v1349 = vsel %vm1346, %v1348, %v1344
      %v1350 = vmul.f32 1.0, %v1349
      %v1351 = vadd.f32 %v1308, %v119
      %v1352 = vmul.f32 %v1330, %v1351
      %v1353 = vadd.f32 %v1267, %v1352
      %v1354 = vtanh.pop %v1353
      %v1355 = vsub.f32 1.0, %v1350
      %v1356 = vmul.f32 %v1355, %v1354
      %v1357 = vmul.f32 %v1350, %v1164
      %v1358 = vadd.f32 %v1356, %v1357
      %vm1359 = vcmp.gt.s32.totalorder %v124, 5
      %v1360 = vsel %vm1359, 1, 0
      %1361 = vset.pattern.permute.xlu0 0
      %1362 = vperm.xlu0 %1361, %v1360
      %v1363 = vpop.permute.xlu0 %1362
      %vm1364 = vcmp.eq.s32.totalorder %v1363, 1
      %v1365 = vsel %vm1364, %v1358, %v1164
      %v1366 = vpack.c.bf16 %v1259, %v1259
      %1367 = vmatpush.bf16.msra.mxu0 %v240
      %1368 = vmatpush.bf16.msra.mxu0 %v237
      %1369 = vmatpush.bf16.msra.mxu0 %v234
      %1370 = vmatpush.bf16.msra.mxu0 %v231
      %1371 = vmatpush.bf16.msra.mxu0 %v228
      %1372 = vmatpush.bf16.msra.mxu0 %v225
      %1373 = vmatpush.bf16.msra.mxu0 %v222
      %1374 = vmatpush.bf16.msra.mxu0 %v219
      %1375 = vmatmul.bf16.gmra.mxu0 %v1366
      %v1376 = vpop.f32.mrf.mxu0
      %v1377 = vadd.f32 0.0, %v1376
      %v1378 = vpop.f32.mrf.mxu0
      %1379 = vdwg.mxu0
      %1380 = vmatpush.bf16.msra.mxu0 %v241
      %1381 = vmatpush.bf16.msra.mxu0 %v238
      %1382 = vmatpush.bf16.msra.mxu0 %v235
      %1383 = vmatpush.bf16.msra.mxu0 %v232
      %1384 = vmatpush.bf16.msra.mxu0 %v229
      %1385 = vmatpush.bf16.msra.mxu0 %v226
      %1386 = vmatpush.bf16.msra.mxu0 %v223
      %1387 = vmatpush.bf16.msra.mxu0 %v220
      %1388 = vmatmul.bf16.gmra.mxu0 %v1366
      %v1389 = vpop.f32.mrf.mxu0
      %v1390 = vadd.f32 0.0, %v1389
      %v1391 = vpop.f32.mrf.mxu0
      %1392 = vdwg.mxu0
      %1393 = vmatpush.bf16.msra.mxu0 %v242
      %1394 = vmatpush.bf16.msra.mxu0 %v239
      %1395 = vmatpush.bf16.msra.mxu0 %v236
      %1396 = vmatpush.bf16.msra.mxu0 %v233
      %1397 = vmatpush.bf16.msra.mxu0 %v230
      %1398 = vmatpush.bf16.msra.mxu0 %v227
      %1399 = vmatpush.bf16.msra.mxu0 %v224
      %1400 = vmatpush.bf16.msra.mxu0 %v221
      %1401 = vmatmul.bf16.gmra.mxu0 %v1366
      %v1402 = vpop.f32.mrf.mxu0
      %v1403 = vadd.f32 0.0, %v1402
      %v1404 = vpop.f32.mrf.mxu0
      %1405 = vdwg.mxu0
      %v1406 = vadd.f32 %v1268, %v1377
      %v1407 = vxor.u32 %v1406, 2147483648
      %v1408 = vmul.f32 %v1407, 1.442695
      %v1409 = vpow.pop %v1408
      %v1410 = vadd.f32 %v1409, 1.0
      %v1411 = vrcp.pop %v1410
      %v1412 = vmul.f32 %v1410, %v1411
      %v1413 = vsub.f32 1.0, %v1412
      %v1414 = vmul.f32 %v1411, %v1413
      %v1415 = vadd.f32 %v1411, %v1414
      %vm1416 = vweird.f32 %v1410
      %vm1417 = vweird.f32 %v1411
      %vm1418 = vmor %vm1416, %vm1417
      %v1419 = vsel %vm1418, %v1411, %v1415
      %v1420 = vand.u32 2147483647, %v1410
      %vm1421 = vcmp.eq.f32.partialorder %v1420, 8.507059e+37
      %v1422 = vand.u32 %v1410, 2147483648
      %v1423 = vor.u32 1.1754944e-38, %v1422
      %v1424 = vsel %vm1421, %v1423, %v1419
      %v1425 = vmul.f32 1.0, %v1424
      %v1426 = vadd.f32 %v1269, %v1390
      %v1427 = vxor.u32 %v1426, 2147483648
      %v1428 = vmul.f32 %v1427, 1.442695
      %v1429 = vpow.pop %v1428
      %v1430 = vadd.f32 %v1429, 1.0
      %v1431 = vrcp.pop %v1430
      %v1432 = vmul.f32 %v1430, %v1431
      %v1433 = vsub.f32 1.0, %v1432
      %v1434 = vmul.f32 %v1431, %v1433
      %v1435 = vadd.f32 %v1431, %v1434
      %vm1436 = vweird.f32 %v1430
      %vm1437 = vweird.f32 %v1431
      %vm1438 = vmor %vm1436, %vm1437
      %v1439 = vsel %vm1438, %v1431, %v1435
      %v1440 = vand.u32 2147483647, %v1430
      %vm1441 = vcmp.eq.f32.partialorder %v1440, 8.507059e+37
      %v1442 = vand.u32 %v1430, 2147483648
      %v1443 = vor.u32 1.1754944e-38, %v1442
      %v1444 = vsel %vm1441, %v1443, %v1439
      %v1445 = vmul.f32 1.0, %v1444
      %v1446 = vadd.f32 %v1403, %v119
      %v1447 = vmul.f32 %v1425, %v1446
      %v1448 = vadd.f32 %v1270, %v1447
      %v1449 = vtanh.pop %v1448
      %v1450 = vsub.f32 1.0, %v1445
      %v1451 = vmul.f32 %v1450, %v1449
      %v1452 = vmul.f32 %v1445, %v1259
      %v1453 = vadd.f32 %v1451, %v1452
      %vm1454 = vcmp.gt.s32.totalorder %v125, 5
      %v1455 = vsel %vm1454, 1, 0
      %1456 = vset.pattern.permute.xlu0 0
      %1457 = vperm.xlu0 %1456, %v1455
      %v1458 = vpop.permute.xlu0 %1457
      %vm1459 = vcmp.eq.s32.totalorder %v1458, 1
      %v1460 = vsel %vm1459, %v1453, %v1259
      %s1461 = scalar_lea.vmem [#allocation5], 144
      %v1462 = vld [vmem:[%s1461] sm:$0xff]
      %v1463 = vld [vmem:[%s1461 + $0x8] sm:$0xf]
      %v1464 = vld [vmem:[%s1461 + $0xc] sm:$0xff]
      %v1465 = vld [vmem:[%s1461 + $0x14] sm:$0xf]
      %v1466 = vunpack.c.l.bf16 %v1462
      %v1467 = vunpack.c.h.bf16 %v1462
      %v1468 = vunpack.c.l.bf16 %v1463
      %v1469 = vunpack.c.l.bf16 %v1464
      %v1470 = vunpack.c.h.bf16 %v1464
      %v1471 = vunpack.c.l.bf16 %v1465
      %v1472 = vpack.c.bf16 %v1365, %v1365
      %1473 = vmatpush.bf16.msra.mxu0 %v240
      %1474 = vmatpush.bf16.msra.mxu0 %v237
      %1475 = vmatpush.bf16.msra.mxu0 %v234
      %1476 = vmatpush.bf16.msra.mxu0 %v231
      %1477 = vmatpush.bf16.msra.mxu0 %v228
      %1478 = vmatpush.bf16.msra.mxu0 %v225
      %1479 = vmatpush.bf16.msra.mxu0 %v222
      %1480 = vmatpush.bf16.msra.mxu0 %v219
      %1481 = vmatmul.bf16.gmra.mxu0 %v1472
      %v1482 = vpop.f32.mrf.mxu0
      %v1483 = vadd.f32 0.0, %v1482
      %v1484 = vpop.f32.mrf.mxu0
      %1485 = vdwg.mxu0
      %1486 = vmatpush.bf16.msra.mxu0 %v241
      %1487 = vmatpush.bf16.msra.mxu0 %v238
      %1488 = vmatpush.bf16.msra.mxu0 %v235
      %1489 = vmatpush.bf16.msra.mxu0 %v232
      %1490 = vmatpush.bf16.msra.mxu0 %v229
      %1491 = vmatpush.bf16.msra.mxu0 %v226
      %1492 = vmatpush.bf16.msra.mxu0 %v223
      %1493 = vmatpush.bf16.msra.mxu0 %v220
      %1494 = vmatmul.bf16.gmra.mxu0 %v1472
      %v1495 = vpop.f32.mrf.mxu0
      %v1496 = vadd.f32 0.0, %v1495
      %v1497 = vpop.f32.mrf.mxu0
      %1498 = vdwg.mxu0
      %1499 = vmatpush.bf16.msra.mxu0 %v242
      %1500 = vmatpush.bf16.msra.mxu0 %v239
      %1501 = vmatpush.bf16.msra.mxu0 %v236
      %1502 = vmatpush.bf16.msra.mxu0 %v233
      %1503 = vmatpush.bf16.msra.mxu0 %v230
      %1504 = vmatpush.bf16.msra.mxu0 %v227
      %1505 = vmatpush.bf16.msra.mxu0 %v224
      %1506 = vmatpush.bf16.msra.mxu0 %v221
      %1507 = vmatmul.bf16.gmra.mxu0 %v1472
      %v1508 = vpop.f32.mrf.mxu0
      %v1509 = vadd.f32 0.0, %v1508
      %v1510 = vpop.f32.mrf.mxu0
      %1511 = vdwg.mxu0
      %v1512 = vadd.f32 %v1466, %v1483
      %v1513 = vxor.u32 %v1512, 2147483648
      %v1514 = vmul.f32 %v1513, 1.442695
      %v1515 = vpow.pop %v1514
      %v1516 = vadd.f32 %v1515, 1.0
      %v1517 = vrcp.pop %v1516
      %v1518 = vmul.f32 %v1516, %v1517
      %v1519 = vsub.f32 1.0, %v1518
      %v1520 = vmul.f32 %v1517, %v1519
      %v1521 = vadd.f32 %v1517, %v1520
      %vm1522 = vweird.f32 %v1516
      %vm1523 = vweird.f32 %v1517
      %vm1524 = vmor %vm1522, %vm1523
      %v1525 = vsel %vm1524, %v1517, %v1521
      %v1526 = vand.u32 2147483647, %v1516
      %vm1527 = vcmp.eq.f32.partialorder %v1526, 8.507059e+37
      %v1528 = vand.u32 %v1516, 2147483648
      %v1529 = vor.u32 1.1754944e-38, %v1528
      %v1530 = vsel %vm1527, %v1529, %v1525
      %v1531 = vmul.f32 1.0, %v1530
      %v1532 = vadd.f32 %v1467, %v1496
      %v1533 = vxor.u32 %v1532, 2147483648
      %v1534 = vmul.f32 %v1533, 1.442695
      %v1535 = vpow.pop %v1534
      %v1536 = vadd.f32 %v1535, 1.0
      %v1537 = vrcp.pop %v1536
      %v1538 = vmul.f32 %v1536, %v1537
      %v1539 = vsub.f32 1.0, %v1538
      %v1540 = vmul.f32 %v1537, %v1539
      %v1541 = vadd.f32 %v1537, %v1540
      %vm1542 = vweird.f32 %v1536
      %vm1543 = vweird.f32 %v1537
      %vm1544 = vmor %vm1542, %vm1543
      %v1545 = vsel %vm1544, %v1537, %v1541
      %v1546 = vand.u32 2147483647, %v1536
      %vm1547 = vcmp.eq.f32.partialorder %v1546, 8.507059e+37
      %v1548 = vand.u32 %v1536, 2147483648
      %v1549 = vor.u32 1.1754944e-38, %v1548
      %v1550 = vsel %vm1547, %v1549, %v1545
      %v1551 = vmul.f32 1.0, %v1550
      %v1552 = vadd.f32 %v1509, %v119
      %v1553 = vmul.f32 %v1531, %v1552
      %v1554 = vadd.f32 %v1468, %v1553
      %v1555 = vtanh.pop %v1554
      %v1556 = vsub.f32 1.0, %v1551
      %v1557 = vmul.f32 %v1556, %v1555
      %v1558 = vmul.f32 %v1551, %v1365
      %v1559 = vadd.f32 %v1557, %v1558
      %vm1560 = vcmp.gt.s32.totalorder %v124, 6
      %v1561 = vsel %vm1560, 1, 0
      %1562 = vset.pattern.permute.xlu0 0
      %1563 = vperm.xlu0 %1562, %v1561
      %v1564 = vpop.permute.xlu0 %1563
      %vm1565 = vcmp.eq.s32.totalorder %v1564, 1
      %v1566 = vsel %vm1565, %v1559, %v1365
      %v1567 = vpack.c.bf16 %v1460, %v1460
      %1568 = vmatpush.bf16.msra.mxu0 %v240
      %1569 = vmatpush.bf16.msra.mxu0 %v237
      %1570 = vmatpush.bf16.msra.mxu0 %v234
      %1571 = vmatpush.bf16.msra.mxu0 %v231
      %1572 = vmatpush.bf16.msra.mxu0 %v228
      %1573 = vmatpush.bf16.msra.mxu0 %v225
      %1574 = vmatpush.bf16.msra.mxu0 %v222
      %1575 = vmatpush.bf16.msra.mxu0 %v219
      %1576 = vmatmul.bf16.gmra.mxu0 %v1567
      %v1577 = vpop.f32.mrf.mxu0
      %v1578 = vadd.f32 0.0, %v1577
      %v1579 = vpop.f32.mrf.mxu0
      %1580 = vdwg.mxu0
      %1581 = vmatpush.bf16.msra.mxu0 %v241
      %1582 = vmatpush.bf16.msra.mxu0 %v238
      %1583 = vmatpush.bf16.msra.mxu0 %v235
      %1584 = vmatpush.bf16.msra.mxu0 %v232
      %1585 = vmatpush.bf16.msra.mxu0 %v229
      %1586 = vmatpush.bf16.msra.mxu0 %v226
      %1587 = vmatpush.bf16.msra.mxu0 %v223
      %1588 = vmatpush.bf16.msra.mxu0 %v220
      %1589 = vmatmul.bf16.gmra.mxu0 %v1567
      %v1590 = vpop.f32.mrf.mxu0
      %v1591 = vadd.f32 0.0, %v1590
      %v1592 = vpop.f32.mrf.mxu0
      %1593 = vdwg.mxu0
      %1594 = vmatpush.bf16.msra.mxu0 %v242
      %1595 = vmatpush.bf16.msra.mxu0 %v239
      %1596 = vmatpush.bf16.msra.mxu0 %v236
      %1597 = vmatpush.bf16.msra.mxu0 %v233
      %1598 = vmatpush.bf16.msra.mxu0 %v230
      %1599 = vmatpush.bf16.msra.mxu0 %v227
      %1600 = vmatpush.bf16.msra.mxu0 %v224
      %1601 = vmatpush.bf16.msra.mxu0 %v221
      %1602 = vmatmul.bf16.gmra.mxu0 %v1567
      %v1603 = vpop.f32.mrf.mxu0
      %v1604 = vadd.f32 0.0, %v1603
      %v1605 = vpop.f32.mrf.mxu0
      %1606 = vdwg.mxu0
      %v1607 = vadd.f32 %v1469, %v1578
      %v1608 = vxor.u32 %v1607, 2147483648
      %v1609 = vmul.f32 %v1608, 1.442695
      %v1610 = vpow.pop %v1609
      %v1611 = vadd.f32 %v1610, 1.0
      %v1612 = vrcp.pop %v1611
      %v1613 = vmul.f32 %v1611, %v1612
      %v1614 = vsub.f32 1.0, %v1613
      %v1615 = vmul.f32 %v1612, %v1614
      %v1616 = vadd.f32 %v1612, %v1615
      %vm1617 = vweird.f32 %v1611
      %vm1618 = vweird.f32 %v1612
      %vm1619 = vmor %vm1617, %vm1618
      %v1620 = vsel %vm1619, %v1612, %v1616
      %v1621 = vand.u32 2147483647, %v1611
      %vm1622 = vcmp.eq.f32.partialorder %v1621, 8.507059e+37
      %v1623 = vand.u32 %v1611, 2147483648
      %v1624 = vor.u32 1.1754944e-38, %v1623
      %v1625 = vsel %vm1622, %v1624, %v1620
      %v1626 = vmul.f32 1.0, %v1625
      %v1627 = vadd.f32 %v1470, %v1591
      %v1628 = vxor.u32 %v1627, 2147483648
      %v1629 = vmul.f32 %v1628, 1.442695
      %v1630 = vpow.pop %v1629
      %v1631 = vadd.f32 %v1630, 1.0
      %v1632 = vrcp.pop %v1631
      %v1633 = vmul.f32 %v1631, %v1632
      %v1634 = vsub.f32 1.0, %v1633
      %v1635 = vmul.f32 %v1632, %v1634
      %v1636 = vadd.f32 %v1632, %v1635
      %vm1637 = vweird.f32 %v1631
      %vm1638 = vweird.f32 %v1632
      %vm1639 = vmor %vm1637, %vm1638
      %v1640 = vsel %vm1639, %v1632, %v1636
      %v1641 = vand.u32 2147483647, %v1631
      %vm1642 = vcmp.eq.f32.partialorder %v1641, 8.507059e+37
      %v1643 = vand.u32 %v1631, 2147483648
      %v1644 = vor.u32 1.1754944e-38, %v1643
      %v1645 = vsel %vm1642, %v1644, %v1640
      %v1646 = vmul.f32 1.0, %v1645
      %v1647 = vadd.f32 %v1604, %v119
      %v1648 = vmul.f32 %v1626, %v1647
      %v1649 = vadd.f32 %v1471, %v1648
      %v1650 = vtanh.pop %v1649
      %v1651 = vsub.f32 1.0, %v1646
      %v1652 = vmul.f32 %v1651, %v1650
      %v1653 = vmul.f32 %v1646, %v1460
      %v1654 = vadd.f32 %v1652, %v1653
      %vm1655 = vcmp.gt.s32.totalorder %v125, 6
      %v1656 = vsel %vm1655, 1, 0
      %1657 = vset.pattern.permute.xlu0 0
      %1658 = vperm.xlu0 %1657, %v1656
      %v1659 = vpop.permute.xlu0 %1658
      %vm1660 = vcmp.eq.s32.totalorder %v1659, 1
      %v1661 = vsel %vm1660, %v1654, %v1460
      %s1662 = scalar_lea.vmem [#allocation5], 168
      %v1663 = vld [vmem:[%s1662] sm:$0xff]
      %v1664 = vld [vmem:[%s1662 + $0x8] sm:$0xf]
      %v1665 = vld [vmem:[%s1662 + $0xc] sm:$0xff]
      %v1666 = vld [vmem:[%s1662 + $0x14] sm:$0xf]
      %v1667 = vunpack.c.l.bf16 %v1663
      %v1668 = vunpack.c.h.bf16 %v1663
      %v1669 = vunpack.c.l.bf16 %v1664
      %v1670 = vunpack.c.l.bf16 %v1665
      %v1671 = vunpack.c.h.bf16 %v1665
      %v1672 = vunpack.c.l.bf16 %v1666
      %v1673 = vpack.c.bf16 %v1566, %v1566
      %1674 = vmatpush.bf16.msra.mxu0 %v240
      %1675 = vmatpush.bf16.msra.mxu0 %v237
      %1676 = vmatpush.bf16.msra.mxu0 %v234
      %1677 = vmatpush.bf16.msra.mxu0 %v231
      %1678 = vmatpush.bf16.msra.mxu0 %v228
      %1679 = vmatpush.bf16.msra.mxu0 %v225
      %1680 = vmatpush.bf16.msra.mxu0 %v222
      %1681 = vmatpush.bf16.msra.mxu0 %v219
      %1682 = vmatmul.bf16.gmra.mxu0 %v1673
      %v1683 = vpop.f32.mrf.mxu0
      %v1684 = vadd.f32 0.0, %v1683
      %v1685 = vpop.f32.mrf.mxu0
      %1686 = vdwg.mxu0
      %1687 = vmatpush.bf16.msra.mxu0 %v241
      %1688 = vmatpush.bf16.msra.mxu0 %v238
      %1689 = vmatpush.bf16.msra.mxu0 %v235
      %1690 = vmatpush.bf16.msra.mxu0 %v232
      %1691 = vmatpush.bf16.msra.mxu0 %v229
      %1692 = vmatpush.bf16.msra.mxu0 %v226
      %1693 = vmatpush.bf16.msra.mxu0 %v223
      %1694 = vmatpush.bf16.msra.mxu0 %v220
      %1695 = vmatmul.bf16.gmra.mxu0 %v1673
      %v1696 = vpop.f32.mrf.mxu0
      %v1697 = vadd.f32 0.0, %v1696
      %v1698 = vpop.f32.mrf.mxu0
      %1699 = vdwg.mxu0
      %1700 = vmatpush.bf16.msra.mxu0 %v242
      %1701 = vmatpush.bf16.msra.mxu0 %v239
      %1702 = vmatpush.bf16.msra.mxu0 %v236
      %1703 = vmatpush.bf16.msra.mxu0 %v233
      %1704 = vmatpush.bf16.msra.mxu0 %v230
      %1705 = vmatpush.bf16.msra.mxu0 %v227
      %1706 = vmatpush.bf16.msra.mxu0 %v224
      %1707 = vmatpush.bf16.msra.mxu0 %v221
      %1708 = vmatmul.bf16.gmra.mxu0 %v1673
      %v1709 = vpop.f32.mrf.mxu0
      %v1710 = vadd.f32 0.0, %v1709
      %v1711 = vpop.f32.mrf.mxu0
      %1712 = vdwg.mxu0
      %v1713 = vadd.f32 %v1667, %v1684
      %v1714 = vxor.u32 %v1713, 2147483648
      %v1715 = vmul.f32 %v1714, 1.442695
      %v1716 = vpow.pop %v1715
      %v1717 = vadd.f32 %v1716, 1.0
      %v1718 = vrcp.pop %v1717
      %v1719 = vmul.f32 %v1717, %v1718
      %v1720 = vsub.f32 1.0, %v1719
      %v1721 = vmul.f32 %v1718, %v1720
      %v1722 = vadd.f32 %v1718, %v1721
      %vm1723 = vweird.f32 %v1717
      %vm1724 = vweird.f32 %v1718
      %vm1725 = vmor %vm1723, %vm1724
      %v1726 = vsel %vm1725, %v1718, %v1722
      %v1727 = vand.u32 2147483647, %v1717
      %vm1728 = vcmp.eq.f32.partialorder %v1727, 8.507059e+37
      %v1729 = vand.u32 %v1717, 2147483648
      %v1730 = vor.u32 1.1754944e-38, %v1729
      %v1731 = vsel %vm1728, %v1730, %v1726
      %v1732 = vmul.f32 1.0, %v1731
      %v1733 = vadd.f32 %v1668, %v1697
      %v1734 = vxor.u32 %v1733, 2147483648
      %v1735 = vmul.f32 %v1734, 1.442695
      %v1736 = vpow.pop %v1735
      %v1737 = vadd.f32 %v1736, 1.0
      %v1738 = vrcp.pop %v1737
      %v1739 = vmul.f32 %v1737, %v1738
      %v1740 = vsub.f32 1.0, %v1739
      %v1741 = vmul.f32 %v1738, %v1740
      %v1742 = vadd.f32 %v1738, %v1741
      %vm1743 = vweird.f32 %v1737
      %vm1744 = vweird.f32 %v1738
      %vm1745 = vmor %vm1743, %vm1744
      %v1746 = vsel %vm1745, %v1738, %v1742
      %v1747 = vand.u32 2147483647, %v1737
      %vm1748 = vcmp.eq.f32.partialorder %v1747, 8.507059e+37
      %v1749 = vand.u32 %v1737, 2147483648
      %v1750 = vor.u32 1.1754944e-38, %v1749
      %v1751 = vsel %vm1748, %v1750, %v1746
      %v1752 = vmul.f32 1.0, %v1751
      %v1753 = vadd.f32 %v1710, %v119
      %v1754 = vmul.f32 %v1732, %v1753
      %v1755 = vadd.f32 %v1669, %v1754
      %v1756 = vtanh.pop %v1755
      %v1757 = vsub.f32 1.0, %v1752
      %v1758 = vmul.f32 %v1757, %v1756
      %v1759 = vmul.f32 %v1752, %v1566
      %v1760 = vadd.f32 %v1758, %v1759
      %vm1761 = vcmp.gt.s32.totalorder %v124, 7
      %v1762 = vsel %vm1761, 1, 0
      %1763 = vset.pattern.permute.xlu0 0
      %1764 = vperm.xlu0 %1763, %v1762
      %v1765 = vpop.permute.xlu0 %1764
      %vm1766 = vcmp.eq.s32.totalorder %v1765, 1
      %v1767 = vsel %vm1766, %v1760, %v1566
      %v1768 = vpack.c.bf16 %v1661, %v1661
      %1769 = vmatpush.bf16.msra.mxu0 %v240
      %1770 = vmatpush.bf16.msra.mxu0 %v237
      %1771 = vmatpush.bf16.msra.mxu0 %v234
      %1772 = vmatpush.bf16.msra.mxu0 %v231
      %1773 = vmatpush.bf16.msra.mxu0 %v228
      %1774 = vmatpush.bf16.msra.mxu0 %v225
      %1775 = vmatpush.bf16.msra.mxu0 %v222
      %1776 = vmatpush.bf16.msra.mxu0 %v219
      %1777 = vmatmul.bf16.gmra.mxu0 %v1768
      %v1778 = vpop.f32.mrf.mxu0
      %v1779 = vadd.f32 0.0, %v1778
      %v1780 = vpop.f32.mrf.mxu0
      %1781 = vdwg.mxu0
      %1782 = vmatpush.bf16.msra.mxu0 %v241
      %1783 = vmatpush.bf16.msra.mxu0 %v238
      %1784 = vmatpush.bf16.msra.mxu0 %v235
      %1785 = vmatpush.bf16.msra.mxu0 %v232
      %1786 = vmatpush.bf16.msra.mxu0 %v229
      %1787 = vmatpush.bf16.msra.mxu0 %v226
      %1788 = vmatpush.bf16.msra.mxu0 %v223
      %1789 = vmatpush.bf16.msra.mxu0 %v220
      %1790 = vmatmul.bf16.gmra.mxu0 %v1768
      %v1791 = vpop.f32.mrf.mxu0
      %v1792 = vadd.f32 0.0, %v1791
      %v1793 = vpop.f32.mrf.mxu0
      %1794 = vdwg.mxu0
      %1795 = vmatpush.bf16.msra.mxu0 %v242
      %1796 = vmatpush.bf16.msra.mxu0 %v239
      %1797 = vmatpush.bf16.msra.mxu0 %v236
      %1798 = vmatpush.bf16.msra.mxu0 %v233
      %1799 = vmatpush.bf16.msra.mxu0 %v230
      %1800 = vmatpush.bf16.msra.mxu0 %v227
      %1801 = vmatpush.bf16.msra.mxu0 %v224
      %1802 = vmatpush.bf16.msra.mxu0 %v221
      %1803 = vmatmul.bf16.gmra.mxu0 %v1768
      %v1804 = vpop.f32.mrf.mxu0
      %v1805 = vadd.f32 0.0, %v1804
      %v1806 = vpop.f32.mrf.mxu0
      %1807 = vdwg.mxu0
      %v1808 = vadd.f32 %v1670, %v1779
      %v1809 = vxor.u32 %v1808, 2147483648
      %v1810 = vmul.f32 %v1809, 1.442695
      %v1811 = vpow.pop %v1810
      %v1812 = vadd.f32 %v1811, 1.0
      %v1813 = vrcp.pop %v1812
      %v1814 = vmul.f32 %v1812, %v1813
      %v1815 = vsub.f32 1.0, %v1814
      %v1816 = vmul.f32 %v1813, %v1815
      %v1817 = vadd.f32 %v1813, %v1816
      %vm1818 = vweird.f32 %v1812
      %vm1819 = vweird.f32 %v1813
      %vm1820 = vmor %vm1818, %vm1819
      %v1821 = vsel %vm1820, %v1813, %v1817
      %v1822 = vand.u32 2147483647, %v1812
      %vm1823 = vcmp.eq.f32.partialorder %v1822, 8.507059e+37
      %v1824 = vand.u32 %v1812, 2147483648
      %v1825 = vor.u32 1.1754944e-38, %v1824
      %v1826 = vsel %vm1823, %v1825, %v1821
      %v1827 = vmul.f32 1.0, %v1826
      %v1828 = vadd.f32 %v1671, %v1792
      %v1829 = vxor.u32 %v1828, 2147483648
      %v1830 = vmul.f32 %v1829, 1.442695
      %v1831 = vpow.pop %v1830
      %v1832 = vadd.f32 %v1831, 1.0
      %v1833 = vrcp.pop %v1832
      %v1834 = vmul.f32 %v1832, %v1833
      %v1835 = vsub.f32 1.0, %v1834
      %v1836 = vmul.f32 %v1833, %v1835
      %v1837 = vadd.f32 %v1833, %v1836
      %vm1838 = vweird.f32 %v1832
      %vm1839 = vweird.f32 %v1833
      %vm1840 = vmor %vm1838, %vm1839
      %v1841 = vsel %vm1840, %v1833, %v1837
      %v1842 = vand.u32 2147483647, %v1832
      %vm1843 = vcmp.eq.f32.partialorder %v1842, 8.507059e+37
      %v1844 = vand.u32 %v1832, 2147483648
      %v1845 = vor.u32 1.1754944e-38, %v1844
      %v1846 = vsel %vm1843, %v1845, %v1841
      %v1847 = vmul.f32 1.0, %v1846
      %v1848 = vadd.f32 %v1805, %v119
      %v1849 = vmul.f32 %v1827, %v1848
      %v1850 = vadd.f32 %v1672, %v1849
      %v1851 = vtanh.pop %v1850
      %v1852 = vsub.f32 1.0, %v1847
      %v1853 = vmul.f32 %v1852, %v1851
      %v1854 = vmul.f32 %v1847, %v1661
      %v1855 = vadd.f32 %v1853, %v1854
      %vm1856 = vcmp.gt.s32.totalorder %v125, 7
      %v1857 = vsel %vm1856, 1, 0
      %1858 = vset.pattern.permute.xlu0 0
      %1859 = vperm.xlu0 %1858, %v1857
      %v1860 = vpop.permute.xlu0 %1859
      %vm1861 = vcmp.eq.s32.totalorder %v1860, 1
      %v1862 = vsel %vm1861, %v1855, %v1661
      %1863 = vst [vmem:[#allocation2] sm:$0xff] %v1767
      %1864 = vst [vmem:[#allocation2 + $0x8] sm:$0xff] %v1862
    $region45: #{tpu_custom_call.1} parent=1 // pred_fallthru
      _
    // Predicated region
    $region46: #{tpu_custom_call.1} parent=1 // pred_check
      %p1865 = pneg %p73
    $region47: #{tpu_custom_call.1} parent=1 // pred_check_branch
      %1867 = sbr.rel (%p1865) target = $region49
    $region48: #{tpu_custom_call.1} parent=1 // pred_region
      %v1868 = vld [vmem:[#allocation2] sm:$0xff]
      %v1869 = vld [vmem:[#allocation2 + $0x8] sm:$0xff]
      %v1870 = vpack.c.bf16 %v1869, %v1868
      %v1871 = vld [vmem:[#allocation10] sm:$0xf]
      %v1872 = vld [vmem:[#allocation10 + $0x4] sm:$0xf]
      %v1873 = vld [vmem:[#allocation10 + $0x8] sm:$0xf]
      %v1874 = vld [vmem:[#allocation10 + $0xc] sm:$0xf]
      %v1875 = vld [vmem:[#allocation10 + $0x10] sm:$0xf]
      %v1876 = vld [vmem:[#allocation10 + $0x14] sm:$0xf]
      %v1877 = vld [vmem:[#allocation10 + $0x18] sm:$0xf]
      %v1878 = vld [vmem:[#allocation10 + $0x1c] sm:$0xf]
      %v1879 = vld [vmem:[#allocation10 + $0x20] sm:$0xf]
      %v1880 = vld [vmem:[#allocation10 + $0x24] sm:$0xf]
      %v1881 = vld [vmem:[#allocation10 + $0x28] sm:$0xf]
      %v1882 = vld [vmem:[#allocation10 + $0x2c] sm:$0xf]
      %v1883 = vld [vmem:[#allocation10 + $0x30] sm:$0xf]
      %v1884 = vld [vmem:[#allocation10 + $0x34] sm:$0xf]
      %v1885 = vld [vmem:[#allocation10 + $0x38] sm:$0xf]
      %v1886 = vld [vmem:[#allocation10 + $0x3c] sm:$0xf]
      %v1887 = vld [vmem:[%s6] sm:$0x1]
      %v1889 = vperm.slane %v1887, 0
      %v1907 = vunpack.c.l.b16 %v1871
      %v1908 = vunpack.c.l.b16 %v1872
      %v1909 = vunpack.c.l.b16 %v1873
      %v1910 = vunpack.c.l.b16 %v1874
      %v1911 = vunpack.c.l.b16 %v1875
      %v1912 = vunpack.c.l.b16 %v1876
      %v1913 = vunpack.c.l.b16 %v1877
      %v1914 = vunpack.c.l.b16 %v1878
      %v1915 = vunpack.c.l.b16 %v1879
      %v1916 = vunpack.c.l.b16 %v1880
      %v1917 = vunpack.c.l.b16 %v1881
      %v1918 = vunpack.c.l.b16 %v1882
      %v1919 = vunpack.c.l.b16 %v1883
      %v1920 = vunpack.c.l.b16 %v1884
      %v1921 = vunpack.c.l.b16 %v1885
      %v1922 = vunpack.c.l.b16 %v1886
      %v1923 = vpack.c.b16 %v1908, %v1907
      %v1924 = vpack.c.b16 %v1910, %v1909
      %v1925 = vpack.c.b16 %v1912, %v1911
      %v1926 = vpack.c.b16 %v1914, %v1913
      %v1927 = vpack.c.b16 %v1916, %v1915
      %v1928 = vpack.c.b16 %v1918, %v1917
      %v1929 = vpack.c.b16 %v1920, %v1919
      %v1930 = vpack.c.b16 %v1922, %v1921
      %1939 = vmatpush.bf16.msra.mxu0 %v1930
      %1940 = vmatpush.bf16.msra.mxu0 %v1929
      %1941 = vmatpush.bf16.msra.mxu0 %v1928
      %1942 = vmatpush.bf16.msra.mxu0 %v1927
      %1943 = vmatpush.bf16.msra.mxu0 %v1926
      %1944 = vmatpush.bf16.msra.mxu0 %v1925
      %1945 = vmatpush.bf16.msra.mxu0 %v1924
      %1946 = vmatpush.bf16.msra.mxu0 %v1923
      %1947 = vmatmul.bf16.gmra.mxu0 %v1870
      %v1948 = vpop.f32.mrf.mxu0
      %v1949 = vadd.f32 %v1889, %v1948
      %v1950 = vpop.f32.mrf.mxu0
      %v1951 = vadd.f32 %v1889, %v1950
      %1952 = vdwg.mxu0
      %v1953 = vlaneseq
      %v1954 = vand.u32 %v1953, 127
      %vm1955 = vcmp.lt.s32.totalorder %v1954, 8
      %v1956 = vsel %vm1955, %v1949, -1e+30
      %v1957 = vsel %vm1955, %v1951, -1e+30
      %1958 = vmax.xlane.f32.xlu0 %v1956
      %v1959 = vpop.xlane.xlu0 %1958
      %1960 = vmax.xlane.f32.xlu0 %v1957
      %v1961 = vpop.xlane.xlu0 %1960
      %v1962 = vsub.f32 %v1956, %v1959
      %v1963 = vsub.f32 %v1957, %v1961
      %v1964 = vmul.f32 %v1962, 1.442695
      %v1965 = vpow.pop %v1964
      %v1966 = vmul.f32 %v1963, 1.442695
      %v1967 = vpow.pop %v1966
      %1968 = vadd.xlane.f32.xlu0 %v1965
      %v1969 = vpop.xlane.xlu0 %1968
      %1970 = vadd.xlane.f32.xlu0 %v1967
      %v1971 = vpop.xlane.xlu0 %1970
      %v1972 = vlog2.pop %v1969
      %v1973 = vmul.f32 %v1972, 0.6931472
      %v1974 = vlog2.pop %v1971
      %v1975 = vmul.f32 %v1974, 0.6931472
      %v1976 = vsub.f32 %v1962, %v1973
      %v1977 = vsub.f32 %v1963, %v1975
      %1978 = vst [vmem:[#allocation11] sm:$0xff] %v1976
      %1979 = vst [vmem:[#allocation11 + $0x8] sm:$0xff] %v1977
    $region49: #{tpu_custom_call.1} parent=1 // pred_fallthru
      _
    // Predicated region
    $region50: #{tpu_custom_call.1} parent=1 // pred_check
      _
    $region51: #{tpu_custom_call.1} parent=1 // pred_check_branch
      %1981 = sbr.rel (0) target = $region53
    $region52: #{tpu_custom_call.1} parent=1 // pred_region
      %1983 = vsyncadd [#allocation7], 0
      %s1984 = sshll.u32 [#allocation11], 4
      %s1985 = int_to_ptr.vmem [resolvable:$true] %s1984
      %s1986 = sshll.u32 %s7, 4
      %s1987 = int_to_ptr.hbm [resolvable:$true] %s1986
      %1992 = dma.vmem_to_hbm [thread:$0]  %s1985, 256, %s1987, [#allocation7], 128, 128, 8
    $region53: #{tpu_custom_call.1} parent=1 // pred_fallthru
      _
    // Predicated region
    $region54: #{tpu_custom_call.1} parent=1 // pred_check
      _
    $region55: #{tpu_custom_call.1} parent=1 // pred_check_branch
      %1994 = sbr.rel (0) target = $region57
    $region56: #{tpu_custom_call.1} parent=1 // pred_region
      %1996 = dma.done [#allocation7], 256
    $region57: #{tpu_custom_call.1} parent=1 // pred_fallthru
      _
    %1997 = vsyncpa [#allocation6], 1
    %1998 = vsyncpa [#allocation9], 1
    %1999 = vsyncpa [#allocation7], 1

</llo_original>
